<compile_context>
chip_gen: v7x
topology: tpu7x:2x2x1
jax: 0.10.0
libtpu: 0.0.40
codegen_flags: <defaults>
</compile_context>

<pallas_src>
import functools
import math
import random

import jax
import jax.numpy as jnp
from jax.experimental import pallas as pl
from jax.experimental.pallas import tpu as pltpu

NUM_AUDIO_TOKENS = 1024
EOS = 1024

# NOTE: re-derive for big configs (<=64 MiB physical on v7x).  Demo buffers are tiny.
_VMEM_LIMIT = 32 * 1024 * 1024


# ---------------------------------------------------------------------------
# Pallas kernel 1: fused transformer encoder stack
#   grid = (B // Bb, num_layers); batch axis "parallel", layer axis "arbitrary".
#   The output block (same index across the layer axis) is the carried
#   activation: initialized from x at l==0, read+rewritten every layer.
# ---------------------------------------------------------------------------
def encoder_stack_kernel(x_ref, mask_ref,
                         wqkv_ref, bqkv_ref, wo_ref, bo_ref,
                         w1_ref, b1_ref, w2_ref, b2_ref,
                         g1_ref, be1_ref, aw1_ref, ab1_ref,
                         g2_ref, be2_ref, aw2_ref, ab2_ref,
                         out_ref, *, num_head):
    l = pl.program_id(1)

    @pl.when(l == 0)
    def _():
        out_ref[...] = x_ref[...]          # seed the carried activation

    x3 = out_ref[...]                      # (Bb, T, D) f32 carried activation
    Bb, T, D = x3.shape
    H = num_head
    Dh = D // H
    mask = mask_ref[...]                   # (Bb, 1, T) additive key bias (0 / -1e9)

    x2d = x3.reshape(Bb * T, D)
    xb = x2d.astype(jnp.bfloat16)

    # ----- self attention (torch nn.MultiheadAttention, batch_first=True) -----
    # bf16 operands into the MXU, f32 accumulation; slab QKV over all Bb items.
    qkv = jnp.dot(xb, wqkv_ref[0],
                  preferred_element_type=jnp.float32) + bqkv_ref[0]     # (Bb*T, 3D)
    wo = wo_ref[0]                          # (D, D) bf16
    scale = 1.0 / math.sqrt(Dh)

    # TODO(synk): for production T (~1000 frames) tile the attention over query
    # rows (flash-style online softmax) to avoid the (T,T) f32 scores spill,
    # especially under v7x's smaller VMEM.
    attn_rows = []
    for b_i in range(Bb):                   # static python loop, Bb is small
        q_b = qkv[b_i * T:(b_i + 1) * T, 0:D]
        k_b = qkv[b_i * T:(b_i + 1) * T, D:2 * D]
        v_b = qkv[b_i * T:(b_i + 1) * T, 2 * D:3 * D]
        mask_b = mask[b_i]                  # (1, T)
        attn_b = jnp.zeros((T, D), jnp.float32)
        for h in range(H):                  # static python loop, H is small
            sl = slice(h * Dh, (h + 1) * Dh)
            qh = q_b[:, sl].astype(jnp.bfloat16)
            kh = k_b[:, sl].astype(jnp.bfloat16)
            vh = v_b[:, sl].astype(jnp.bfloat16)
            scores = jax.lax.dot_general(qh, kh, (((1,), (1,)), ((), ())),
                                         preferred_element_type=jnp.float32) * scale
            scores = scores + mask_b        # broadcast over query rows
            smax = jnp.max(scores, axis=-1, keepdims=True)
            e = jnp.exp(scores - smax)
            p = e * pl.reciprocal(jnp.sum(e, axis=-1, keepdims=True), approx=True)
            ctx_h = jnp.dot(p.astype(jnp.bfloat16), vh,
                            preferred_element_type=jnp.float32)          # (T, Dh)
            # fold the output projection into a per-head accumulate:
            # attn_out = sum_h ctx_h @ Wo[h*Dh:(h+1)*Dh, :]
            attn_b = attn_b + jnp.dot(ctx_h.astype(jnp.bfloat16), wo[sl, :],
                                      preferred_element_type=jnp.float32)
        attn_rows.append(attn_b)
    attn2d = attn_rows[0] if Bb == 1 else jnp.concatenate(attn_rows, axis=0)
    attn2d = attn2d + bo_ref[0]             # (Bb*T, D)

    # Adaptive LayerNorm: the (1, 2D) stage projection is precomputed in the
    # wrapper (constant per forward) and passed in as aw/ab.
    def ada_ln(hid, g, be, aw, ab):
        mu = jnp.mean(hid, axis=-1, keepdims=True)
        var = jnp.mean(jnp.square(hid - mu), axis=-1, keepdims=True)
        hn = (hid - mu) * jax.lax.rsqrt(var + 1e-5)
        hn = hn * g + be
        return aw * hn + ab

    # post-norm (norm_first=False); dropout layers run in eval semantics (no-op)
    x1 = ada_ln(x2d + attn2d,
                g1_ref[0], be1_ref[0], aw1_ref[0], ab1_ref[0])
    hidden = jnp.maximum(
        jnp.dot(x1.astype(jnp.bfloat16), w1_ref[0],
                preferred_element_type=jnp.float32) + b1_ref[0], 0.0)
    ff = jnp.dot(hidden.astype(jnp.bfloat16), w2_ref[0],
                 preferred_element_type=jnp.float32) + b2_ref[0]
    x2 = ada_ln(x1 + ff,
                g2_ref[0], be2_ref[0], aw2_ref[0], ab2_ref[0])

    out_ref[...] = x2.reshape(Bb, T, D)     # carried to layer l+1; HBM writeback
                                            # only when the batch block changes


_LAYER_KEYS = ['wqkv', 'bqkv', 'wo', 'bo',
               'w1', 'b1', 'w2', 'b2',
               'g1', 'be1', 'aw1', 'ab1',
               'g2', 'be2', 'aw2', 'ab2']


def run_encoder_stack(x, mask_bias, stacked, num_head, num_layers):
    B, T, D = x.shape
    Bb = 2 if (B % 2 == 0) else 1           # >=2 items per step when possible
    mask3 = mask_bias.reshape(B, 1, T)

    def layer_spec(arr):
        blk = (1,) + arr.shape[1:]
        return pl.BlockSpec(blk, lambda b, l: (l, 0, 0))

    # NOTE: weights change every layer step, so default double-buffering is the
    # right call here (prefetch layer l+1's weights while layer l computes).
    args = [stacked[k] for k in _LAYER_KEYS]
    in_specs = ([pl.BlockSpec((Bb, T, D), lambda b, l: (b, 0, 0)),
                 pl.BlockSpec((Bb, 1, T), lambda b, l: (b, 0, 0))]
                + [layer_spec(a) for a in args])

    return pl.pallas_call(
        functools.partial(encoder_stack_kernel, num_head=num_head),
        out_shape=jax.ShapeDtypeStruct((B, T, D), jnp.float32),
        grid=(B // Bb, num_layers),
        in_specs=in_specs,
        out_specs=pl.BlockSpec((Bb, T, D), lambda b, l: (b, 0, 0)),
        compiler_params=pltpu.CompilerParams(
            dimension_semantics=("parallel", "arbitrary"),   # batch | layers
            vmem_limit_bytes=_VMEM_LIMIT),
    )(x, mask3, *args)


# ---------------------------------------------------------------------------
# Pallas kernel 2: prediction head + masked cross-entropy + top-10 accuracy
# Row-tiled grid (256-row, 16-aligned tiles) with SMEM scalar accumulators.
# ---------------------------------------------------------------------------
def predict_loss_kernel(h_ref, w_ref, t_ref, loss_ref, correct_ref, valid_ref):
    i = pl.program_id(0)

    @pl.when(i == 0)
    def _():
        loss_ref[0] = jnp.float32(0.0)
        correct_ref[0] = jnp.float32(0.0)
        valid_ref[0] = jnp.float32(0.0)

    h = h_ref[...]                                  # (rt, D)  bf16
    w = w_ref[...]                                  # (C, D)   bf16 (native layout)
    t = t_ref[...]                                  # (rt, 1)  int32 targets
    logits = jax.lax.dot_general(h, w, (((1,), (1,)), ((), ())),
                                 preferred_element_type=jnp.float32)    # (rt, C)
    rt, C = logits.shape

    # few passes over the logits tile: target logit, max, exp-sum, rank
    cls = jax.lax.broadcasted_iota(jnp.int32, (rt, C), 1)
    is_tgt = cls == t
    tgt_logit = jnp.sum(jnp.where(is_tgt, logits, 0.0), axis=-1, keepdims=True)
    m = jnp.max(logits, axis=-1, keepdims=True)
    sum_e = jnp.sum(jnp.exp(logits - m), axis=-1, keepdims=True)
    lse = m + jnp.log(sum_e)
    # top-10 membership via strict rank count (ties broken differently than
    # torch.topk only on exactly-equal float logits)
    rank = jnp.sum(jnp.where(logits > tgt_logit, 1.0, 0.0), axis=-1, keepdims=True)

    valid = t != NUM_AUDIO_TOKENS                   # ignore_index = 1024
    loss_per = jnp.where(valid, lse - tgt_logit, 0.0)
    correct = jnp.where(valid & (rank < 10.0), 1.0, 0.0)

    loss_ref[0] += jnp.sum(loss_per)
    correct_ref[0] += jnp.sum(correct)
    valid_ref[0] += jnp.sum(valid.astype(jnp.float32))


def run_predict_loss(h_flat, w, targets_flat, row_tile=256):
    N, D = h_flat.shape
    C = w.shape[0]

    def rup(a, m):
        return ((a + m - 1) // m) * m

    # 16-row aligned (bf16 sublane tile); capped at row_tile rows per step.
    rt = min(row_tile, rup(N, 16))
    n_pad = rup(N, rt)
    if n_pad != N:
        # padded rows carry ignore_index targets -> contribute nothing
        h_flat = jnp.pad(h_flat, ((0, n_pad - N), (0, 0)))
        targets_flat = jnp.pad(targets_flat, (0, n_pad - N),
                               constant_values=NUM_AUDIO_TOKENS)
    t2 = targets_flat.reshape(n_pad, 1).astype(jnp.int32)

    smem = pltpu.MemorySpace.SMEM
    return pl.pallas_call(
        predict_loss_kernel,
        out_shape=[jax.ShapeDtypeStruct((1,), jnp.float32)] * 3,
        grid=(n_pad // rt,),
        in_specs=[pl.BlockSpec((rt, D), lambda i: (i, 0)),
                  pl.BlockSpec((C, D), lambda i: (0, 0)),
                  pl.BlockSpec((rt, 1), lambda i: (i, 0))],
        out_specs=[pl.BlockSpec((1,), lambda i: (0,), memory_space=smem)] * 3,
        compiler_params=pltpu.CompilerParams(
            dimension_semantics=("arbitrary",),          # reduction axis
            vmem_limit_bytes=_VMEM_LIMIT),
    )(h_flat, w, t2)


# ---------------------------------------------------------------------------
# Parameter construction (deterministic, synthetic)
# ---------------------------------------------------------------------------
def make_params(key, config):
    D = config['hidden_dim']
    V = config['vocab_size']
    L = config['num_layers']
    n_stages = 8

    keys = iter(jax.random.split(key, 256))
    nk = lambda: next(keys)

    params = {}
    params['semantic_emb'] = jax.random.normal(nk(), (V, D), jnp.float32)
    params['audio_embs'] = [jax.random.normal(nk(), (V - 1, D), jnp.float32)
                            for _ in range(n_stages)]
    params['stage_embs'] = [jax.random.normal(nk(), (1, D), jnp.float32)
                            for _ in range(n_stages)]
    # predict layers: weight tying nar_predict_layers[j].weight = nar_audio_embeddings[j+1].weight
    params['predict_weights'] = [
        params['audio_embs'][j + 1] if j < 7
        else 0.02 * jax.random.normal(nk(), (NUM_AUDIO_TOKENS, D), jnp.float32)
        for j in range(n_stages)
    ]

    layers = []
    F = 4 * D
    bf16 = jnp.bfloat16
    for _ in range(L):
        p = dict(
            # MXU operands stored as bf16 (f32 accumulation inside the kernel)
            wqkv=(0.02 * jax.random.normal(nk(), (D, 3 * D), jnp.float32)).astype(bf16),
            bqkv=jnp.zeros((1, 3 * D), jnp.float32),
            wo=(0.02 * jax.random.normal(nk(), (D, D), jnp.float32)).astype(bf16),
            bo=jnp.zeros((1, D), jnp.float32),
            w1=(0.02 * jax.random.normal(nk(), (D, F), jnp.float32)).astype(bf16),
            b1=jnp.zeros((1, F), jnp.float32),
            w2=(0.02 * jax.random.normal(nk(), (F, D), jnp.float32)).astype(bf16),
            b2=jnp.zeros((1, D), jnp.float32),
            g1=jnp.ones((1, D), jnp.float32), be1=jnp.zeros((1, D), jnp.float32),
            p1w=0.02 * jax.random.normal(nk(), (D, 2 * D), jnp.float32),
            p1b=jnp.concatenate([jnp.ones((1, D)), jnp.zeros((1, D))], axis=1).astype(jnp.float32),
            g2=jnp.ones((1, D), jnp.float32), be2=jnp.zeros((1, D), jnp.float32),
            p2w=0.02 * jax.random.normal(nk(), (D, 2 * D), jnp.float32),
            p2b=jnp.concatenate([jnp.ones((1, D)), jnp.zeros((1, D))], axis=1).astype(jnp.float32),
        )
        layers.append(p)
    params['layers'] = layers
    return params


def sine_positional_embedding(T, D):
    pos = jnp.arange(T, dtype=jnp.float32)[:, None]
    div = jnp.exp(jnp.arange(0, D, 2, dtype=jnp.float32) * -(math.log(10000.0) / D))
    pe = jnp.zeros((T, D), jnp.float32)
    pe = pe.at[:, 0::2].set(jnp.sin(pos * div))
    pe = pe.at[:, 1::2].set(jnp.cos(pos * div))
    return pe


def stack_layer_params(params, stage_emb, D):
    """Stack per-layer weights on a leading layer axis; hoist the adaptive-LN
    stage projection (constant per forward) out of the kernel."""
    per_layer = []
    for p in params['layers']:
        proj1 = jnp.dot(stage_emb, p['p1w']) + p['p1b']              # (1, 2D)
        proj2 = jnp.dot(stage_emb, p['p2w']) + p['p2b']
        lp = dict(p)
        lp['aw1'], lp['ab1'] = proj1[:, :D], proj1[:, D:]
        lp['aw2'], lp['ab2'] = proj2[:, :D], proj2[:, D:]
        per_layer.append(lp)
    return {k: jnp.stack([lp[k] for lp in per_layer], axis=0) for k in _LAYER_KEYS}


# ---------------------------------------------------------------------------
# NARDecoder.forward
# ---------------------------------------------------------------------------
def nar_decoder_forward(params, config, x_tokens, x_lens, y_tokens, y_lens,
                        y_lens_min=None):
    D = config['hidden_dim']
    num_head = config['num_head']
    num_layers = config['num_layers']
    num_quantizers = 9

    B, S = x_tokens.shape
    T = y_tokens.shape[1]

    # semantic embedding (TokenEmbedding, dropout disabled -> eval semantics)
    x = jnp.take(params['semantic_emb'], x_tokens, axis=0)          # (B, S, D)

    # linear interpolation of semantic embeddings onto acoustic frame rate
    fetch_idx = jnp.arange(T, dtype=jnp.float32) * 2.0 / 3.0
    fetch_idx_int = jnp.clip(fetch_idx.astype(jnp.int32), 0, S - 1)
    fetch_idx_res = fetch_idx - fetch_idx_int.astype(jnp.float32)
    x_lo = jnp.take(x, fetch_idx_int, axis=1)
    x_hi = jnp.take(x, jnp.clip(fetch_idx_int + 1, 0, S - 1), axis=1)
    x = (x_lo * (1.0 - fetch_idx_res)[None, :, None]
         + x_hi * fetch_idx_res[None, :, None])                     # (B, T, D)

    # padding mask / codes
    y_mask = jnp.arange(T)[None, :] >= y_lens[:, None]              # (B, T) True = pad
    y_mask_int = y_mask.astype(jnp.int32)
    codes = y_tokens.astype(jnp.int32) * (1 - y_mask_int[..., None])

    # nar stage: same Python RNG sequence as the torch module (random.Random(0))
    rng = random.Random(0)
    nar_stage = rng.choices(list(range(1, num_quantizers)),
                            weights=[1.0 / (num_quantizers - 1)] * (num_quantizers - 1),
                            k=1)[0]

    # _prepare_prompts, prefix_mode == 1.  prefix_len must be a host int (it
    # shapes slices); take it from the host-side y_lens min to avoid a device sync.
    if y_lens_min is None:
        # TODO(synk): device->host sync; prefer passing y_lens_min from the data loader.
        y_lens_min = int(jax.device_get(jnp.min(y_lens)))
    int_low = int(0.25 * y_lens_min)
    # TODO(synk): torch.randint(int_low, int_low*2) uses torch's global RNG; pick a
    # deterministic value inside the valid range instead.
    prefix_len = min(min(int_low + 1, 2 * int_low - 1) if int_low > 0 else 0, 225)

    y_prompts = x[:, :prefix_len]
    y_emb = x[:, prefix_len:]
    for j in range(1, num_quantizers):
        tbl = params['audio_embs'][j - 1]
        y_prompts = y_prompts + jnp.take(tbl, codes[:, :prefix_len, j - 1], axis=0)
        if j < nar_stage:
            y_emb = y_emb + jnp.take(tbl, codes[:, prefix_len:, j - 1], axis=0)
    y_emb = jnp.concatenate([y_prompts, y_emb], axis=1)              # (B, T, D)

    targets = codes[..., nar_stage - 1] + EOS * y_mask_int
    targets = targets[:, prefix_len:]                                # (B, T - prefix_len)

    # sinusoidal positional embedding (scale=False, alpha=False, dropout eval)
    y_pos = y_emb + sine_positional_embedding(T, D)[None]

    # fused transformer encoder stack with adaptive layer norm (one Pallas kernel)
    mask_bias = jnp.where(y_mask, -1e9, 0.0).astype(jnp.float32)     # (B, T)
    stage_emb = params['stage_embs'][nar_stage - 1]                  # (1, D)
    stacked = stack_layer_params(params, stage_emb, D)
    h = run_encoder_stack(y_pos, mask_bias, stacked, num_head, num_layers)

    # prediction head + loss + top-10 accuracy (Pallas kernel)
    h_suffix = h[:, prefix_len:]                                     # (B, T', D)
    Tp = h_suffix.shape[1]
    h_flat = h_suffix.reshape(B * Tp, D).astype(jnp.bfloat16)
    w = params['predict_weights'][nar_stage - 1].astype(jnp.bfloat16)  # (1024, D), no transpose
    loss_sum, correct, valid_count = run_predict_loss(
        h_flat, w, targets.reshape(-1))

    total_length = jnp.sum(y_lens).astype(jnp.float32)
    loss = loss_sum[0] * (total_length / (total_length - prefix_len * B))
    acc = correct[0] / valid_count[0]      # == MulticlassAccuracy(top10,micro,ignore=1024)
    return loss, acc, nar_stage


# ---------------------------------------------------------------------------
if __name__ == "__main__":
    # hidden_dim = 128 keeps the model dim lane-dense (128 lanes) on TPU.
    config = dict(hidden_dim=128, embedding_dim=128, num_head=2, num_layers=2,
                  vocab_size=NUM_AUDIO_TOKENS + 1, p_dropout=0.0, EOS=EOS)

    key = jax.random.PRNGKey(0)
    k_params, k_x, k_y = jax.random.split(key, 3)

    params = make_params(k_params, config)

    B, S, T = 2, 12, 16
    y_lens_host = [16, 12]
    x_tokens = jax.random.randint(k_x, (B, S), 0, config['vocab_size'], dtype=jnp.int32)
    x_lens = jnp.array([S, S], dtype=jnp.int32)
    y_tokens = jax.random.randint(k_y, (B, T, 8), 0, NUM_AUDIO_TOKENS, dtype=jnp.int32)
    y_lens = jnp.array(y_lens_host, dtype=jnp.int32)

    loss, acc, nar_stage = nar_decoder_forward(params, config,
                                               x_tokens, x_lens, y_tokens, y_lens,
                                               y_lens_min=min(y_lens_host))
    jax.block_until_ready((loss, acc))
    print("KERNEL_OK")
</pallas_src>

<mosaic_0001>
module attributes {stable_mosaic.version = 11 : i64} {
  func.func @encoder_stack_kernel(%arg0: i32, %arg1: i32, %arg2: memref<2x16x128xf32, #tpu.memory_space<vmem>>, %arg3: memref<2x1x16xf32, #tpu.memory_space<vmem>>, %arg4: memref<1x128x384xbf16, #tpu.memory_space<vmem>>, %arg5: memref<1x1x384xf32, #tpu.memory_space<vmem>>, %arg6: memref<1x128x128xbf16, #tpu.memory_space<vmem>>, %arg7: memref<1x1x128xf32, #tpu.memory_space<vmem>>, %arg8: memref<1x128x512xbf16, #tpu.memory_space<vmem>>, %arg9: memref<1x1x512xf32, #tpu.memory_space<vmem>>, %arg10: memref<1x512x128xbf16, #tpu.memory_space<vmem>>, %arg11: memref<1x1x128xf32, #tpu.memory_space<vmem>>, %arg12: memref<1x1x128xf32, #tpu.memory_space<vmem>>, %arg13: memref<1x1x128xf32, #tpu.memory_space<vmem>>, %arg14: memref<1x1x128xf32, #tpu.memory_space<vmem>>, %arg15: memref<1x1x128xf32, #tpu.memory_space<vmem>>, %arg16: memref<1x1x128xf32, #tpu.memory_space<vmem>>, %arg17: memref<1x1x128xf32, #tpu.memory_space<vmem>>, %arg18: memref<1x1x128xf32, #tpu.memory_space<vmem>>, %arg19: memref<1x1x128xf32, #tpu.memory_space<vmem>>, %arg20: memref<2x16x128xf32, #tpu.memory_space<vmem>>) attributes {dimension_semantics = [#tpu.dimension_semantics<parallel>, #tpu.dimension_semantics<arbitrary>], iteration_bounds = array<i64: 1, 2>, scalar_prefetch = 0 : i64, scratch_operands = 0 : i64, tpu.core_type = #tpu.core_type<tc>, window_params = [{transform_indices = @transform_0, window_bounds = array<i64: 2, 16, 128>}, {transform_indices = @transform_1, window_bounds = array<i64: 2, 1, 16>}, {transform_indices = @transform_2, window_bounds = array<i64: 1, 128, 384>}, {transform_indices = @transform_3, window_bounds = array<i64: 1, 1, 384>}, {transform_indices = @transform_4, window_bounds = array<i64: 1, 128, 128>}, {transform_indices = @transform_5, window_bounds = array<i64: 1, 1, 128>}, {transform_indices = @transform_6, window_bounds = array<i64: 1, 128, 512>}, {transform_indices = @transform_7, window_bounds = array<i64: 1, 1, 512>}, {transform_indices = @transform_8, window_bounds = array<i64: 1, 512, 128>}, {transform_indices = @transform_9, window_bounds = array<i64: 1, 1, 128>}, {transform_indices = @transform_10, window_bounds = array<i64: 1, 1, 128>}, {transform_indices = @transform_11, window_bounds = array<i64: 1, 1, 128>}, {transform_indices = @transform_12, window_bounds = array<i64: 1, 1, 128>}, {transform_indices = @transform_13, window_bounds = array<i64: 1, 1, 128>}, {transform_indices = @transform_14, window_bounds = array<i64: 1, 1, 128>}, {transform_indices = @transform_15, window_bounds = array<i64: 1, 1, 128>}, {transform_indices = @transform_16, window_bounds = array<i64: 1, 1, 128>}, {transform_indices = @transform_17, window_bounds = array<i64: 1, 1, 128>}, {transform_indices = @transform_18, window_bounds = array<i64: 2, 16, 128>}]} {
    %c0_i32 = arith.constant 0 : i32
    %0 = arith.cmpi eq, %arg1, %c0_i32 : i32
    %1 = arith.extui %0 : i1 to i32
    %c0_i32_0 = arith.constant 0 : i32
    %2 = arith.cmpi ne, %1, %c0_i32_0 : i32
    scf.if %2 {
      %c0_96 = arith.constant 0 : index
      %c0_97 = arith.constant 0 : index
      %c0_98 = arith.constant 0 : index
      %231 = vector.load %arg2[%c0_96, %c0_97, %c0_98] : memref<2x16x128xf32, #tpu.memory_space<vmem>>, vector<2x16x128xf32>
      %c0_99 = arith.constant 0 : index
      %c0_100 = arith.constant 0 : index
      %c0_101 = arith.constant 0 : index
      %232 = vector.load %arg20[%c0_99, %c0_100, %c0_101] : memref<2x16x128xf32, #tpu.memory_space<vmem>>, vector<2x16x128xf32>
      tpu.vector_store %arg20[%c0_99, %c0_100, %c0_101], %231 {strides = array<i32>} : memref<2x16x128xf32, #tpu.memory_space<vmem>>, vector<2x16x128xf32>,
    } else {
    }
    %c0 = arith.constant 0 : index
    %c0_1 = arith.constant 0 : index
    %c0_2 = arith.constant 0 : index
    %3 = vector.load %arg20[%c0, %c0_1, %c0_2] : memref<2x16x128xf32, #tpu.memory_space<vmem>>, vector<2x16x128xf32>
    %c0_3 = arith.constant 0 : index
    %c0_4 = arith.constant 0 : index
    %c0_5 = arith.constant 0 : index
    %4 = vector.load %arg3[%c0_3, %c0_4, %c0_5] : memref<2x1x16xf32, #tpu.memory_space<vmem>>, vector<2x1x16xf32>
    %5 = vector.shape_cast %3 : vector<2x16x128xf32> to vector<32x128xf32>
    %6 = arith.truncf %5 : vector<32x128xf32> to vector<32x128xbf16>
    %c0_6 = arith.constant 0 : index
    %c0_7 = arith.constant 0 : index
    %c0_8 = arith.constant 0 : index
    %7 = vector.load %arg4[%c0_6, %c0_7, %c0_8] : memref<1x128x384xbf16, #tpu.memory_space<vmem>>, vector<1x128x384xbf16>
    %8 = vector.shape_cast %7 : vector<1x128x384xbf16> to vector<128x384xbf16>
    %cst = arith.constant dense<0.000000e+00> : vector<32x384xf32>
    %9 = tpu.matmul %6, %8, %cst {dimension_numbers = #tpu.dot_dimension_numbers<[1], [0], [0], [1], [0, 0, 1, 1], [], []>} : vector<32x128xbf16>, vector<128x384xbf16>, vector<32x384xf32> -> vector<32x384xf32>
    %c0_9 = arith.constant 0 : index
    %c0_10 = arith.constant 0 : index
    %c0_11 = arith.constant 0 : index
    %10 = vector.load %arg5[%c0_9, %c0_10, %c0_11] : memref<1x1x384xf32, #tpu.memory_space<vmem>>, vector<1x1x384xf32>
    %11 = vector.shape_cast %10 : vector<1x1x384xf32> to vector<1x384xf32>
    %12 = vector.broadcast %11 : vector<1x384xf32> to vector<32x384xf32>
    %13 = arith.addf %9, %12 : vector<32x384xf32>
    %c0_12 = arith.constant 0 : index
    %c0_13 = arith.constant 0 : index
    %c0_14 = arith.constant 0 : index
    %14 = vector.load %arg6[%c0_12, %c0_13, %c0_14] : memref<1x128x128xbf16, #tpu.memory_space<vmem>>, vector<1x128x128xbf16>
    %15 = vector.shape_cast %14 : vector<1x128x128xbf16> to vector<128x128xbf16>
    %16 = vector.extract_strided_slice %13 {offsets = [0, 0], sizes = [16, 128], strides = [1, 1]} : vector<32x384xf32> to vector<16x128xf32>
    %17 = vector.extract_strided_slice %13 {offsets = [0, 128], sizes = [16, 128], strides = [1, 1]} : vector<32x384xf32> to vector<16x128xf32>
    %18 = vector.extract_strided_slice %13 {offsets = [0, 256], sizes = [16, 128], strides = [1, 1]} : vector<32x384xf32> to vector<16x128xf32>
    %19 = vector.extract_strided_slice %4 {offsets = [0, 0, 0], sizes = [1, 1, 16], strides = [1, 1, 1]} : vector<2x1x16xf32> to vector<1x1x16xf32>
    %20 = vector.shape_cast %19 : vector<1x1x16xf32> to vector<1x16xf32>
    %cst_15 = arith.constant 0.000000e+00 : f32
    %21 = vector.broadcast %cst_15 : f32 to vector<16x128xf32>
    %22 = vector.extract_strided_slice %16 {offsets = [0, 0], sizes = [16, 64], strides = [1, 1]} : vector<16x128xf32> to vector<16x64xf32>
    %23 = arith.truncf %22 : vector<16x64xf32> to vector<16x64xbf16>
    %24 = vector.extract_strided_slice %17 {offsets = [0, 0], sizes = [16, 64], strides = [1, 1]} : vector<16x128xf32> to vector<16x64xf32>
    %25 = arith.truncf %24 : vector<16x64xf32> to vector<16x64xbf16>
    %26 = vector.extract_strided_slice %18 {offsets = [0, 0], sizes = [16, 64], strides = [1, 1]} : vector<16x128xf32> to vector<16x64xf32>
    %27 = arith.truncf %26 : vector<16x64xf32> to vector<16x64xbf16>
    %cst_16 = arith.constant dense<0.000000e+00> : vector<16x16xf32>
    %28 = tpu.matmul %23, %25, %cst_16 {dimension_numbers = #tpu.dot_dimension_numbers<[1], [1], [0], [0], [0, 0, 1, 0], [], []>} : vector<16x64xbf16>, vector<16x64xbf16>, vector<16x16xf32> -> vector<16x16xf32>
    %cst_17 = arith.constant 1.250000e-01 : f32
    %29 = vector.broadcast %cst_17 : f32 to vector<16x16xf32>
    %30 = arith.mulf %28, %29 : vector<16x16xf32>
    %31 = vector.broadcast %20 : vector<1x16xf32> to vector<16x16xf32>
    %32 = arith.addf %30, %31 : vector<16x16xf32>
    %cst_18 = arith.constant dense<0xFF800000> : vector<16xf32>
    %33 = vector.multi_reduction <maximumf>, %32, %cst_18 [1] : vector<16x16xf32> to vector<16xf32>
    %34 = vector.shape_cast %33 : vector<16xf32> to vector<16x1xf32>
    %35 = vector.broadcast %34 : vector<16x1xf32> to vector<16x16xf32>
    %36 = arith.subf %32, %35 : vector<16x16xf32>
    %37 = math.exp %36 : vector<16x16xf32>
    %cst_19 = arith.constant dense<0.000000e+00> : vector<16xf32>
    %38 = vector.multi_reduction <add>, %37, %cst_19 [1] : vector<16x16xf32> to vector<16xf32>
    %39 = vector.shape_cast %38 : vector<16xf32> to vector<16x1xf32>
    %40 = tpu.reciprocal %39 {approx = true} : vector<16x1xf32> -> vector<16x1xf32>
    %41 = vector.broadcast %40 : vector<16x1xf32> to vector<16x16xf32>
    %42 = arith.mulf %37, %41 : vector<16x16xf32>
    %43 = arith.truncf %42 : vector<16x16xf32> to vector<16x16xbf16>
    %cst_20 = arith.constant dense<0.000000e+00> : vector<16x64xf32>
    %44 = tpu.matmul %43, %27, %cst_20 {dimension_numbers = #tpu.dot_dimension_numbers<[1], [0], [0], [1], [0, 0, 1, 1], [], []>} : vector<16x16xbf16>, vector<16x64xbf16>, vector<16x64xf32> -> vector<16x64xf32>
    %45 = arith.truncf %44 : vector<16x64xf32> to vector<16x64xbf16>
    %46 = vector.extract_strided_slice %15 {offsets = [0, 0], sizes = [64, 128], strides = [1, 1]} : vector<128x128xbf16> to vector<64x128xbf16>
    %cst_21 = arith.constant dense<0.000000e+00> : vector<16x128xf32>
    %47 = tpu.matmul %45, %46, %cst_21 {dimension_numbers = #tpu.dot_dimension_numbers<[1], [0], [0], [1], [0, 0, 1, 1], [], []>} : vector<16x64xbf16>, vector<64x128xbf16>, vector<16x128xf32> -> vector<16x128xf32>
    %48 = arith.addf %21, %47 : vector<16x128xf32>
    %49 = vector.extract_strided_slice %16 {offsets = [0, 64], sizes = [16, 64], strides = [1, 1]} : vector<16x128xf32> to vector<16x64xf32>
    %50 = arith.truncf %49 : vector<16x64xf32> to vector<16x64xbf16>
    %51 = vector.extract_strided_slice %17 {offsets = [0, 64], sizes = [16, 64], strides = [1, 1]} : vector<16x128xf32> to vector<16x64xf32>
    %52 = arith.truncf %51 : vector<16x64xf32> to vector<16x64xbf16>
    %53 = vector.extract_strided_slice %18 {offsets = [0, 64], sizes = [16, 64], strides = [1, 1]} : vector<16x128xf32> to vector<16x64xf32>
    %54 = arith.truncf %53 : vector<16x64xf32> to vector<16x64xbf16>
    %cst_22 = arith.constant dense<0.000000e+00> : vector<16x16xf32>
    %55 = tpu.matmul %50, %52, %cst_22 {dimension_numbers = #tpu.dot_dimension_numbers<[1], [1], [0], [0], [0, 0, 1, 0], [], []>} : vector<16x64xbf16>, vector<16x64xbf16>, vector<16x16xf32> -> vector<16x16xf32>
    %cst_23 = arith.constant 1.250000e-01 : f32
    %56 = vector.broadcast %cst_23 : f32 to vector<16x16xf32>
    %57 = arith.mulf %55, %56 : vector<16x16xf32>
    %58 = vector.broadcast %20 : vector<1x16xf32> to vector<16x16xf32>
    %59 = arith.addf %57, %58 : vector<16x16xf32>
    %cst_24 = arith.constant dense<0xFF800000> : vector<16xf32>
    %60 = vector.multi_reduction <maximumf>, %59, %cst_24 [1] : vector<16x16xf32> to vector<16xf32>
    %61 = vector.shape_cast %60 : vector<16xf32> to vector<16x1xf32>
    %62 = vector.broadcast %61 : vector<16x1xf32> to vector<16x16xf32>
    %63 = arith.subf %59, %62 : vector<16x16xf32>
    %64 = math.exp %63 : vector<16x16xf32>
    %cst_25 = arith.constant dense<0.000000e+00> : vector<16xf32>
    %65 = vector.multi_reduction <add>, %64, %cst_25 [1] : vector<16x16xf32> to vector<16xf32>
    %66 = vector.shape_cast %65 : vector<16xf32> to vector<16x1xf32>
    %67 = tpu.reciprocal %66 {approx = true} : vector<16x1xf32> -> vector<16x1xf32>
    %68 = vector.broadcast %67 : vector<16x1xf32> to vector<16x16xf32>
    %69 = arith.mulf %64, %68 : vector<16x16xf32>
    %70 = arith.truncf %69 : vector<16x16xf32> to vector<16x16xbf16>
    %cst_26 = arith.constant dense<0.000000e+00> : vector<16x64xf32>
    %71 = tpu.matmul %70, %54, %cst_26 {dimension_numbers = #tpu.dot_dimension_numbers<[1], [0], [0], [1], [0, 0, 1, 1], [], []>} : vector<16x16xbf16>, vector<16x64xbf16>, vector<16x64xf32> -> vector<16x64xf32>
    %72 = arith.truncf %71 : vector<16x64xf32> to vector<16x64xbf16>
    %73 = vector.extract_strided_slice %15 {offsets = [64, 0], sizes = [64, 128], strides = [1, 1]} : vector<128x128xbf16> to vector<64x128xbf16>
    %cst_27 = arith.constant dense<0.000000e+00> : vector<16x128xf32>
    %74 = tpu.matmul %72, %73, %cst_27 {dimension_numbers = #tpu.dot_dimension_numbers<[1], [0], [0], [1], [0, 0, 1, 1], [], []>} : vector<16x64xbf16>, vector<64x128xbf16>, vector<16x128xf32> -> vector<16x128xf32>
    %75 = arith.addf %48, %74 : vector<16x128xf32>
    %76 = vector.extract_strided_slice %13 {offsets = [16, 0], sizes = [16, 128], strides = [1, 1]} : vector<32x384xf32> to vector<16x128xf32>
    %77 = vector.extract_strided_slice %13 {offsets = [16, 128], sizes = [16, 128], strides = [1, 1]} : vector<32x384xf32> to vector<16x128xf32>
    %78 = vector.extract_strided_slice %13 {offsets = [16, 256], sizes = [16, 128], strides = [1, 1]} : vector<32x384xf32> to vector<16x128xf32>
    %79 = vector.extract_strided_slice %4 {offsets = [1, 0, 0], sizes = [1, 1, 16], strides = [1, 1, 1]} : vector<2x1x16xf32> to vector<1x1x16xf32>
    %80 = vector.shape_cast %79 : vector<1x1x16xf32> to vector<1x16xf32>
    %cst_28 = arith.constant 0.000000e+00 : f32
    %81 = vector.broadcast %cst_28 : f32 to vector<16x128xf32>
    %82 = vector.extract_strided_slice %76 {offsets = [0, 0], sizes = [16, 64], strides = [1, 1]} : vector<16x128xf32> to vector<16x64xf32>
    %83 = arith.truncf %82 : vector<16x64xf32> to vector<16x64xbf16>
    %84 = vector.extract_strided_slice %77 {offsets = [0, 0], sizes = [16, 64], strides = [1, 1]} : vector<16x128xf32> to vector<16x64xf32>
    %85 = arith.truncf %84 : vector<16x64xf32> to vector<16x64xbf16>
    %86 = vector.extract_strided_slice %78 {offsets = [0, 0], sizes = [16, 64], strides = [1, 1]} : vector<16x128xf32> to vector<16x64xf32>
    %87 = arith.truncf %86 : vector<16x64xf32> to vector<16x64xbf16>
    %cst_29 = arith.constant dense<0.000000e+00> : vector<16x16xf32>
    %88 = tpu.matmul %83, %85, %cst_29 {dimension_numbers = #tpu.dot_dimension_numbers<[1], [1], [0], [0], [0, 0, 1, 0], [], []>} : vector<16x64xbf16>, vector<16x64xbf16>, vector<16x16xf32> -> vector<16x16xf32>
    %cst_30 = arith.constant 1.250000e-01 : f32
    %89 = vector.broadcast %cst_30 : f32 to vector<16x16xf32>
    %90 = arith.mulf %88, %89 : vector<16x16xf32>
    %91 = vector.broadcast %80 : vector<1x16xf32> to vector<16x16xf32>
    %92 = arith.addf %90, %91 : vector<16x16xf32>
    %cst_31 = arith.constant dense<0xFF800000> : vector<16xf32>
    %93 = vector.multi_reduction <maximumf>, %92, %cst_31 [1] : vector<16x16xf32> to vector<16xf32>
    %94 = vector.shape_cast %93 : vector<16xf32> to vector<16x1xf32>
    %95 = vector.broadcast %94 : vector<16x1xf32> to vector<16x16xf32>
    %96 = arith.subf %92, %95 : vector<16x16xf32>
    %97 = math.exp %96 : vector<16x16xf32>
    %cst_32 = arith.constant dense<0.000000e+00> : vector<16xf32>
    %98 = vector.multi_reduction <add>, %97, %cst_32 [1] : vector<16x16xf32> to vector<16xf32>
    %99 = vector.shape_cast %98 : vector<16xf32> to vector<16x1xf32>
    %100 = tpu.reciprocal %99 {approx = true} : vector<16x1xf32> -> vector<16x1xf32>
    %101 = vector.broadcast %100 : vector<16x1xf32> to vector<16x16xf32>
    %102 = arith.mulf %97, %101 : vector<16x16xf32>
    %103 = arith.truncf %102 : vector<16x16xf32> to vector<16x16xbf16>
    %cst_33 = arith.constant dense<0.000000e+00> : vector<16x64xf32>
    %104 = tpu.matmul %103, %87, %cst_33 {dimension_numbers = #tpu.dot_dimension_numbers<[1], [0], [0], [1], [0, 0, 1, 1], [], []>} : vector<16x16xbf16>, vector<16x64xbf16>, vector<16x64xf32> -> vector<16x64xf32>
    %105 = arith.truncf %104 : vector<16x64xf32> to vector<16x64xbf16>
    %106 = vector.extract_strided_slice %15 {offsets = [0, 0], sizes = [64, 128], strides = [1, 1]} : vector<128x128xbf16> to vector<64x128xbf16>
    %cst_34 = arith.constant dense<0.000000e+00> : vector<16x128xf32>
    %107 = tpu.matmul %105, %106, %cst_34 {dimension_numbers = #tpu.dot_dimension_numbers<[1], [0], [0], [1], [0, 0, 1, 1], [], []>} : vector<16x64xbf16>, vector<64x128xbf16>, vector<16x128xf32> -> vector<16x128xf32>
    %108 = arith.addf %81, %107 : vector<16x128xf32>
    %109 = vector.extract_strided_slice %76 {offsets = [0, 64], sizes = [16, 64], strides = [1, 1]} : vector<16x128xf32> to vector<16x64xf32>
    %110 = arith.truncf %109 : vector<16x64xf32> to vector<16x64xbf16>
    %111 = vector.extract_strided_slice %77 {offsets = [0, 64], sizes = [16, 64], strides = [1, 1]} : vector<16x128xf32> to vector<16x64xf32>
    %112 = arith.truncf %111 : vector<16x64xf32> to vector<16x64xbf16>
    %113 = vector.extract_strided_slice %78 {offsets = [0, 64], sizes = [16, 64], strides = [1, 1]} : vector<16x128xf32> to vector<16x64xf32>
    %114 = arith.truncf %113 : vector<16x64xf32> to vector<16x64xbf16>
    %cst_35 = arith.constant dense<0.000000e+00> : vector<16x16xf32>
    %115 = tpu.matmul %110, %112, %cst_35 {dimension_numbers = #tpu.dot_dimension_numbers<[1], [1], [0], [0], [0, 0, 1, 0], [], []>} : vector<16x64xbf16>, vector<16x64xbf16>, vector<16x16xf32> -> vector<16x16xf32>
    %cst_36 = arith.constant 1.250000e-01 : f32
    %116 = vector.broadcast %cst_36 : f32 to vector<16x16xf32>
    %117 = arith.mulf %115, %116 : vector<16x16xf32>
    %118 = vector.broadcast %80 : vector<1x16xf32> to vector<16x16xf32>
    %119 = arith.addf %117, %118 : vector<16x16xf32>
    %cst_37 = arith.constant dense<0xFF800000> : vector<16xf32>
    %120 = vector.multi_reduction <maximumf>, %119, %cst_37 [1] : vector<16x16xf32> to vector<16xf32>
    %121 = vector.shape_cast %120 : vector<16xf32> to vector<16x1xf32>
    %122 = vector.broadcast %121 : vector<16x1xf32> to vector<16x16xf32>
    %123 = arith.subf %119, %122 : vector<16x16xf32>
    %124 = math.exp %123 : vector<16x16xf32>
    %cst_38 = arith.constant dense<0.000000e+00> : vector<16xf32>
    %125 = vector.multi_reduction <add>, %124, %cst_38 [1] : vector<16x16xf32> to vector<16xf32>
    %126 = vector.shape_cast %125 : vector<16xf32> to vector<16x1xf32>
    %127 = tpu.reciprocal %126 {approx = true} : vector<16x1xf32> -> vector<16x1xf32>
    %128 = vector.broadcast %127 : vector<16x1xf32> to vector<16x16xf32>
    %129 = arith.mulf %124, %128 : vector<16x16xf32>
    %130 = arith.truncf %129 : vector<16x16xf32> to vector<16x16xbf16>
    %cst_39 = arith.constant dense<0.000000e+00> : vector<16x64xf32>
    %131 = tpu.matmul %130, %114, %cst_39 {dimension_numbers = #tpu.dot_dimension_numbers<[1], [0], [0], [1], [0, 0, 1, 1], [], []>} : vector<16x16xbf16>, vector<16x64xbf16>, vector<16x64xf32> -> vector<16x64xf32>
    %132 = arith.truncf %131 : vector<16x64xf32> to vector<16x64xbf16>
    %133 = vector.extract_strided_slice %15 {offsets = [64, 0], sizes = [64, 128], strides = [1, 1]} : vector<128x128xbf16> to vector<64x128xbf16>
    %cst_40 = arith.constant dense<0.000000e+00> : vector<16x128xf32>
    %134 = tpu.matmul %132, %133, %cst_40 {dimension_numbers = #tpu.dot_dimension_numbers<[1], [0], [0], [1], [0, 0, 1, 1], [], []>} : vector<16x64xbf16>, vector<64x128xbf16>, vector<16x128xf32> -> vector<16x128xf32>
    %135 = arith.addf %108, %134 : vector<16x128xf32>
    %136 = tpu.concatenate %75, %135 in 0 : vector<16x128xf32>, vector<16x128xf32> -> vector<32x128xf32>
    %c0_41 = arith.constant 0 : index
    %c0_42 = arith.constant 0 : index
    %c0_43 = arith.constant 0 : index
    %137 = vector.load %arg7[%c0_41, %c0_42, %c0_43] : memref<1x1x128xf32, #tpu.memory_space<vmem>>, vector<1x1x128xf32>
    %138 = vector.shape_cast %137 : vector<1x1x128xf32> to vector<1x128xf32>
    %139 = vector.broadcast %138 : vector<1x128xf32> to vector<32x128xf32>
    %140 = arith.addf %136, %139 : vector<32x128xf32>
    %141 = arith.addf %5, %140 : vector<32x128xf32>
    %c0_44 = arith.constant 0 : index
    %c0_45 = arith.constant 0 : index
    %c0_46 = arith.constant 0 : index
    %142 = vector.load %arg12[%c0_44, %c0_45, %c0_46] : memref<1x1x128xf32, #tpu.memory_space<vmem>>, vector<1x1x128xf32>
    %143 = vector.shape_cast %142 : vector<1x1x128xf32> to vector<1x128xf32>
    %c0_47 = arith.constant 0 : index
    %c0_48 = arith.constant 0 : index
    %c0_49 = arith.constant 0 : index
    %144 = vector.load %arg13[%c0_47, %c0_48, %c0_49] : memref<1x1x128xf32, #tpu.memory_space<vmem>>, vector<1x1x128xf32>
    %145 = vector.shape_cast %144 : vector<1x1x128xf32> to vector<1x128xf32>
    %c0_50 = arith.constant 0 : index
    %c0_51 = arith.constant 0 : index
    %c0_52 = arith.constant 0 : index
    %146 = vector.load %arg14[%c0_50, %c0_51, %c0_52] : memref<1x1x128xf32, #tpu.memory_space<vmem>>, vector<1x1x128xf32>
    %147 = vector.shape_cast %146 : vector<1x1x128xf32> to vector<1x128xf32>
    %c0_53 = arith.constant 0 : index
    %c0_54 = arith.constant 0 : index
    %c0_55 = arith.constant 0 : index
    %148 = vector.load %arg15[%c0_53, %c0_54, %c0_55] : memref<1x1x128xf32, #tpu.memory_space<vmem>>, vector<1x1x128xf32>
    %149 = vector.shape_cast %148 : vector<1x1x128xf32> to vector<1x128xf32>
    %cst_56 = arith.constant dense<0.000000e+00> : vector<32xf32>
    %150 = vector.multi_reduction <add>, %141, %cst_56 [1] : vector<32x128xf32> to vector<32xf32>
    %151 = vector.shape_cast %150 : vector<32xf32> to vector<32x1xf32>
    %cst_57 = arith.constant 1.280000e+02 : f32
    %152 = vector.broadcast %cst_57 : f32 to vector<32x1xf32>
    %153 = arith.divf %151, %152 : vector<32x1xf32>
    %154 = vector.broadcast %153 : vector<32x1xf32> to vector<32x128xf32>
    %155 = arith.subf %141, %154 : vector<32x128xf32>
    %156 = arith.mulf %155, %155 : vector<32x128xf32>
    %cst_58 = arith.constant dense<0.000000e+00> : vector<32xf32>
    %157 = vector.multi_reduction <add>, %156, %cst_58 [1] : vector<32x128xf32> to vector<32xf32>
    %158 = vector.shape_cast %157 : vector<32xf32> to vector<32x1xf32>
    %cst_59 = arith.constant 1.280000e+02 : f32
    %159 = vector.broadcast %cst_59 : f32 to vector<32x1xf32>
    %160 = arith.divf %158, %159 : vector<32x1xf32>
    %161 = vector.broadcast %153 : vector<32x1xf32> to vector<32x128xf32>
    %162 = arith.subf %141, %161 : vector<32x128xf32>
    %cst_60 = arith.constant 9.99999974E-6 : f32
    %163 = vector.broadcast %cst_60 : f32 to vector<32x1xf32>
    %164 = arith.addf %160, %163 : vector<32x1xf32>
    %165 = math.rsqrt %164 : vector<32x1xf32>
    %166 = vector.broadcast %165 : vector<32x1xf32> to vector<32x128xf32>
    %167 = arith.mulf %162, %166 : vector<32x128xf32>
    %168 = vector.broadcast %143 : vector<1x128xf32> to vector<32x128xf32>
    %169 = arith.mulf %167, %168 : vector<32x128xf32>
    %170 = vector.broadcast %145 : vector<1x128xf32> to vector<32x128xf32>
    %171 = arith.addf %169, %170 : vector<32x128xf32>
    %172 = vector.broadcast %147 : vector<1x128xf32> to vector<32x128xf32>
    %173 = arith.mulf %172, %171 : vector<32x128xf32>
    %174 = vector.broadcast %149 : vector<1x128xf32> to vector<32x128xf32>
    %175 = arith.addf %173, %174 : vector<32x128xf32>
    %176 = arith.truncf %175 : vector<32x128xf32> to vector<32x128xbf16>
    %c0_61 = arith.constant 0 : index
    %c0_62 = arith.constant 0 : index
    %c0_63 = arith.constant 0 : index
    %177 = vector.load %arg8[%c0_61, %c0_62, %c0_63] : memref<1x128x512xbf16, #tpu.memory_space<vmem>>, vector<1x128x512xbf16>
    %178 = vector.shape_cast %177 : vector<1x128x512xbf16> to vector<128x512xbf16>
    %cst_64 = arith.constant dense<0.000000e+00> : vector<32x512xf32>
    %179 = tpu.matmul %176, %178, %cst_64 {dimension_numbers = #tpu.dot_dimension_numbers<[1], [0], [0], [1], [0, 0, 1, 1], [], []>} : vector<32x128xbf16>, vector<128x512xbf16>, vector<32x512xf32> -> vector<32x512xf32>
    %c0_65 = arith.constant 0 : index
    %c0_66 = arith.constant 0 : index
    %c0_67 = arith.constant 0 : index
    %180 = vector.load %arg9[%c0_65, %c0_66, %c0_67] : memref<1x1x512xf32, #tpu.memory_space<vmem>>, vector<1x1x512xf32>
    %181 = vector.shape_cast %180 : vector<1x1x512xf32> to vector<1x512xf32>
    %182 = vector.broadcast %181 : vector<1x512xf32> to vector<32x512xf32>
    %183 = arith.addf %179, %182 : vector<32x512xf32>
    %cst_68 = arith.constant 0.000000e+00 : f32
    %184 = vector.broadcast %cst_68 : f32 to vector<32x512xf32>
    %185 = arith.maximumf %183, %184 : vector<32x512xf32>
    %186 = arith.truncf %185 : vector<32x512xf32> to vector<32x512xbf16>
    %c0_69 = arith.constant 0 : index
    %c0_70 = arith.constant 0 : index
    %c0_71 = arith.constant 0 : index
    %187 = vector.load %arg10[%c0_69, %c0_70, %c0_71] : memref<1x512x128xbf16, #tpu.memory_space<vmem>>, vector<1x512x128xbf16>
    %188 = vector.shape_cast %187 : vector<1x512x128xbf16> to vector<512x128xbf16>
    %cst_72 = arith.constant dense<0.000000e+00> : vector<32x128xf32>
    %189 = tpu.matmul %186, %188, %cst_72 {dimension_numbers = #tpu.dot_dimension_numbers<[1], [0], [0], [1], [0, 0, 1, 1], [], []>} : vector<32x512xbf16>, vector<512x128xbf16>, vector<32x128xf32> -> vector<32x128xf32>
    %c0_73 = arith.constant 0 : index
    %c0_74 = arith.constant 0 : index
    %c0_75 = arith.constant 0 : index
    %190 = vector.load %arg11[%c0_73, %c0_74, %c0_75] : memref<1x1x128xf32, #tpu.memory_space<vmem>>, vector<1x1x128xf32>
    %191 = vector.shape_cast %190 : vector<1x1x128xf32> to vector<1x128xf32>
    %192 = vector.broadcast %191 : vector<1x128xf32> to vector<32x128xf32>
    %193 = arith.addf %189, %192 : vector<32x128xf32>
    %194 = arith.addf %175, %193 : vector<32x128xf32>
    %c0_76 = arith.constant 0 : index
    %c0_77 = arith.constant 0 : index
    %c0_78 = arith.constant 0 : index
    %195 = vector.load %arg16[%c0_76, %c0_77, %c0_78] : memref<1x1x128xf32, #tpu.memory_space<vmem>>, vector<1x1x128xf32>
    %196 = vector.shape_cast %195 : vector<1x1x128xf32> to vector<1x128xf32>
    %c0_79 = arith.constant 0 : index
    %c0_80 = arith.constant 0 : index
    %c0_81 = arith.constant 0 : index
    %197 = vector.load %arg17[%c0_79, %c0_80, %c0_81] : memref<1x1x128xf32, #tpu.memory_space<vmem>>, vector<1x1x128xf32>
    %198 = vector.shape_cast %197 : vector<1x1x128xf32> to vector<1x128xf32>
    %c0_82 = arith.constant 0 : index
    %c0_83 = arith.constant 0 : index
    %c0_84 = arith.constant 0 : index
    %199 = vector.load %arg18[%c0_82, %c0_83, %c0_84] : memref<1x1x128xf32, #tpu.memory_space<vmem>>, vector<1x1x128xf32>
    %200 = vector.shape_cast %199 : vector<1x1x128xf32> to vector<1x128xf32>
    %c0_85 = arith.constant 0 : index
    %c0_86 = arith.constant 0 : index
    %c0_87 = arith.constant 0 : index
    %201 = vector.load %arg19[%c0_85, %c0_86, %c0_87] : memref<1x1x128xf32, #tpu.memory_space<vmem>>, vector<1x1x128xf32>
    %202 = vector.shape_cast %201 : vector<1x1x128xf32> to vector<1x128xf32>
    %cst_88 = arith.constant dense<0.000000e+00> : vector<32xf32>
    %203 = vector.multi_reduction <add>, %194, %cst_88 [1] : vector<32x128xf32> to vector<32xf32>
    %204 = vector.shape_cast %203 : vector<32xf32> to vector<32x1xf32>
    %cst_89 = arith.constant 1.280000e+02 : f32
    %205 = vector.broadcast %cst_89 : f32 to vector<32x1xf32>
    %206 = arith.divf %204, %205 : vector<32x1xf32>
    %207 = vector.broadcast %206 : vector<32x1xf32> to vector<32x128xf32>
    %208 = arith.subf %194, %207 : vector<32x128xf32>
    %209 = arith.mulf %208, %208 : vector<32x128xf32>
    %cst_90 = arith.constant dense<0.000000e+00> : vector<32xf32>
    %210 = vector.multi_reduction <add>, %209, %cst_90 [1] : vector<32x128xf32> to vector<32xf32>
    %211 = vector.shape_cast %210 : vector<32xf32> to vector<32x1xf32>
    %cst_91 = arith.constant 1.280000e+02 : f32
    %212 = vector.broadcast %cst_91 : f32 to vector<32x1xf32>
    %213 = arith.divf %211, %212 : vector<32x1xf32>
    %214 = vector.broadcast %206 : vector<32x1xf32> to vector<32x128xf32>
    %215 = arith.subf %194, %214 : vector<32x128xf32>
    %cst_92 = arith.constant 9.99999974E-6 : f32
    %216 = vector.broadcast %cst_92 : f32 to vector<32x1xf32>
    %217 = arith.addf %213, %216 : vector<32x1xf32>
    %218 = math.rsqrt %217 : vector<32x1xf32>
    %219 = vector.broadcast %218 : vector<32x1xf32> to vector<32x128xf32>
    %220 = arith.mulf %215, %219 : vector<32x128xf32>
    %221 = vector.broadcast %196 : vector<1x128xf32> to vector<32x128xf32>
    %222 = arith.mulf %220, %221 : vector<32x128xf32>
    %223 = vector.broadcast %198 : vector<1x128xf32> to vector<32x128xf32>
    %224 = arith.addf %222, %223 : vector<32x128xf32>
    %225 = vector.broadcast %200 : vector<1x128xf32> to vector<32x128xf32>
    %226 = arith.mulf %225, %224 : vector<32x128xf32>
    %227 = vector.broadcast %202 : vector<1x128xf32> to vector<32x128xf32>
    %228 = arith.addf %226, %227 : vector<32x128xf32>
    %229 = vector.shape_cast %228 : vector<32x128xf32> to vector<2x16x128xf32>
    %c0_93 = arith.constant 0 : index
    %c0_94 = arith.constant 0 : index
    %c0_95 = arith.constant 0 : index
    %230 = vector.load %arg20[%c0_93, %c0_94, %c0_95] : memref<2x16x128xf32, #tpu.memory_space<vmem>>, vector<2x16x128xf32>
    tpu.vector_store %arg20[%c0_93, %c0_94, %c0_95], %229 {strides = array<i32>} : memref<2x16x128xf32, #tpu.memory_space<vmem>>, vector<2x16x128xf32>,
    return
  }
  func.func @transform_0(%arg0: i32, %arg1: i32) -> (i32, i32, i32) {
    %c0_i32 = arith.constant 0 : i32
    %c0_i32_0 = arith.constant 0 : i32
    %c0_i32_1 = arith.constant 0 : i32
    return %arg0, %c0_i32, %c0_i32_0 : i32, i32, i32
  }
  func.func @transform_1(%arg0: i32, %arg1: i32) -> (i32, i32, i32) {
    %c0_i32 = arith.constant 0 : i32
    %c0_i32_0 = arith.constant 0 : i32
    %c0_i32_1 = arith.constant 0 : i32
    return %arg0, %c0_i32, %c0_i32_0 : i32, i32, i32
  }
  func.func @transform_2(%arg0: i32, %arg1: i32) -> (i32, i32, i32) {
    %c0_i32 = arith.constant 0 : i32
    %c0_i32_0 = arith.constant 0 : i32
    %c0_i32_1 = arith.constant 0 : i32
    return %arg1, %c0_i32, %c0_i32_0 : i32, i32, i32
  }
  func.func @transform_3(%arg0: i32, %arg1: i32) -> (i32, i32, i32) {
    %c0_i32 = arith.constant 0 : i32
    %c0_i32_0 = arith.constant 0 : i32
    %c0_i32_1 = arith.constant 0 : i32
    return %arg1, %c0_i32, %c0_i32_0 : i32, i32, i32
  }
  func.func @transform_4(%arg0: i32, %arg1: i32) -> (i32, i32, i32) {
    %c0_i32 = arith.constant 0 : i32
    %c0_i32_0 = arith.constant 0 : i32
    %c0_i32_1 = arith.constant 0 : i32
    return %arg1, %c0_i32, %c0_i32_0 : i32, i32, i32
  }
  func.func @transform_5(%arg0: i32, %arg1: i32) -> (i32, i32, i32) {
    %c0_i32 = arith.constant 0 : i32
    %c0_i32_0 = arith.constant 0 : i32
    %c0_i32_1 = arith.constant 0 : i32
    return %arg1, %c0_i32, %c0_i32_0 : i32, i32, i32
  }
  func.func @transform_6(%arg0: i32, %arg1: i32) -> (i32, i32, i32) {
    %c0_i32 = arith.constant 0 : i32
    %c0_i32_0 = arith.constant 0 : i32
    %c0_i32_1 = arith.constant 0 : i32
    return %arg1, %c0_i32, %c0_i32_0 : i32, i32, i32
  }
  func.func @transform_7(%arg0: i32, %arg1: i32) -> (i32, i32, i32) {
    %c0_i32 = arith.constant 0 : i32
    %c0_i32_0 = arith.constant 0 : i32
    %c0_i32_1 = arith.constant 0 : i32
    return %arg1, %c0_i32, %c0_i32_0 : i32, i32, i32
  }
  func.func @transform_8(%arg0: i32, %arg1: i32) -> (i32, i32, i32) {
    %c0_i32 = arith.constant 0 : i32
    %c0_i32_0 = arith.constant 0 : i32
    %c0_i32_1 = arith.constant 0 : i32
    return %arg1, %c0_i32, %c0_i32_0 : i32, i32, i32
  }
  func.func @transform_9(%arg0: i32, %arg1: i32) -> (i32, i32, i32) {
    %c0_i32 = arith.constant 0 : i32
    %c0_i32_0 = arith.constant 0 : i32
    %c0_i32_1 = arith.constant 0 : i32
    return %arg1, %c0_i32, %c0_i32_0 : i32, i32, i32
  }
  func.func @transform_10(%arg0: i32, %arg1: i32) -> (i32, i32, i32) {
    %c0_i32 = arith.constant 0 : i32
    %c0_i32_0 = arith.constant 0 : i32
    %c0_i32_1 = arith.constant 0 : i32
    return %arg1, %c0_i32, %c0_i32_0 : i32, i32, i32
  }
  func.func @transform_11(%arg0: i32, %arg1: i32) -> (i32, i32, i32) {
    %c0_i32 = arith.constant 0 : i32
    %c0_i32_0 = arith.constant 0 : i32
    %c0_i32_1 = arith.constant 0 : i32
    return %arg1, %c0_i32, %c0_i32_0 : i32, i32, i32
  }
  func.func @transform_12(%arg0: i32, %arg1: i32) -> (i32, i32, i32) {
    %c0_i32 = arith.constant 0 : i32
    %c0_i32_0 = arith.constant 0 : i32
    %c0_i32_1 = arith.constant 0 : i32
    return %arg1, %c0_i32, %c0_i32_0 : i32, i32, i32
  }
  func.func @transform_13(%arg0: i32, %arg1: i32) -> (i32, i32, i32) {
    %c0_i32 = arith.constant 0 : i32
    %c0_i32_0 = arith.constant 0 : i32
    %c0_i32_1 = arith.constant 0 : i32
    return %arg1, %c0_i32, %c0_i32_0 : i32, i32, i32
  }
  func.func @transform_14(%arg0: i32, %arg1: i32) -> (i32, i32, i32) {
    %c0_i32 = arith.constant 0 : i32
    %c0_i32_0 = arith.constant 0 : i32
    %c0_i32_1 = arith.constant 0 : i32
    return %arg1, %c0_i32, %c0_i32_0 : i32, i32, i32
  }
  func.func @transform_15(%arg0: i32, %arg1: i32) -> (i32, i32, i32) {
    %c0_i32 = arith.constant 0 : i32
    %c0_i32_0 = arith.constant 0 : i32
    %c0_i32_1 = arith.constant 0 : i32
    return %arg1, %c0_i32, %c0_i32_0 : i32, i32, i32
  }
  func.func @transform_16(%arg0: i32, %arg1: i32) -> (i32, i32, i32) {
    %c0_i32 = arith.constant 0 : i32
    %c0_i32_0 = arith.constant 0 : i32
    %c0_i32_1 = arith.constant 0 : i32
    return %arg1, %c0_i32, %c0_i32_0 : i32, i32, i32
  }
  func.func @transform_17(%arg0: i32, %arg1: i32) -> (i32, i32, i32) {
    %c0_i32 = arith.constant 0 : i32
    %c0_i32_0 = arith.constant 0 : i32
    %c0_i32_1 = arith.constant 0 : i32
    return %arg1, %c0_i32, %c0_i32_0 : i32, i32, i32
  }
  func.func @transform_18(%arg0: i32, %arg1: i32) -> (i32, i32, i32) {
    %c0_i32 = arith.constant 0 : i32
    %c0_i32_0 = arith.constant 0 : i32
    %c0_i32_1 = arith.constant 0 : i32
    return %arg0, %c0_i32, %c0_i32_0 : i32, i32, i32
  }
}

</mosaic_0001>

<llo_original>
// kernel: tpu_custom_call.1
$region0: #{tpu_custom_call.1}
  #allocation0 [shape = 'u32[]', space=smem, size = 0x4, offset = 0x4, fixed_abs, tag = 'smem constant byte address 0x4 - core index']
  #allocation1 [shape = 'u32[144,128]{1,0:T(1,128)}', space=vmem, size = 0x12000, scoped, tag = 'internal scratch']
  %s0 = inlined_call_operand.hbm [shape: f32[2,16,128], index: 0, kind: input, shape index: {}]
  %s1 = inlined_call_operand.hbm [shape: f32[2,1,16], index: 1, kind: input, shape index: {}]
  %s2 = inlined_call_operand.hbm [shape: bf16[2,128,384], index: 2, kind: input, shape index: {}]
  %s3 = inlined_call_operand.vmem [shape: f32[2,1,384], index: 3, kind: input, shape index: {}]
  %s4 = inlined_call_operand.hbm [shape: bf16[2,128,128], index: 4, kind: input, shape index: {}]
  %s5 = inlined_call_operand.vmem [shape: f32[2,1,128], index: 5, kind: input, shape index: {}]
  %s6 = inlined_call_operand.hbm [shape: bf16[2,128,512], index: 6, kind: input, shape index: {}]
  %s7 = inlined_call_operand.vmem [shape: f32[2,1,512], index: 7, kind: input, shape index: {}]
  %s8 = inlined_call_operand.hbm [shape: bf16[2,512,128], index: 8, kind: input, shape index: {}]
  %s9 = inlined_call_operand.vmem [shape: f32[2,1,128], index: 9, kind: input, shape index: {}]
  %s10 = inlined_call_operand.vmem [shape: f32[2,1,128], index: 10, kind: input, shape index: {}]
  %s11 = inlined_call_operand.vmem [shape: f32[2,1,128], index: 11, kind: input, shape index: {}]
  %s12 = inlined_call_operand.vmem [shape: f32[2,1,128], index: 12, kind: input, shape index: {}]
  %s13 = inlined_call_operand.vmem [shape: f32[2,1,128], index: 13, kind: input, shape index: {}]
  %s14 = inlined_call_operand.vmem [shape: f32[2,1,128], index: 14, kind: input, shape index: {}]
  %s15 = inlined_call_operand.vmem [shape: f32[2,1,128], index: 15, kind: input, shape index: {}]
  %s16 = inlined_call_operand.vmem [shape: f32[2,1,128], index: 16, kind: input, shape index: {}]
  %s17 = inlined_call_operand.vmem [shape: f32[2,1,128], index: 17, kind: input, shape index: {}]
  %s18 = inlined_call_operand.hbm [shape: f32[2,16,128], index: 18, kind: output, shape index: {}]
  %s19 = sld [smem:[#allocation0]]
  $region133: #{tpu_custom_call.1} parent=0
    _
  %s21 = ssub.s32 1, %s19
  %s22 = scalar_select 0, %s21, %s19
  $region1: #{tpu_custom_call.1} parent=0
    #allocation2 [shape = 'u8[16384]{0}', space=vmem, size = 0x4000, scoped, tag = 'input window, operand 0, single buffered']
    #allocation3 [shape = 's32[2]{0}', space=sflag, size = 0x8, scoped, tag = 'scoped memory for tpu_custom_call.1']
    #allocation4 [shape = 's32[2]{0}', space=sflag, size = 0x8, scoped, tag = 'scoped memory for tpu_custom_call.1']
    #allocation5 [shape = 'u8[1024]{0}', space=vmem, size = 0x400, scoped, tag = 'input window, operand 1, single buffered']
    #allocation6 [shape = 's32[1]{0}', space=sflag, size = 0x4, scoped, tag = 'scoped memory for tpu_custom_call.1']
    #allocation7 [shape = 'u8[196608]{0}', space=vmem, size = 0x30000, scoped, tag = 'input window, operand 2']
    #allocation8 [shape = 'u8[65536]{0}', space=vmem, size = 0x10000, scoped, tag = 'input window, operand 4']
    #allocation9 [shape = 'u8[262144]{0}', space=vmem, size = 0x40000, scoped, tag = 'input window, operand 6']
    #allocation10 [shape = 'u8[262144]{0}', space=vmem, size = 0x40000, scoped, tag = 'input window, operand 8']
    #allocation11 [shape = 'u8[16384]{0}', space=vmem, size = 0x4000, scoped, tag = 'output window, operand 0, single buffered']
    %23 = vsyncpa [#allocation3], 0
    %24 = vsyncpa [#allocation6], 0
    %25 = vsyncpa [#allocation4], 0
    loop: start=0, step=1, limit=4
    $region2: #{tpu_custom_call.1} parent=1 // loop_pre_header
      _
    $region3: #{tpu_custom_call.1} parent=1 // loop_header
      %s27 = sphi 0, %s31
      %p28 = scmp.ge.s32.totalorder %s27, 4
      %s34 = sphi 0, %s46
      %s35 = sphi 0, %s42
      %s36 = sphi 0, %s34
      %s37 = sphi 0, %s35
      %s38 = sphi 0, %s36
      %s39 = sphi 0, %s37
      %s49 = sphi 0, %s51
      %s52 = sphi 0, %s49
      %s53 = sphi 0, %s52
      %s69 = sphi 0, %s53
      %s75 = sphi 0, %s77
      %s78 = sphi 0, %s75
      %s79 = sphi 0, %s78
      %s95 = sphi 0, %s79
      %s101 = sphi 0, %s103
      %s104 = sphi 0, %s101
      %s105 = sphi 0, %s104
      %s121 = sphi 0, %s105
      %s127 = sphi 0, %s129
      %s130 = sphi 0, %s127
      %s131 = sphi 0, %s130
      %s147 = sphi 0, %s131
      %s153 = sphi 0, %s155
      %s156 = sphi 0, %s153
      %s157 = sphi 0, %s156
      %s173 = sphi 0, %s157
      %s179 = sphi 0, %s181
      %s182 = sphi 0, %s179
      %s183 = sphi 0, %s182
      %s199 = sphi 0, %s183
      %s205 = sphi 0, %s207
      %s208 = sphi 0, %s205
      %s209 = sphi 0, %s208
      %s225 = sphi 0, %s209
      %s231 = sphi 0, %s233
      %s234 = sphi 0, %s231
      %s235 = sphi 0, %s234
      %s251 = sphi 0, %s235
      %s257 = sphi 0, %s259
      %s260 = sphi 0, %s257
      %s261 = sphi 0, %s260
      %s277 = sphi 0, %s261
      %s283 = sphi 0, %s285
      %s286 = sphi 0, %s283
      %s287 = sphi 0, %s286
      %s303 = sphi 0, %s287
      %s309 = sphi 0, %s311
      %s312 = sphi 0, %s309
      %s313 = sphi 0, %s312
      %s329 = sphi 0, %s313
      %s335 = sphi 0, %s337
      %s338 = sphi 0, %s335
      %s339 = sphi 0, %s338
      %s355 = sphi 0, %s339
      %s361 = sphi 0, %s363
      %s364 = sphi 0, %s361
      %s365 = sphi 0, %s364
      %s381 = sphi 0, %s365
      %s387 = sphi 0, %s389
      %s390 = sphi 0, %s387
      %s391 = sphi 0, %s390
      %s407 = sphi 0, %s391
      %s413 = sphi 0, %s415
      %s416 = sphi 0, %s413
      %s417 = sphi 0, %s416
      %s433 = sphi 0, %s417
      %s439 = sphi 0, %s441
      %s442 = sphi 0, %s439
      %s443 = sphi 0, %s442
      %s459 = sphi 0, %s443
      %s465 = sphi 0, %s467
      %s468 = sphi 0, %s465
      %s469 = sphi 0, %s468
      %s485 = sphi 0, %s469
      %s491 = sphi 0, %s493
      %s494 = sphi 0, %s491
      %s495 = sphi 0, %s494
      %s511 = sphi 0, %s495
      %s517 = sphi 0, %s519
      %s520 = sphi 0, %s517
      %s521 = sphi 0, %s520
      %s537 = sphi 0, %s521
    $region4: #{tpu_custom_call.1} parent=1 // loop_header_branch
      %30 = sbr.rel (%p28) target = $region8
    $region5: #{tpu_custom_call.1} parent=1 // loop_body
      %s32 = ssub.s32 %s27, 1
      %s33 = ssub.s32 %s27, 2
      %s40 = sadd.s32 1, %s35
      %p41 = scmp.ge.s32.totalorder %s40, 2
      %s42 = scalar_select %p41, 0, %s40
      %s43 = sadd.s32 1, %s34
      %s44 = scalar_select %p41, %s43, %s34
      %p45 = scmp.ge.s32.totalorder %s44, 1
      %s46 = scalar_select %p45, 0, %s44
      %s47 = ssub.s32 %s34, %s46
      %p48 = scmp.eq.s32.totalorder %s47, 0
      %s50 = sadd.s32 %s49, 1
      %s51 = scalar_select %p48, %s49, %s50
      %p54 = pneg %p48
      %p55 = scmp.eq.s32.totalorder %s27, 1
      %p56 = por %p54, %p55
      %p57 = scmp.ne.s32.totalorder %s49, %s52
      %p58 = scmp.eq.s32.totalorder %s27, 0
      %p59 = por %p57, %p58
      %p60 = scmp.ne.s32.totalorder %s49, %s52
      %p61 = scmp.eq.s32.totalorder %s32, 1
      %p62 = por %p60, %p61
      %p63 = scmp.ne.s32.totalorder %s52, %s53
      %p64 = scmp.eq.s32.totalorder %s32, 0
      %p65 = por %p63, %p64
      %p66 = scmp.ne.s32.totalorder %s52, %s53
      %p67 = scmp.eq.s32.totalorder %s33, 1
      %p68 = por %p66, %p67
      %p70 = scmp.ne.s32.totalorder %s53, %s69
      %p71 = scmp.eq.s32.totalorder %s33, 0
      %p72 = por %p70, %p71
      %s73 = ssub.s32 %s34, %s46
      %p74 = scmp.eq.s32.totalorder %s73, 0
      %s76 = sadd.s32 %s75, 1
      %s77 = scalar_select %p74, %s75, %s76
      %p80 = pneg %p74
      %p81 = scmp.eq.s32.totalorder %s27, 1
      %p82 = por %p80, %p81
      %p83 = scmp.ne.s32.totalorder %s75, %s78
      %p84 = scmp.eq.s32.totalorder %s27, 0
      %p85 = por %p83, %p84
      %p86 = scmp.ne.s32.totalorder %s75, %s78
      %p87 = scmp.eq.s32.totalorder %s32, 1
      %p88 = por %p86, %p87
      %p89 = scmp.ne.s32.totalorder %s78, %s79
      %p90 = scmp.eq.s32.totalorder %s32, 0
      %p91 = por %p89, %p90
      %p92 = scmp.ne.s32.totalorder %s78, %s79
      %p93 = scmp.eq.s32.totalorder %s33, 1
      %p94 = por %p92, %p93
      %p96 = scmp.ne.s32.totalorder %s79, %s95
      %p97 = scmp.eq.s32.totalorder %s33, 0
      %p98 = por %p96, %p97
      %s99 = ssub.s32 %s35, %s42
      %p100 = scmp.eq.s32.totalorder %s99, 0
      %s102 = sadd.s32 %s101, 1
      %s103 = scalar_select %p100, %s101, %s102
      %p106 = pneg %p100
      %p107 = scmp.eq.s32.totalorder %s27, 1
      %p108 = por %p106, %p107
      %p109 = scmp.ne.s32.totalorder %s101, %s104
      %p110 = scmp.eq.s32.totalorder %s27, 0
      %p111 = por %p109, %p110
      %p112 = scmp.ne.s32.totalorder %s101, %s104
      %p113 = scmp.eq.s32.totalorder %s32, 1
      %p114 = por %p112, %p113
      %p115 = scmp.ne.s32.totalorder %s104, %s105
      %p116 = scmp.eq.s32.totalorder %s32, 0
      %p117 = por %p115, %p116
      %p118 = scmp.ne.s32.totalorder %s104, %s105
      %p119 = scmp.eq.s32.totalorder %s33, 1
      %p120 = por %p118, %p119
      %p122 = scmp.ne.s32.totalorder %s105, %s121
      %p123 = scmp.eq.s32.totalorder %s33, 0
      %p124 = por %p122, %p123
      %s125 = ssub.s32 %s35, %s42
      %p126 = scmp.eq.s32.totalorder %s125, 0
      %s128 = sadd.s32 %s127, 1
      %s129 = scalar_select %p126, %s127, %s128
      %p132 = pneg %p126
      %p133 = scmp.eq.s32.totalorder %s27, 1
      %p134 = por %p132, %p133
      %p135 = scmp.ne.s32.totalorder %s127, %s130
      %p136 = scmp.eq.s32.totalorder %s27, 0
      %p137 = por %p135, %p136
      %p138 = scmp.ne.s32.totalorder %s127, %s130
      %p139 = scmp.eq.s32.totalorder %s32, 1
      %p140 = por %p138, %p139
      %p141 = scmp.ne.s32.totalorder %s130, %s131
      %p142 = scmp.eq.s32.totalorder %s32, 0
      %p143 = por %p141, %p142
      %p144 = scmp.ne.s32.totalorder %s130, %s131
      %p145 = scmp.eq.s32.totalorder %s33, 1
      %p146 = por %p144, %p145
      %p148 = scmp.ne.s32.totalorder %s131, %s147
      %p149 = scmp.eq.s32.totalorder %s33, 0
      %p150 = por %p148, %p149
      %s151 = ssub.s32 %s35, %s42
      %p152 = scmp.eq.s32.totalorder %s151, 0
      %s154 = sadd.s32 %s153, 1
      %s155 = scalar_select %p152, %s153, %s154
      %p158 = pneg %p152
      %p159 = scmp.eq.s32.totalorder %s27, 1
      %p160 = por %p158, %p159
      %p161 = scmp.ne.s32.totalorder %s153, %s156
      %p162 = scmp.eq.s32.totalorder %s27, 0
      %p163 = por %p161, %p162
      %p164 = scmp.ne.s32.totalorder %s153, %s156
      %p165 = scmp.eq.s32.totalorder %s32, 1
      %p166 = por %p164, %p165
      %p167 = scmp.ne.s32.totalorder %s156, %s157
      %p168 = scmp.eq.s32.totalorder %s32, 0
      %p169 = por %p167, %p168
      %p170 = scmp.ne.s32.totalorder %s156, %s157
      %p171 = scmp.eq.s32.totalorder %s33, 1
      %p172 = por %p170, %p171
      %p174 = scmp.ne.s32.totalorder %s157, %s173
      %p175 = scmp.eq.s32.totalorder %s33, 0
      %p176 = por %p174, %p175
      %s177 = ssub.s32 %s35, %s42
      %p178 = scmp.eq.s32.totalorder %s177, 0
      %s180 = sadd.s32 %s179, 1
      %s181 = scalar_select %p178, %s179, %s180
      %p184 = pneg %p178
      %p185 = scmp.eq.s32.totalorder %s27, 1
      %p186 = por %p184, %p185
      %p187 = scmp.ne.s32.totalorder %s179, %s182
      %p188 = scmp.eq.s32.totalorder %s27, 0
      %p189 = por %p187, %p188
      %p190 = scmp.ne.s32.totalorder %s179, %s182
      %p191 = scmp.eq.s32.totalorder %s32, 1
      %p192 = por %p190, %p191
      %p193 = scmp.ne.s32.totalorder %s182, %s183
      %p194 = scmp.eq.s32.totalorder %s32, 0
      %p195 = por %p193, %p194
      %p196 = scmp.ne.s32.totalorder %s182, %s183
      %p197 = scmp.eq.s32.totalorder %s33, 1
      %p198 = por %p196, %p197
      %p200 = scmp.ne.s32.totalorder %s183, %s199
      %p201 = scmp.eq.s32.totalorder %s33, 0
      %p202 = por %p200, %p201
      %s203 = ssub.s32 %s35, %s42
      %p204 = scmp.eq.s32.totalorder %s203, 0
      %s206 = sadd.s32 %s205, 1
      %s207 = scalar_select %p204, %s205, %s206
      %p210 = pneg %p204
      %p211 = scmp.eq.s32.totalorder %s27, 1
      %p212 = por %p210, %p211
      %p213 = scmp.ne.s32.totalorder %s205, %s208
      %p214 = scmp.eq.s32.totalorder %s27, 0
      %p215 = por %p213, %p214
      %p216 = scmp.ne.s32.totalorder %s205, %s208
      %p217 = scmp.eq.s32.totalorder %s32, 1
      %p218 = por %p216, %p217
      %p219 = scmp.ne.s32.totalorder %s208, %s209
      %p220 = scmp.eq.s32.totalorder %s32, 0
      %p221 = por %p219, %p220
      %p222 = scmp.ne.s32.totalorder %s208, %s209
      %p223 = scmp.eq.s32.totalorder %s33, 1
      %p224 = por %p222, %p223
      %p226 = scmp.ne.s32.totalorder %s209, %s225
      %p227 = scmp.eq.s32.totalorder %s33, 0
      %p228 = por %p226, %p227
      %s229 = ssub.s32 %s35, %s42
      %p230 = scmp.eq.s32.totalorder %s229, 0
      %s232 = sadd.s32 %s231, 1
      %s233 = scalar_select %p230, %s231, %s232
      %p236 = pneg %p230
      %p237 = scmp.eq.s32.totalorder %s27, 1
      %p238 = por %p236, %p237
      %p239 = scmp.ne.s32.totalorder %s231, %s234
      %p240 = scmp.eq.s32.totalorder %s27, 0
      %p241 = por %p239, %p240
      %p242 = scmp.ne.s32.totalorder %s231, %s234
      %p243 = scmp.eq.s32.totalorder %s32, 1
      %p244 = por %p242, %p243
      %p245 = scmp.ne.s32.totalorder %s234, %s235
      %p246 = scmp.eq.s32.totalorder %s32, 0
      %p247 = por %p245, %p246
      %p248 = scmp.ne.s32.totalorder %s234, %s235
      %p249 = scmp.eq.s32.totalorder %s33, 1
      %p250 = por %p248, %p249
      %p252 = scmp.ne.s32.totalorder %s235, %s251
      %p253 = scmp.eq.s32.totalorder %s33, 0
      %p254 = por %p252, %p253
      %s255 = ssub.s32 %s35, %s42
      %p256 = scmp.eq.s32.totalorder %s255, 0
      %s258 = sadd.s32 %s257, 1
      %s259 = scalar_select %p256, %s257, %s258
      %p262 = pneg %p256
      %p263 = scmp.eq.s32.totalorder %s27, 1
      %p264 = por %p262, %p263
      %p265 = scmp.ne.s32.totalorder %s257, %s260
      %p266 = scmp.eq.s32.totalorder %s27, 0
      %p267 = por %p265, %p266
      %p268 = scmp.ne.s32.totalorder %s257, %s260
      %p269 = scmp.eq.s32.totalorder %s32, 1
      %p270 = por %p268, %p269
      %p271 = scmp.ne.s32.totalorder %s260, %s261
      %p272 = scmp.eq.s32.totalorder %s32, 0
      %p273 = por %p271, %p272
      %p274 = scmp.ne.s32.totalorder %s260, %s261
      %p275 = scmp.eq.s32.totalorder %s33, 1
      %p276 = por %p274, %p275
      %p278 = scmp.ne.s32.totalorder %s261, %s277
      %p279 = scmp.eq.s32.totalorder %s33, 0
      %p280 = por %p278, %p279
      %s281 = ssub.s32 %s35, %s42
      %p282 = scmp.eq.s32.totalorder %s281, 0
      %s284 = sadd.s32 %s283, 1
      %s285 = scalar_select %p282, %s283, %s284
      %p288 = pneg %p282
      %p289 = scmp.eq.s32.totalorder %s27, 1
      %p290 = por %p288, %p289
      %p291 = scmp.ne.s32.totalorder %s283, %s286
      %p292 = scmp.eq.s32.totalorder %s27, 0
      %p293 = por %p291, %p292
      %p294 = scmp.ne.s32.totalorder %s283, %s286
      %p295 = scmp.eq.s32.totalorder %s32, 1
      %p296 = por %p294, %p295
      %p297 = scmp.ne.s32.totalorder %s286, %s287
      %p298 = scmp.eq.s32.totalorder %s32, 0
      %p299 = por %p297, %p298
      %p300 = scmp.ne.s32.totalorder %s286, %s287
      %p301 = scmp.eq.s32.totalorder %s33, 1
      %p302 = por %p300, %p301
      %p304 = scmp.ne.s32.totalorder %s287, %s303
      %p305 = scmp.eq.s32.totalorder %s33, 0
      %p306 = por %p304, %p305
      %s307 = ssub.s32 %s35, %s42
      %p308 = scmp.eq.s32.totalorder %s307, 0
      %s310 = sadd.s32 %s309, 1
      %s311 = scalar_select %p308, %s309, %s310
      %p314 = pneg %p308
      %p315 = scmp.eq.s32.totalorder %s27, 1
      %p316 = por %p314, %p315
      %p317 = scmp.ne.s32.totalorder %s309, %s312
      %p318 = scmp.eq.s32.totalorder %s27, 0
      %p319 = por %p317, %p318
      %p320 = scmp.ne.s32.totalorder %s309, %s312
      %p321 = scmp.eq.s32.totalorder %s32, 1
      %p322 = por %p320, %p321
      %p323 = scmp.ne.s32.totalorder %s312, %s313
      %p324 = scmp.eq.s32.totalorder %s32, 0
      %p325 = por %p323, %p324
      %p326 = scmp.ne.s32.totalorder %s312, %s313
      %p327 = scmp.eq.s32.totalorder %s33, 1
      %p328 = por %p326, %p327
      %p330 = scmp.ne.s32.totalorder %s313, %s329
      %p331 = scmp.eq.s32.totalorder %s33, 0
      %p332 = por %p330, %p331
      %s333 = ssub.s32 %s35, %s42
      %p334 = scmp.eq.s32.totalorder %s333, 0
      %s336 = sadd.s32 %s335, 1
      %s337 = scalar_select %p334, %s335, %s336
      %p340 = pneg %p334
      %p341 = scmp.eq.s32.totalorder %s27, 1
      %p342 = por %p340, %p341
      %p343 = scmp.ne.s32.totalorder %s335, %s338
      %p344 = scmp.eq.s32.totalorder %s27, 0
      %p345 = por %p343, %p344
      %p346 = scmp.ne.s32.totalorder %s335, %s338
      %p347 = scmp.eq.s32.totalorder %s32, 1
      %p348 = por %p346, %p347
      %p349 = scmp.ne.s32.totalorder %s338, %s339
      %p350 = scmp.eq.s32.totalorder %s32, 0
      %p351 = por %p349, %p350
      %p352 = scmp.ne.s32.totalorder %s338, %s339
      %p353 = scmp.eq.s32.totalorder %s33, 1
      %p354 = por %p352, %p353
      %p356 = scmp.ne.s32.totalorder %s339, %s355
      %p357 = scmp.eq.s32.totalorder %s33, 0
      %p358 = por %p356, %p357
      %s359 = ssub.s32 %s35, %s42
      %p360 = scmp.eq.s32.totalorder %s359, 0
      %s362 = sadd.s32 %s361, 1
      %s363 = scalar_select %p360, %s361, %s362
      %p366 = pneg %p360
      %p367 = scmp.eq.s32.totalorder %s27, 1
      %p368 = por %p366, %p367
      %p369 = scmp.ne.s32.totalorder %s361, %s364
      %p370 = scmp.eq.s32.totalorder %s27, 0
      %p371 = por %p369, %p370
      %p372 = scmp.ne.s32.totalorder %s361, %s364
      %p373 = scmp.eq.s32.totalorder %s32, 1
      %p374 = por %p372, %p373
      %p375 = scmp.ne.s32.totalorder %s364, %s365
      %p376 = scmp.eq.s32.totalorder %s32, 0
      %p377 = por %p375, %p376
      %p378 = scmp.ne.s32.totalorder %s364, %s365
      %p379 = scmp.eq.s32.totalorder %s33, 1
      %p380 = por %p378, %p379
      %p382 = scmp.ne.s32.totalorder %s365, %s381
      %p383 = scmp.eq.s32.totalorder %s33, 0
      %p384 = por %p382, %p383
      %s385 = ssub.s32 %s35, %s42
      %p386 = scmp.eq.s32.totalorder %s385, 0
      %s388 = sadd.s32 %s387, 1
      %s389 = scalar_select %p386, %s387, %s388
      %p392 = pneg %p386
      %p393 = scmp.eq.s32.totalorder %s27, 1
      %p394 = por %p392, %p393
      %p395 = scmp.ne.s32.totalorder %s387, %s390
      %p396 = scmp.eq.s32.totalorder %s27, 0
      %p397 = por %p395, %p396
      %p398 = scmp.ne.s32.totalorder %s387, %s390
      %p399 = scmp.eq.s32.totalorder %s32, 1
      %p400 = por %p398, %p399
      %p401 = scmp.ne.s32.totalorder %s390, %s391
      %p402 = scmp.eq.s32.totalorder %s32, 0
      %p403 = por %p401, %p402
      %p404 = scmp.ne.s32.totalorder %s390, %s391
      %p405 = scmp.eq.s32.totalorder %s33, 1
      %p406 = por %p404, %p405
      %p408 = scmp.ne.s32.totalorder %s391, %s407
      %p409 = scmp.eq.s32.totalorder %s33, 0
      %p410 = por %p408, %p409
      %s411 = ssub.s32 %s35, %s42
      %p412 = scmp.eq.s32.totalorder %s411, 0
      %s414 = sadd.s32 %s413, 1
      %s415 = scalar_select %p412, %s413, %s414
      %p418 = pneg %p412
      %p419 = scmp.eq.s32.totalorder %s27, 1
      %p420 = por %p418, %p419
      %p421 = scmp.ne.s32.totalorder %s413, %s416
      %p422 = scmp.eq.s32.totalorder %s27, 0
      %p423 = por %p421, %p422
      %p424 = scmp.ne.s32.totalorder %s413, %s416
      %p425 = scmp.eq.s32.totalorder %s32, 1
      %p426 = por %p424, %p425
      %p427 = scmp.ne.s32.totalorder %s416, %s417
      %p428 = scmp.eq.s32.totalorder %s32, 0
      %p429 = por %p427, %p428
      %p430 = scmp.ne.s32.totalorder %s416, %s417
      %p431 = scmp.eq.s32.totalorder %s33, 1
      %p432 = por %p430, %p431
      %p434 = scmp.ne.s32.totalorder %s417, %s433
      %p435 = scmp.eq.s32.totalorder %s33, 0
      %p436 = por %p434, %p435
      %s437 = ssub.s32 %s35, %s42
      %p438 = scmp.eq.s32.totalorder %s437, 0
      %s440 = sadd.s32 %s439, 1
      %s441 = scalar_select %p438, %s439, %s440
      %p444 = pneg %p438
      %p445 = scmp.eq.s32.totalorder %s27, 1
      %p446 = por %p444, %p445
      %p447 = scmp.ne.s32.totalorder %s439, %s442
      %p448 = scmp.eq.s32.totalorder %s27, 0
      %p449 = por %p447, %p448
      %p450 = scmp.ne.s32.totalorder %s439, %s442
      %p451 = scmp.eq.s32.totalorder %s32, 1
      %p452 = por %p450, %p451
      %p453 = scmp.ne.s32.totalorder %s442, %s443
      %p454 = scmp.eq.s32.totalorder %s32, 0
      %p455 = por %p453, %p454
      %p456 = scmp.ne.s32.totalorder %s442, %s443
      %p457 = scmp.eq.s32.totalorder %s33, 1
      %p458 = por %p456, %p457
      %p460 = scmp.ne.s32.totalorder %s443, %s459
      %p461 = scmp.eq.s32.totalorder %s33, 0
      %p462 = por %p460, %p461
      %s463 = ssub.s32 %s35, %s42
      %p464 = scmp.eq.s32.totalorder %s463, 0
      %s466 = sadd.s32 %s465, 1
      %s467 = scalar_select %p464, %s465, %s466
      %p470 = pneg %p464
      %p471 = scmp.eq.s32.totalorder %s27, 1
      %p472 = por %p470, %p471
      %p473 = scmp.ne.s32.totalorder %s465, %s468
      %p474 = scmp.eq.s32.totalorder %s27, 0
      %p475 = por %p473, %p474
      %p476 = scmp.ne.s32.totalorder %s465, %s468
      %p477 = scmp.eq.s32.totalorder %s32, 1
      %p478 = por %p476, %p477
      %p479 = scmp.ne.s32.totalorder %s468, %s469
      %p480 = scmp.eq.s32.totalorder %s32, 0
      %p481 = por %p479, %p480
      %p482 = scmp.ne.s32.totalorder %s468, %s469
      %p483 = scmp.eq.s32.totalorder %s33, 1
      %p484 = por %p482, %p483
      %p486 = scmp.ne.s32.totalorder %s469, %s485
      %p487 = scmp.eq.s32.totalorder %s33, 0
      %p488 = por %p486, %p487
      %s489 = ssub.s32 %s35, %s42
      %p490 = scmp.eq.s32.totalorder %s489, 0
      %s492 = sadd.s32 %s491, 1
      %s493 = scalar_select %p490, %s491, %s492
      %p496 = pneg %p490
      %p497 = scmp.eq.s32.totalorder %s27, 1
      %p498 = por %p496, %p497
      %p499 = scmp.ne.s32.totalorder %s491, %s494
      %p500 = scmp.eq.s32.totalorder %s27, 0
      %p501 = por %p499, %p500
      %p502 = scmp.ne.s32.totalorder %s491, %s494
      %p503 = scmp.eq.s32.totalorder %s32, 1
      %p504 = por %p502, %p503
      %p505 = scmp.ne.s32.totalorder %s494, %s495
      %p506 = scmp.eq.s32.totalorder %s32, 0
      %p507 = por %p505, %p506
      %p508 = scmp.ne.s32.totalorder %s494, %s495
      %p509 = scmp.eq.s32.totalorder %s33, 1
      %p510 = por %p508, %p509
      %p512 = scmp.ne.s32.totalorder %s495, %s511
      %p513 = scmp.eq.s32.totalorder %s33, 0
      %p514 = por %p512, %p513
      %s515 = ssub.s32 %s34, %s46
      %p516 = scmp.eq.s32.totalorder %s515, 0
      %s518 = sadd.s32 %s517, 1
      %s519 = scalar_select %p516, %s517, %s518
      %p522 = pneg %p516
      %p523 = scmp.eq.s32.totalorder %s27, 1
      %p524 = por %p522, %p523
      %p525 = scmp.ne.s32.totalorder %s517, %s520
      %p526 = scmp.eq.s32.totalorder %s27, 0
      %p527 = por %p525, %p526
      %p528 = scmp.ne.s32.totalorder %s517, %s520
      %p529 = scmp.eq.s32.totalorder %s32, 1
      %p530 = por %p528, %p529
      %p531 = scmp.ne.s32.totalorder %s520, %s521
      %p532 = scmp.eq.s32.totalorder %s32, 0
      %p533 = por %p531, %p532
      %p534 = scmp.ne.s32.totalorder %s520, %s521
      %p535 = scmp.eq.s32.totalorder %s33, 1
      %p536 = por %p534, %p535
      %p538 = scmp.ne.s32.totalorder %s521, %s537
      %p539 = scmp.eq.s32.totalorder %s33, 0
      %p540 = por %p538, %p539
      %p541 = scmp.le.s32.totalorder 1, %s27
      %p542 = scmp.lt.s32.totalorder %s27, 3
      %p543 = pnand %p541, %p542
      %p544 = pneg %p543
      // Predicated region
      $region9: #{tpu_custom_call.1} parent=5 // pred_check
        _
      $region10: #{tpu_custom_call.1} parent=5 // pred_check_branch
        %546 = sbr.rel (%p543) target = $region12
      $region11: #{tpu_custom_call.1} parent=5 // pred_region
        %s547 = ssub.s32 %s27, 1
        // Predicated region
        $region13: #{tpu_custom_call.1} parent=11 // pred_check
          %p548 = pneg %p65
        $region14: #{tpu_custom_call.1} parent=11 // pred_check_branch
          %550 = sbr.rel (%p548) target = $region16
        $region15: #{tpu_custom_call.1} parent=11 // pred_region
          %s551 = smul.u32 2, %s36
          %s553 = ssub.s32 512, 512
          %554 = vsyncadd [#allocation3], %s553
          %s555 = smul.addr %s551, 2
          %s556 = smul.addr %s555, 128
          %s557 = scalar_lea.hbm %s0, %s556
          %s558 = sshll.u32 [#allocation2], 4
          %s559 = int_to_ptr.vmem [resolvable:$true] %s558
          %564 = dma.hbm_to_vmem [thread:$0]  %s557, 512, %s559, [#allocation3], 128, 128, 8
        $region16: #{tpu_custom_call.1} parent=11 // pred_fallthru
          _
        // Predicated region
        $region17: #{tpu_custom_call.1} parent=11 // pred_check
          %p565 = pneg %p91
        $region18: #{tpu_custom_call.1} parent=11 // pred_check_branch
          %567 = sbr.rel (%p565) target = $region20
        $region19: #{tpu_custom_call.1} parent=11 // pred_region
          %s568 = smul.u32 2, %s36
          %s570 = ssub.s32 32, 32
          %571 = vsyncadd [#allocation6], %s570
          %s572 = smul.addr %s568, 16
          %s573 = scalar_lea.hbm %s1, %s572
          %s574 = sshll.u32 [#allocation5], 4
          %s575 = int_to_ptr.vmem [resolvable:$true] %s574
          %580 = dma.hbm_to_vmem [thread:$0]  %s573, 32, %s575, [#allocation6], 16, 16, 1
        $region20: #{tpu_custom_call.1} parent=11 // pred_fallthru
          _
      $region12: #{tpu_custom_call.1} parent=5 // pred_fallthru
        _
      %p581 = scmp.lt.s32.totalorder %s27, 2
      // Predicated region
      $region21: #{tpu_custom_call.1} parent=5 // pred_check
        %p582 = pneg %p581
      $region22: #{tpu_custom_call.1} parent=5 // pred_check_branch
        %584 = sbr.rel (%p582) target = $region24
      $region23: #{tpu_custom_call.1} parent=5 // pred_region
        // Predicated region
        $region25: #{tpu_custom_call.1} parent=23 // pred_check
          %p585 = pneg %p111
        $region26: #{tpu_custom_call.1} parent=23 // pred_check_branch
          %587 = sbr.rel (%p585) target = $region28
        $region27: #{tpu_custom_call.1} parent=23 // pred_region
          %s588 = sand.u32 %s27, 1
          %s589 = scalar_lea.sflag [#allocation3], %s588
          %s590 = sand.u32 %s101, 1
          %s591 = smul.addr %s590, 192
          %s592 = scalar_lea.vmem [#allocation7], %s591
          %s594 = ssub.s32 3072, 3072
          %595 = vsyncadd %s589, %s594
          %s596 = smul.addr %s35, 48
          %s597 = smul.addr %s596, 64
          %s598 = scalar_lea.hbm %s2, %s597
          %s599 = sshll.u32 %s592, 4
          %s600 = int_to_ptr.vmem [resolvable:$true] %s599
          %605 = dma.hbm_to_vmem [thread:$0]  %s598, 3072, %s600, %s589, 192, 192, 12
        $region28: #{tpu_custom_call.1} parent=23 // pred_fallthru
          _
        // Predicated region
        $region29: #{tpu_custom_call.1} parent=23 // pred_check
          %p606 = pneg %p137
        $region30: #{tpu_custom_call.1} parent=23 // pred_check_branch
          %608 = sbr.rel (%p606) target = $region32
        $region31: #{tpu_custom_call.1} parent=23 // pred_region
          %p609 = scmp.lt.s32.totalorder %s35, 1
          %s610 = scalar_select %p609, %s35, 1
          %s611 = smul.addr %s610, 3
          %s612 = scalar_lea.vmem %s3, %s611
        $region32: #{tpu_custom_call.1} parent=23 // pred_fallthru
          _
        // Predicated region
        $region33: #{tpu_custom_call.1} parent=23 // pred_check
          %p613 = pneg %p163
        $region34: #{tpu_custom_call.1} parent=23 // pred_check_branch
          %615 = sbr.rel (%p613) target = $region36
        $region35: #{tpu_custom_call.1} parent=23 // pred_region
          %s616 = sand.u32 %s27, 1
          %s617 = scalar_lea.sflag [#allocation3], %s616
          %s618 = sand.u32 %s153, 1
          %s619 = smul.addr %s618, 64
          %s620 = scalar_lea.vmem [#allocation8], %s619
          %s622 = ssub.s32 1024, 1024
          %623 = vsyncadd %s617, %s622
          %s624 = smul.addr %s35, 16
          %s625 = smul.addr %s624, 64
          %s626 = scalar_lea.hbm %s4, %s625
          %s627 = sshll.u32 %s620, 4
          %s628 = int_to_ptr.vmem [resolvable:$true] %s627
          %633 = dma.hbm_to_vmem [thread:$0]  %s626, 1024, %s628, %s617, 64, 64, 4
        $region36: #{tpu_custom_call.1} parent=23 // pred_fallthru
          _
        // Predicated region
        $region37: #{tpu_custom_call.1} parent=23 // pred_check
          %p634 = pneg %p189
        $region38: #{tpu_custom_call.1} parent=23 // pred_check_branch
          %636 = sbr.rel (%p634) target = $region40
        $region39: #{tpu_custom_call.1} parent=23 // pred_region
          %p637 = scmp.lt.s32.totalorder %s35, 1
          %s638 = scalar_select %p637, %s35, 1
          %s639 = scalar_lea.vmem %s5, %s638
        $region40: #{tpu_custom_call.1} parent=23 // pred_fallthru
          _
        // Predicated region
        $region41: #{tpu_custom_call.1} parent=23 // pred_check
          %p640 = pneg %p215
        $region42: #{tpu_custom_call.1} parent=23 // pred_check_branch
          %642 = sbr.rel (%p640) target = $region44
        $region43: #{tpu_custom_call.1} parent=23 // pred_region
          %s643 = sand.u32 %s27, 1
          %s644 = scalar_lea.sflag [#allocation3], %s643
          %s645 = sand.u32 %s205, 1
          %s646 = smul.addr %s645, 256
          %s647 = scalar_lea.vmem [#allocation9], %s646
          %s649 = ssub.s32 4096, 4096
          %650 = vsyncadd %s644, %s649
          %s651 = smul.addr %s35, 64
          %s652 = smul.addr %s651, 64
          %s653 = scalar_lea.hbm %s6, %s652
          %s654 = sshll.u32 %s647, 4
          %s655 = int_to_ptr.vmem [resolvable:$true] %s654
          %660 = dma.hbm_to_vmem [thread:$0]  %s653, 4096, %s655, %s644, 256, 256, 16
        $region44: #{tpu_custom_call.1} parent=23 // pred_fallthru
          _
        // Predicated region
        $region45: #{tpu_custom_call.1} parent=23 // pred_check
          %p661 = pneg %p241
        $region46: #{tpu_custom_call.1} parent=23 // pred_check_branch
          %663 = sbr.rel (%p661) target = $region48
        $region47: #{tpu_custom_call.1} parent=23 // pred_region
          %p664 = scmp.lt.s32.totalorder %s35, 1
          %s665 = scalar_select %p664, %s35, 1
          %s666 = smul.addr %s665, 4
          %s667 = scalar_lea.vmem %s7, %s666
        $region48: #{tpu_custom_call.1} parent=23 // pred_fallthru
          _
        // Predicated region
        $region49: #{tpu_custom_call.1} parent=23 // pred_check
          %p668 = pneg %p267
        $region50: #{tpu_custom_call.1} parent=23 // pred_check_branch
          %670 = sbr.rel (%p668) target = $region52
        $region51: #{tpu_custom_call.1} parent=23 // pred_region
          %s671 = sand.u32 %s27, 1
          %s672 = scalar_lea.sflag [#allocation3], %s671
          %s673 = sand.u32 %s257, 1
          %s674 = smul.addr %s673, 256
          %s675 = scalar_lea.vmem [#allocation10], %s674
          %s677 = ssub.s32 4096, 4096
          %678 = vsyncadd %s672, %s677
          %s679 = smul.addr %s35, 64
          %s680 = smul.addr %s679, 64
          %s681 = scalar_lea.hbm %s8, %s680
          %s682 = sshll.u32 %s675, 4
          %s683 = int_to_ptr.vmem [resolvable:$true] %s682
          %688 = dma.hbm_to_vmem [thread:$0]  %s681, 4096, %s683, %s672, 64, 64, 4
        $region52: #{tpu_custom_call.1} parent=23 // pred_fallthru
          _
        // Predicated region
        $region53: #{tpu_custom_call.1} parent=23 // pred_check
          %p689 = pneg %p293
        $region54: #{tpu_custom_call.1} parent=23 // pred_check_branch
          %691 = sbr.rel (%p689) target = $region56
        $region55: #{tpu_custom_call.1} parent=23 // pred_region
          %p692 = scmp.lt.s32.totalorder %s35, 1
          %s693 = scalar_select %p692, %s35, 1
          %s694 = scalar_lea.vmem %s9, %s693
        $region56: #{tpu_custom_call.1} parent=23 // pred_fallthru
          _
        // Predicated region
        $region57: #{tpu_custom_call.1} parent=23 // pred_check
          %p695 = pneg %p319
        $region58: #{tpu_custom_call.1} parent=23 // pred_check_branch
          %697 = sbr.rel (%p695) target = $region60
        $region59: #{tpu_custom_call.1} parent=23 // pred_region
          %p698 = scmp.lt.s32.totalorder %s35, 1
          %s699 = scalar_select %p698, %s35, 1
          %s700 = scalar_lea.vmem %s10, %s699
        $region60: #{tpu_custom_call.1} parent=23 // pred_fallthru
          _
        // Predicated region
        $region61: #{tpu_custom_call.1} parent=23 // pred_check
          %p701 = pneg %p345
        $region62: #{tpu_custom_call.1} parent=23 // pred_check_branch
          %703 = sbr.rel (%p701) target = $region64
        $region63: #{tpu_custom_call.1} parent=23 // pred_region
          %p704 = scmp.lt.s32.totalorder %s35, 1
          %s705 = scalar_select %p704, %s35, 1
          %s706 = scalar_lea.vmem %s11, %s705
        $region64: #{tpu_custom_call.1} parent=23 // pred_fallthru
          _
        // Predicated region
        $region65: #{tpu_custom_call.1} parent=23 // pred_check
          %p707 = pneg %p371
        $region66: #{tpu_custom_call.1} parent=23 // pred_check_branch
          %709 = sbr.rel (%p707) target = $region68
        $region67: #{tpu_custom_call.1} parent=23 // pred_region
          %p710 = scmp.lt.s32.totalorder %s35, 1
          %s711 = scalar_select %p710, %s35, 1
          %s712 = scalar_lea.vmem %s12, %s711
        $region68: #{tpu_custom_call.1} parent=23 // pred_fallthru
          _
        // Predicated region
        $region69: #{tpu_custom_call.1} parent=23 // pred_check
          %p713 = pneg %p397
        $region70: #{tpu_custom_call.1} parent=23 // pred_check_branch
          %715 = sbr.rel (%p713) target = $region72
        $region71: #{tpu_custom_call.1} parent=23 // pred_region
          %p716 = scmp.lt.s32.totalorder %s35, 1
          %s717 = scalar_select %p716, %s35, 1
          %s718 = scalar_lea.vmem %s13, %s717
        $region72: #{tpu_custom_call.1} parent=23 // pred_fallthru
          _
        // Predicated region
        $region73: #{tpu_custom_call.1} parent=23 // pred_check
          %p719 = pneg %p423
        $region74: #{tpu_custom_call.1} parent=23 // pred_check_branch
          %721 = sbr.rel (%p719) target = $region76
        $region75: #{tpu_custom_call.1} parent=23 // pred_region
          %p722 = scmp.lt.s32.totalorder %s35, 1
          %s723 = scalar_select %p722, %s35, 1
          %s724 = scalar_lea.vmem %s14, %s723
        $region76: #{tpu_custom_call.1} parent=23 // pred_fallthru
          _
        // Predicated region
        $region77: #{tpu_custom_call.1} parent=23 // pred_check
          %p725 = pneg %p449
        $region78: #{tpu_custom_call.1} parent=23 // pred_check_branch
          %727 = sbr.rel (%p725) target = $region80
        $region79: #{tpu_custom_call.1} parent=23 // pred_region
          %p728 = scmp.lt.s32.totalorder %s35, 1
          %s729 = scalar_select %p728, %s35, 1
          %s730 = scalar_lea.vmem %s15, %s729
        $region80: #{tpu_custom_call.1} parent=23 // pred_fallthru
          _
        // Predicated region
        $region81: #{tpu_custom_call.1} parent=23 // pred_check
          %p731 = pneg %p475
        $region82: #{tpu_custom_call.1} parent=23 // pred_check_branch
          %733 = sbr.rel (%p731) target = $region84
        $region83: #{tpu_custom_call.1} parent=23 // pred_region
          %p734 = scmp.lt.s32.totalorder %s35, 1
          %s735 = scalar_select %p734, %s35, 1
          %s736 = scalar_lea.vmem %s16, %s735
        $region84: #{tpu_custom_call.1} parent=23 // pred_fallthru
          _
        // Predicated region
        $region85: #{tpu_custom_call.1} parent=23 // pred_check
          %p737 = pneg %p501
        $region86: #{tpu_custom_call.1} parent=23 // pred_check_branch
          %739 = sbr.rel (%p737) target = $region88
        $region87: #{tpu_custom_call.1} parent=23 // pred_region
          %p740 = scmp.lt.s32.totalorder %s35, 1
          %s741 = scalar_select %p740, %s35, 1
          %s742 = scalar_lea.vmem %s17, %s741
        $region88: #{tpu_custom_call.1} parent=23 // pred_fallthru
          _
      $region24: #{tpu_custom_call.1} parent=5 // pred_fallthru
        _
      %p743 = scmp.le.s32.totalorder 1, %s27
      %p744 = scmp.lt.s32.totalorder %s27, 3
      %p745 = pnand %p743, %p744
      %p746 = pneg %p745
      // Predicated region
      $region89: #{tpu_custom_call.1} parent=5 // pred_check
        _
      $region90: #{tpu_custom_call.1} parent=5 // pred_check_branch
        %748 = sbr.rel (%p745) target = $region92
      $region91: #{tpu_custom_call.1} parent=5 // pred_region
        %s749 = ssub.s32 %s27, 1
        // Predicated region
        $region93: #{tpu_custom_call.1} parent=91 // pred_check
          %p750 = pneg %p65
        $region94: #{tpu_custom_call.1} parent=91 // pred_check_branch
          %752 = sbr.rel (%p750) target = $region96
        $region95: #{tpu_custom_call.1} parent=91 // pred_region
          %753 = dma.done [#allocation3], 512
        $region96: #{tpu_custom_call.1} parent=91 // pred_fallthru
          _
        // Predicated region
        $region97: #{tpu_custom_call.1} parent=91 // pred_check
          %p754 = pneg %p91
        $region98: #{tpu_custom_call.1} parent=91 // pred_check_branch
          %756 = sbr.rel (%p754) target = $region100
        $region99: #{tpu_custom_call.1} parent=91 // pred_region
          %757 = dma.done [#allocation6], 32
        $region100: #{tpu_custom_call.1} parent=91 // pred_fallthru
          _
        %s758 = sand.u32 %s32, 1
        %s759 = scalar_lea.sflag [#allocation3], %s758
        %s760 = sand.u32 %s104, 1
        %s761 = smul.addr %s760, 192
        %s762 = scalar_lea.vmem [#allocation7], %s761
        // Predicated region
        $region101: #{tpu_custom_call.1} parent=91 // pred_check
          %p763 = pneg %p117
        $region102: #{tpu_custom_call.1} parent=91 // pred_check_branch
          %765 = sbr.rel (%p763) target = $region104
        $region103: #{tpu_custom_call.1} parent=91 // pred_region
          %766 = dma.done %s759, 3072
        $region104: #{tpu_custom_call.1} parent=91 // pred_fallthru
          _
        %s767 = sand.u32 %s32, 1
        %s768 = scalar_lea.sflag [#allocation3], %s767
        %s769 = sand.u32 %s156, 1
        %s770 = smul.addr %s769, 64
        %s771 = scalar_lea.vmem [#allocation8], %s770
        // Predicated region
        $region105: #{tpu_custom_call.1} parent=91 // pred_check
          %p772 = pneg %p169
        $region106: #{tpu_custom_call.1} parent=91 // pred_check_branch
          %774 = sbr.rel (%p772) target = $region108
        $region107: #{tpu_custom_call.1} parent=91 // pred_region
          %775 = dma.done %s768, 1024
        $region108: #{tpu_custom_call.1} parent=91 // pred_fallthru
          _
        %s776 = sand.u32 %s32, 1
        %s777 = scalar_lea.sflag [#allocation3], %s776
        %s778 = sand.u32 %s208, 1
        %s779 = smul.addr %s778, 256
        %s780 = scalar_lea.vmem [#allocation9], %s779
        // Predicated region
        $region109: #{tpu_custom_call.1} parent=91 // pred_check
          %p781 = pneg %p221
        $region110: #{tpu_custom_call.1} parent=91 // pred_check_branch
          %783 = sbr.rel (%p781) target = $region112
        $region111: #{tpu_custom_call.1} parent=91 // pred_region
          %784 = dma.done %s777, 4096
        $region112: #{tpu_custom_call.1} parent=91 // pred_fallthru
          _
        %s785 = sand.u32 %s32, 1
        %s786 = scalar_lea.sflag [#allocation3], %s785
        %s787 = sand.u32 %s260, 1
        %s788 = smul.addr %s787, 256
        %s789 = scalar_lea.vmem [#allocation10], %s788
        // Predicated region
        $region113: #{tpu_custom_call.1} parent=91 // pred_check
          %p790 = pneg %p273
        $region114: #{tpu_custom_call.1} parent=91 // pred_check_branch
          %792 = sbr.rel (%p790) target = $region116
        $region115: #{tpu_custom_call.1} parent=91 // pred_region
          %793 = dma.done %s786, 4096
        $region116: #{tpu_custom_call.1} parent=91 // pred_fallthru
          _
        %p794 = pneg %p65
        %p795 = pneg %p62
        %p796 = pneg %p91
        %p797 = pneg %p88
        %s798 = sand.u32 %s32, 1
        %s799 = scalar_lea.sflag [#allocation3], %s798
        %s800 = sand.u32 %s104, 1
        %s801 = smul.addr %s800, 192
        %s802 = scalar_lea.vmem [#allocation7], %s801
        %p803 = pneg %p117
        %p804 = pneg %p114
        %p805 = scmp.lt.s32.totalorder %s37, 1
        %s806 = scalar_select %p805, %s37, 1
        %s807 = smul.addr %s806, 3
        %s808 = scalar_lea.vmem %s3, %s807
        %p809 = pneg %p143
        %p810 = pneg %p140
        %s811 = sand.u32 %s32, 1
        %s812 = scalar_lea.sflag [#allocation3], %s811
        %s813 = sand.u32 %s156, 1
        %s814 = smul.addr %s813, 64
        %s815 = scalar_lea.vmem [#allocation8], %s814
        %p816 = pneg %p169
        %p817 = pneg %p166
        %p818 = scmp.lt.s32.totalorder %s37, 1
        %s819 = scalar_select %p818, %s37, 1
        %s820 = scalar_lea.vmem %s5, %s819
        %p821 = pneg %p195
        %p822 = pneg %p192
        %s823 = sand.u32 %s32, 1
        %s824 = scalar_lea.sflag [#allocation3], %s823
        %s825 = sand.u32 %s208, 1
        %s826 = smul.addr %s825, 256
        %s827 = scalar_lea.vmem [#allocation9], %s826
        %p828 = pneg %p221
        %p829 = pneg %p218
        %p830 = scmp.lt.s32.totalorder %s37, 1
        %s831 = scalar_select %p830, %s37, 1
        %s832 = smul.addr %s831, 4
        %s833 = scalar_lea.vmem %s7, %s832
        %p834 = pneg %p247
        %p835 = pneg %p244
        %s836 = sand.u32 %s32, 1
        %s837 = scalar_lea.sflag [#allocation3], %s836
        %s838 = sand.u32 %s260, 1
        %s839 = smul.addr %s838, 256
        %s840 = scalar_lea.vmem [#allocation10], %s839
        %p841 = pneg %p273
        %p842 = pneg %p270
        %p843 = scmp.lt.s32.totalorder %s37, 1
        %s844 = scalar_select %p843, %s37, 1
        %s845 = scalar_lea.vmem %s9, %s844
        %p846 = pneg %p299
        %p847 = pneg %p296
        %p848 = scmp.lt.s32.totalorder %s37, 1
        %s849 = scalar_select %p848, %s37, 1
        %s850 = scalar_lea.vmem %s10, %s849
        %p851 = pneg %p325
        %p852 = pneg %p322
        %p853 = scmp.lt.s32.totalorder %s37, 1
        %s854 = scalar_select %p853, %s37, 1
        %s855 = scalar_lea.vmem %s11, %s854
        %p856 = pneg %p351
        %p857 = pneg %p348
        %p858 = scmp.lt.s32.totalorder %s37, 1
        %s859 = scalar_select %p858, %s37, 1
        %s860 = scalar_lea.vmem %s12, %s859
        %p861 = pneg %p377
        %p862 = pneg %p374
        %p863 = scmp.lt.s32.totalorder %s37, 1
        %s864 = scalar_select %p863, %s37, 1
        %s865 = scalar_lea.vmem %s13, %s864
        %p866 = pneg %p403
        %p867 = pneg %p400
        %p868 = scmp.lt.s32.totalorder %s37, 1
        %s869 = scalar_select %p868, %s37, 1
        %s870 = scalar_lea.vmem %s14, %s869
        %p871 = pneg %p429
        %p872 = pneg %p426
        %p873 = scmp.lt.s32.totalorder %s37, 1
        %s874 = scalar_select %p873, %s37, 1
        %s875 = scalar_lea.vmem %s15, %s874
        %p876 = pneg %p455
        %p877 = pneg %p452
        %p878 = scmp.lt.s32.totalorder %s37, 1
        %s879 = scalar_select %p878, %s37, 1
        %s880 = scalar_lea.vmem %s16, %s879
        %p881 = pneg %p481
        %p882 = pneg %p478
        %p883 = scmp.lt.s32.totalorder %s37, 1
        %s884 = scalar_select %p883, %s37, 1
        %s885 = scalar_lea.vmem %s17, %s884
        %p886 = pneg %p507
        %p887 = pneg %p504
        %p888 = pneg %p533
        %p889 = pneg %p530
        %s890 = smul.u32 2, %s36
        %s891 = smul.u32 2, %s36
        %p892 = scmp.lt.s32.totalorder %s37, 1
        %s893 = scalar_select %p892, %s37, 1
        %s894 = smul.addr %s893, 3
        %s895 = scalar_lea.vmem %s3, %s894
        %p896 = scmp.lt.s32.totalorder %s37, 1
        %s897 = scalar_select %p896, %s37, 1
        %s898 = scalar_lea.vmem %s5, %s897
        %p899 = scmp.lt.s32.totalorder %s37, 1
        %s900 = scalar_select %p899, %s37, 1
        %s901 = smul.addr %s900, 4
        %s902 = scalar_lea.vmem %s7, %s901
        %p903 = scmp.lt.s32.totalorder %s37, 1
        %s904 = scalar_select %p903, %s37, 1
        %s905 = scalar_lea.vmem %s9, %s904
        %p906 = scmp.lt.s32.totalorder %s37, 1
        %s907 = scalar_select %p906, %s37, 1
        %s908 = scalar_lea.vmem %s10, %s907
        %p909 = scmp.lt.s32.totalorder %s37, 1
        %s910 = scalar_select %p909, %s37, 1
        %s911 = scalar_lea.vmem %s11, %s910
        %p912 = scmp.lt.s32.totalorder %s37, 1
        %s913 = scalar_select %p912, %s37, 1
        %s914 = scalar_lea.vmem %s12, %s913
        %p915 = scmp.lt.s32.totalorder %s37, 1
        %s916 = scalar_select %p915, %s37, 1
        %s917 = scalar_lea.vmem %s13, %s916
        %p918 = scmp.lt.s32.totalorder %s37, 1
        %s919 = scalar_select %p918, %s37, 1
        %s920 = scalar_lea.vmem %s14, %s919
        %p921 = scmp.lt.s32.totalorder %s37, 1
        %s922 = scalar_select %p921, %s37, 1
        %s923 = scalar_lea.vmem %s15, %s922
        %p924 = scmp.lt.s32.totalorder %s37, 1
        %s925 = scalar_select %p924, %s37, 1
        %s926 = scalar_lea.vmem %s16, %s925
        %p927 = scmp.lt.s32.totalorder %s37, 1
        %s928 = scalar_select %p927, %s37, 1
        %s929 = scalar_lea.vmem %s17, %s928
        %s930 = smul.u32 2, %s36
        %p932 = scmp.eq.s32.totalorder %s37, 0
        // Predicated region
        $region117: #{tpu_custom_call.1} parent=91 // pred_check
          %p933 = pneg %p932
        $region118: #{tpu_custom_call.1} parent=91 // pred_check_branch
          %935 = sbr.rel (%p933) target = $region120
        $region119: #{tpu_custom_call.1} parent=91 // pred_region
          %v936 = vld [vmem:[#allocation2] sm:$0xff]
          %v937 = vld [vmem:[#allocation2 + $0x8] sm:$0xff]
          %v938 = vld [vmem:[#allocation2 + $0x10] sm:$0xff]
          %v939 = vld [vmem:[#allocation2 + $0x18] sm:$0xff]
          %940 = vst [vmem:[#allocation11] sm:$0xff] %v936
          %941 = vst [vmem:[#allocation11 + $0x8] sm:$0xff] %v937
          %942 = vst [vmem:[#allocation11 + $0x10] sm:$0xff] %v938
          %943 = vst [vmem:[#allocation11 + $0x18] sm:$0xff] %v939
        $region120: #{tpu_custom_call.1} parent=91 // pred_fallthru
          _
        %v944 = vld [vmem:[#allocation11] sm:$0xff]
        %v945 = vld [vmem:[#allocation11 + $0x8] sm:$0xff]
        %v946 = vld [vmem:[#allocation11 + $0x10] sm:$0xff]
        %v947 = vld [vmem:[#allocation11 + $0x18] sm:$0xff]
        %v948 = vld [vmem:[#allocation5] sm:$0x1]
        %v949 = vld [vmem:[#allocation5 + $0x1] sm:$0x1]
        %v950 = vpack.c.bf16 %v945, %v944
        %v951 = vpack.c.bf16 %v947, %v946
        %v952 = vld [vmem:[%s762] sm:$0xff]
        %v953 = vld [vmem:[%s762 + $0x8] sm:$0xf]
        %v954 = vld [vmem:[%s762 + $0xc] sm:$0xff]
        %v955 = vld [vmem:[%s762 + $0x14] sm:$0xf]
        %v956 = vld [vmem:[%s762 + $0x18] sm:$0xff]
        %v957 = vld [vmem:[%s762 + $0x20] sm:$0xf]
        %v958 = vld [vmem:[%s762 + $0x24] sm:$0xff]
        %v959 = vld [vmem:[%s762 + $0x2c] sm:$0xf]
        %v960 = vld [vmem:[%s762 + $0x30] sm:$0xff]
        %v961 = vld [vmem:[%s762 + $0x38] sm:$0xf]
        %v962 = vld [vmem:[%s762 + $0x3c] sm:$0xff]
        %v963 = vld [vmem:[%s762 + $0x44] sm:$0xf]
        %v964 = vld [vmem:[%s762 + $0x48] sm:$0xff]
        %v965 = vld [vmem:[%s762 + $0x50] sm:$0xf]
        %v966 = vld [vmem:[%s762 + $0x54] sm:$0xff]
        %v967 = vld [vmem:[%s762 + $0x5c] sm:$0xf]
        %v968 = vld [vmem:[%s762 + $0x60] sm:$0xff]
        %v969 = vld [vmem:[%s762 + $0x68] sm:$0xf]
        %v970 = vld [vmem:[%s762 + $0x6c] sm:$0xff]
        %v971 = vld [vmem:[%s762 + $0x74] sm:$0xf]
        %v972 = vld [vmem:[%s762 + $0x78] sm:$0xff]
        %v973 = vld [vmem:[%s762 + $0x80] sm:$0xf]
        %v974 = vld [vmem:[%s762 + $0x84] sm:$0xff]
        %v975 = vld [vmem:[%s762 + $0x8c] sm:$0xf]
        %v976 = vld [vmem:[%s762 + $0x90] sm:$0xff]
        %v977 = vld [vmem:[%s762 + $0x98] sm:$0xf]
        %v978 = vld [vmem:[%s762 + $0x9c] sm:$0xff]
        %v979 = vld [vmem:[%s762 + $0xa4] sm:$0xf]
        %v980 = vld [vmem:[%s762 + $0xa8] sm:$0xff]
        %v981 = vld [vmem:[%s762 + $0xb0] sm:$0xf]
        %v982 = vld [vmem:[%s762 + $0xb4] sm:$0xff]
        %v983 = vld [vmem:[%s762 + $0xbc] sm:$0xf]
        %v984 = vld [vmem:[%s895] sm:$0x7]
        %v986 = vlaneseq
        %v987 = vshrl.u32 %v986, 7
        %v988 = vsub.s32 0, %v987
        %v989 = vrot.slane %v984, %v988
        %v990 = vlaneseq
        %v991 = vshrl.u32 %v990, 7
        %v992 = vsub.s32 1, %v991
        %v993 = vrot.slane %v984, %v992
        %v994 = vlaneseq
        %v995 = vshrl.u32 %v994, 7
        %v996 = vsub.s32 2, %v995
        %v997 = vrot.slane %v984, %v996
        %v1033 = vunpack.c.l.b16 %v952
        %v1034 = vunpack.c.h.b16 %v952
        %v1035 = vunpack.c.l.b16 %v953
        %v1036 = vunpack.c.l.b16 %v954
        %v1037 = vunpack.c.h.b16 %v954
        %v1038 = vunpack.c.l.b16 %v955
        %v1039 = vunpack.c.l.b16 %v956
        %v1040 = vunpack.c.h.b16 %v956
        %v1041 = vunpack.c.l.b16 %v957
        %v1042 = vunpack.c.l.b16 %v958
        %v1043 = vunpack.c.h.b16 %v958
        %v1044 = vunpack.c.l.b16 %v959
        %v1045 = vunpack.c.l.b16 %v960
        %v1046 = vunpack.c.h.b16 %v960
        %v1047 = vunpack.c.l.b16 %v961
        %v1048 = vunpack.c.l.b16 %v962
        %v1049 = vunpack.c.h.b16 %v962
        %v1050 = vunpack.c.l.b16 %v963
        %v1051 = vunpack.c.l.b16 %v964
        %v1052 = vunpack.c.h.b16 %v964
        %v1053 = vunpack.c.l.b16 %v965
        %v1054 = vunpack.c.l.b16 %v966
        %v1055 = vunpack.c.h.b16 %v966
        %v1056 = vunpack.c.l.b16 %v967
        %v1057 = vunpack.c.l.b16 %v968
        %v1058 = vunpack.c.h.b16 %v968
        %v1059 = vunpack.c.l.b16 %v969
        %v1060 = vunpack.c.l.b16 %v970
        %v1061 = vunpack.c.h.b16 %v970
        %v1062 = vunpack.c.l.b16 %v971
        %v1063 = vunpack.c.l.b16 %v972
        %v1064 = vunpack.c.h.b16 %v972
        %v1065 = vunpack.c.l.b16 %v973
        %v1066 = vunpack.c.l.b16 %v974
        %v1067 = vunpack.c.h.b16 %v974
        %v1068 = vunpack.c.l.b16 %v975
        %v1069 = vunpack.c.l.b16 %v976
        %v1070 = vunpack.c.h.b16 %v976
        %v1071 = vunpack.c.l.b16 %v977
        %v1072 = vunpack.c.l.b16 %v978
        %v1073 = vunpack.c.h.b16 %v978
        %v1074 = vunpack.c.l.b16 %v979
        %v1075 = vunpack.c.l.b16 %v980
        %v1076 = vunpack.c.h.b16 %v980
        %v1077 = vunpack.c.l.b16 %v981
        %v1078 = vunpack.c.l.b16 %v982
        %v1079 = vunpack.c.h.b16 %v982
        %v1080 = vunpack.c.l.b16 %v983
        %v1081 = vpack.c.b16 %v1036, %v1033
        %v1082 = vpack.c.b16 %v1037, %v1034
        %v1083 = vpack.c.b16 %v1038, %v1035
        %v1084 = vpack.c.b16 %v1042, %v1039
        %v1085 = vpack.c.b16 %v1043, %v1040
        %v1086 = vpack.c.b16 %v1044, %v1041
        %v1087 = vpack.c.b16 %v1048, %v1045
        %v1088 = vpack.c.b16 %v1049, %v1046
        %v1089 = vpack.c.b16 %v1050, %v1047
        %v1090 = vpack.c.b16 %v1054, %v1051
        %v1091 = vpack.c.b16 %v1055, %v1052
        %v1092 = vpack.c.b16 %v1056, %v1053
        %v1093 = vpack.c.b16 %v1060, %v1057
        %v1094 = vpack.c.b16 %v1061, %v1058
        %v1095 = vpack.c.b16 %v1062, %v1059
        %v1096 = vpack.c.b16 %v1066, %v1063
        %v1097 = vpack.c.b16 %v1067, %v1064
        %v1098 = vpack.c.b16 %v1068, %v1065
        %v1099 = vpack.c.b16 %v1072, %v1069
        %v1100 = vpack.c.b16 %v1073, %v1070
        %v1101 = vpack.c.b16 %v1074, %v1071
        %v1102 = vpack.c.b16 %v1078, %v1075
        %v1103 = vpack.c.b16 %v1079, %v1076
        %v1104 = vpack.c.b16 %v1080, %v1077
        %1129 = vmatprep.subr.bf16.mxu0 %v1082
        %1130 = vmatpush1.bf16.msra.mxu0 %v1081
        %1131 = vmatprep.subr.bf16.mxu0 %v1085
        %1132 = vmatpush1.bf16.msra.mxu0 %v1084
        %1133 = vmatprep.subr.bf16.mxu0 %v1088
        %1134 = vmatpush1.bf16.msra.mxu0 %v1087
        %1135 = vmatprep.subr.bf16.mxu0 %v1091
        %1136 = vmatpush1.bf16.msra.mxu0 %v1090
        %1137 = vmatprep.subr.bf16.mxu0 %v1094
        %1138 = vmatpush1.bf16.msra.mxu0 %v1093
        %1139 = vmatprep.subr.bf16.mxu0 %v1097
        %1140 = vmatpush1.bf16.msra.mxu0 %v1096
        %1141 = vmatprep.subr.bf16.mxu0 %v1100
        %1142 = vmatpush1.bf16.msra.mxu0 %v1099
        %1143 = vmatprep.subr.bf16.mxu0 %v1103
        %1144 = vmatpush1.bf16.msra.mxu0 %v1102
        %1145 = vmatprep.subr.bf16.mxu0 0
        %1146 = vmatpush1.bf16.msra.mxu0 0
        %1147 = vmatprep.subr.bf16.mxu0 0
        %1148 = vmatpush1.bf16.msra.mxu0 0
        %1149 = vmatprep.subr.bf16.mxu0 0
        %1150 = vmatpush1.bf16.msra.mxu0 0
        %1151 = vmatprep.subr.bf16.mxu0 0
        %1152 = vmatpush1.bf16.msra.mxu0 0
        %1153 = vmatprep.subr.bf16.mxu0 0
        %1154 = vmatpush1.bf16.msra.mxu0 0
        %1155 = vmatprep.subr.bf16.mxu0 0
        %1156 = vmatpush1.bf16.msra.mxu0 0
        %1157 = vmatprep.subr.bf16.mxu0 0
        %1158 = vmatpush1.bf16.msra.mxu0 0
        %1159 = vmatprep.subr.bf16.mxu0 0
        %1160 = vmatpush1.bf16.msra.mxu0 0
        %1161 = vmatprep.mubr.bf16.mxu0 0
        %1162 = vmatmul.mubr.bf16.gmra.mrb[0].mxu0 %v950
        %v1163 = vpop.f32.mrb[0].mxu0
        %v1164 = vadd.f32 %v989, %v1163
        %v1165 = vpop.f32.mrb[0].mxu0
        %v1166 = vadd.f32 %v993, %v1165
        %v1167 = vpop.f32.mrb[0].mxu0
        %v1168 = vadd.f32 %v989, %v1167
        %v1169 = vpop.f32.mrb[0].mxu0
        %v1170 = vadd.f32 %v993, %v1169
        %1171 = vmatprep.mubr.bf16.mxu0 0
        %1172 = vmatmul.mubr.bf16.gmra.mrb[0].mxu0 %v951
        %v1173 = vpop.f32.mrb[0].mxu0
        %v1174 = vadd.f32 %v989, %v1173
        %v1175 = vpop.f32.mrb[0].mxu0
        %v1176 = vadd.f32 %v993, %v1175
        %v1177 = vpop.f32.mrb[0].mxu0
        %v1178 = vadd.f32 %v989, %v1177
        %v1179 = vpop.f32.mrb[0].mxu0
        %v1180 = vadd.f32 %v993, %v1179
        %1181 = vdwg.mxu0
        %1182 = vmatprep.subr.bf16.mxu0 0
        %1183 = vmatpush1.bf16.msra.mxu0 %v1083
        %1184 = vmatprep.subr.bf16.mxu0 0
        %1185 = vmatpush1.bf16.msra.mxu0 %v1086
        %1186 = vmatprep.subr.bf16.mxu0 0
        %1187 = vmatpush1.bf16.msra.mxu0 %v1089
        %1188 = vmatprep.subr.bf16.mxu0 0
        %1189 = vmatpush1.bf16.msra.mxu0 %v1092
        %1190 = vmatprep.subr.bf16.mxu0 0
        %1191 = vmatpush1.bf16.msra.mxu0 %v1095
        %1192 = vmatprep.subr.bf16.mxu0 0
        %1193 = vmatpush1.bf16.msra.mxu0 %v1098
        %1194 = vmatprep.subr.bf16.mxu0 0
        %1195 = vmatpush1.bf16.msra.mxu0 %v1101
        %1196 = vmatprep.subr.bf16.mxu0 0
        %1197 = vmatpush1.bf16.msra.mxu0 %v1104
        %1198 = vmatprep.subr.bf16.mxu0 0
        %1199 = vmatpush1.bf16.msra.mxu0 0
        %1200 = vmatprep.subr.bf16.mxu0 0
        %1201 = vmatpush1.bf16.msra.mxu0 0
        %1202 = vmatprep.subr.bf16.mxu0 0
        %1203 = vmatpush1.bf16.msra.mxu0 0
        %1204 = vmatprep.subr.bf16.mxu0 0
        %1205 = vmatpush1.bf16.msra.mxu0 0
        %1206 = vmatprep.subr.bf16.mxu0 0
        %1207 = vmatpush1.bf16.msra.mxu0 0
        %1208 = vmatprep.subr.bf16.mxu0 0
        %1209 = vmatpush1.bf16.msra.mxu0 0
        %1210 = vmatprep.subr.bf16.mxu0 0
        %1211 = vmatpush1.bf16.msra.mxu0 0
        %1212 = vmatprep.subr.bf16.mxu0 0
        %1213 = vmatpush1.bf16.msra.mxu0 0
        %1214 = vmatprep.mubr.bf16.mxu0 0
        %1215 = vmatmul.mubr.bf16.gmra.mrb[0].mxu0 %v950
        %v1216 = vpop.f32.mrb[0].mxu0
        %v1217 = vadd.f32 %v997, %v1216
        %v1218 = vpop.f32.mrb[0].mxu0
        %v1219 = vpop.f32.mrb[0].mxu0
        %v1220 = vadd.f32 %v997, %v1219
        %v1221 = vpop.f32.mrb[0].mxu0
        %1222 = vmatprep.mubr.bf16.mxu0 0
        %1223 = vmatmul.mubr.bf16.gmra.mrb[0].mxu0 %v951
        %v1224 = vpop.f32.mrb[0].mxu0
        %v1225 = vadd.f32 %v997, %v1224
        %v1226 = vpop.f32.mrb[0].mxu0
        %v1227 = vpop.f32.mrb[0].mxu0
        %v1228 = vadd.f32 %v997, %v1227
        %v1229 = vpop.f32.mrb[0].mxu0
        %1230 = vdwg.mxu0
        %v1231 = vld [vmem:[%s771] sm:$0xf]
        %v1232 = vld [vmem:[%s771 + $0x4] sm:$0xf]
        %v1233 = vld [vmem:[%s771 + $0x8] sm:$0xf]
        %v1234 = vld [vmem:[%s771 + $0xc] sm:$0xf]
        %v1235 = vld [vmem:[%s771 + $0x10] sm:$0xf]
        %v1236 = vld [vmem:[%s771 + $0x14] sm:$0xf]
        %v1237 = vld [vmem:[%s771 + $0x18] sm:$0xf]
        %v1238 = vld [vmem:[%s771 + $0x1c] sm:$0xf]
        %v1239 = vld [vmem:[%s771 + $0x20] sm:$0xf]
        %v1240 = vld [vmem:[%s771 + $0x24] sm:$0xf]
        %v1241 = vld [vmem:[%s771 + $0x28] sm:$0xf]
        %v1242 = vld [vmem:[%s771 + $0x2c] sm:$0xf]
        %v1243 = vld [vmem:[%s771 + $0x30] sm:$0xf]
        %v1244 = vld [vmem:[%s771 + $0x34] sm:$0xf]
        %v1245 = vld [vmem:[%s771 + $0x38] sm:$0xf]
        %v1246 = vld [vmem:[%s771 + $0x3c] sm:$0xf]
        %v1247 = vpack.c.bf16 %v1168, %v1164
        %v1248 = vpack.c.bf16 %v1170, %v1166
        %v1249 = vpack.c.bf16 %v1220, %v1217
        %vm1250 = vcmask 523264
        %v1252 = vsel %vm1250, %v1247, 0
        %v1255 = vsel %vm1250, %v1248, 0
        %1257 = vmatprep.subr.bf16.mxu0 0
        %1258 = vmatpush1.bf16.xpose.msra.mxu0 %v1255
        %1259 = vmatprep.subr.bf16.mxu0 0
        %1260 = vmatpush1.bf16.xpose.msra.mxu0 0
        %1261 = vmatprep.subr.bf16.mxu0 0
        %1262 = vmatpush1.bf16.xpose.msra.mxu0 0
        %1263 = vmatprep.subr.bf16.mxu0 0
        %1264 = vmatpush1.bf16.xpose.msra.mxu0 0
        %1265 = vmatprep.subr.bf16.mxu0 0
        %1266 = vmatpush1.bf16.xpose.msra.mxu0 0
        %1267 = vmatprep.subr.bf16.mxu0 0
        %1268 = vmatpush1.bf16.xpose.msra.mxu0 0
        %1269 = vmatprep.subr.bf16.mxu0 0
        %1270 = vmatpush1.bf16.xpose.msra.mxu0 0
        %1271 = vmatprep.subr.bf16.mxu0 0
        %1272 = vmatpush1.bf16.xpose.msra.mxu0 0
        %1273 = vmatprep.subr.bf16.mxu0 0
        %1274 = vmatpush1.bf16.xpose.msra.mxu0 0
        %1275 = vmatprep.subr.bf16.mxu0 0
        %1276 = vmatpush1.bf16.xpose.msra.mxu0 0
        %1277 = vmatprep.subr.bf16.mxu0 0
        %1278 = vmatpush1.bf16.xpose.msra.mxu0 0
        %1279 = vmatprep.subr.bf16.mxu0 0
        %1280 = vmatpush1.bf16.xpose.msra.mxu0 0
        %1281 = vmatprep.subr.bf16.mxu0 0
        %1282 = vmatpush1.bf16.xpose.msra.mxu0 0
        %1283 = vmatprep.subr.bf16.mxu0 0
        %1284 = vmatpush1.bf16.xpose.msra.mxu0 0
        %1285 = vmatprep.subr.bf16.mxu0 0
        %1286 = vmatpush1.bf16.xpose.msra.mxu0 0
        %1287 = vmatprep.subr.bf16.mxu0 0
        %1288 = vmatpush1.bf16.xpose.msra.mxu0 0
        %1289 = vmatprep.mubr.bf16.mxu0 0
        %1290 = vmatmul.mubr.bf16.gmra.mrb[0].mxu0 %v1252
        %v1291 = vpop.f32.mrb[0].mxu0
        %v1292 = vadd.f32 0.0, %v1291
        %v1293 = vpop.f32.mrb[0].mxu0
        %v1294 = vpop.f32.mrb[0].mxu0
        %v1295 = vadd.f32 0.0, %v1294
        %v1296 = vpop.f32.mrb[0].mxu0
        %1297 = vdwg.mxu0
        %v1298 = vmul.f32 %v1292, 0.125
        %v1299 = vmul.f32 %v1295, 0.125
        %v1301 = vlaneseq
        %v1302 = vshrl.u32 %v1301, 7
        %v1303 = vsub.s32 0, %v1302
        %v1304 = vrot.slane %v948, %v1303
        %v1306 = vadd.f32 %v1298, %v1304
        %v1307 = vadd.f32 %v1299, %v1304
        %vm1308 = vcmask 130048
        %v1309 = vsel %vm1308, %v1306, -inf
        %1310 = vmax.xlane.f32.xlu0 %v1309
        %v1311 = vpop.xlane.xlu0 %1310
        %v1312 = vsel %vm1308, %v1307, -inf
        %1313 = vmax.xlane.f32.xlu0 %v1312
        %v1314 = vpop.xlane.xlu0 %1313
        %v1315 = vsub.f32 %v1306, %v1311
        %v1316 = vsub.f32 %v1307, %v1314
        %v1317 = vmul.f32 %v1315, 1.442695
        %v1318 = vpow.pop %v1317
        %v1319 = vmul.f32 %v1316, 1.442695
        %v1320 = vpow.pop %v1319
        %v1321 = vsel %vm1308, %v1318, 0.0
        %1322 = vadd.xlane.f32.xlu0 %v1321
        %v1323 = vpop.xlane.xlu0 %1322
        %v1324 = vsel %vm1308, %v1320, 0.0
        %1325 = vadd.xlane.f32.xlu0 %v1324
        %v1326 = vpop.xlane.xlu0 %1325
        %v1327 = vrcp.pop %v1323
        %v1328 = vrcp.pop %v1326
        %v1329 = vmul.f32 %v1318, %v1327
        %v1330 = vmul.f32 %v1320, %v1328
        %v1331 = vpack.c.bf16 %v1330, %v1329
        %v1333 = vsel %vm1308, %v1331, 0
        %1335 = vmatprep.subr.bf16.mxu0 0
        %1336 = vmatpush1.bf16.msra.mxu0 %v1249
        %1337 = vmatprep.subr.bf16.mxu0 0
        %1338 = vmatpush1.bf16.msra.mxu0 0
        %1339 = vmatprep.subr.bf16.mxu0 0
        %1340 = vmatpush1.bf16.msra.mxu0 0
        %1341 = vmatprep.subr.bf16.mxu0 0
        %1342 = vmatpush1.bf16.msra.mxu0 0
        %1343 = vmatprep.subr.bf16.mxu0 0
        %1344 = vmatpush1.bf16.msra.mxu0 0
        %1345 = vmatprep.subr.bf16.mxu0 0
        %1346 = vmatpush1.bf16.msra.mxu0 0
        %1347 = vmatprep.subr.bf16.mxu0 0
        %1348 = vmatpush1.bf16.msra.mxu0 0
        %1349 = vmatprep.subr.bf16.mxu0 0
        %1350 = vmatpush1.bf16.msra.mxu0 0
        %1351 = vmatprep.subr.bf16.mxu0 0
        %1352 = vmatpush1.bf16.msra.mxu0 0
        %1353 = vmatprep.subr.bf16.mxu0 0
        %1354 = vmatpush1.bf16.msra.mxu0 0
        %1355 = vmatprep.subr.bf16.mxu0 0
        %1356 = vmatpush1.bf16.msra.mxu0 0
        %1357 = vmatprep.subr.bf16.mxu0 0
        %1358 = vmatpush1.bf16.msra.mxu0 0
        %1359 = vmatprep.subr.bf16.mxu0 0
        %1360 = vmatpush1.bf16.msra.mxu0 0
        %1361 = vmatprep.subr.bf16.mxu0 0
        %1362 = vmatpush1.bf16.msra.mxu0 0
        %1363 = vmatprep.subr.bf16.mxu0 0
        %1364 = vmatpush1.bf16.msra.mxu0 0
        %1365 = vmatprep.subr.bf16.mxu0 0
        %1366 = vmatpush1.bf16.msra.mxu0 0
        %1367 = vmatprep.mubr.bf16.mxu0 0
        %1368 = vmatmul.mubr.bf16.gmra.mrb[0].mxu0 %v1333
        %v1369 = vpop.f32.mrb[0].mxu0
        %v1370 = vadd.f32 0.0, %v1369
        %v1371 = vpop.f32.mrb[0].mxu0
        %v1372 = vpop.f32.mrb[0].mxu0
        %v1373 = vadd.f32 0.0, %v1372
        %v1374 = vpop.f32.mrb[0].mxu0
        %1375 = vdwg.mxu0
        %v1376 = vpack.c.bf16 %v1373, %v1370
        %1378 = vrot.lane.b32.xlu0 %v1247, 64
        %v1379 = vpop.permute.xlu0 %1378
        %1381 = vrot.lane.b32.xlu0 %v1248, 64
        %v1382 = vpop.permute.xlu0 %1381
        %v1384 = vsel %vm1250, %v1379, 0
        %v1387 = vsel %vm1250, %v1382, 0
        %1389 = vmatprep.subr.bf16.mxu0 0
        %1390 = vmatpush1.bf16.xpose.msra.mxu0 %v1387
        %1391 = vmatprep.subr.bf16.mxu0 0
        %1392 = vmatpush1.bf16.xpose.msra.mxu0 0
        %1393 = vmatprep.subr.bf16.mxu0 0
        %1394 = vmatpush1.bf16.xpose.msra.mxu0 0
        %1395 = vmatprep.subr.bf16.mxu0 0
        %1396 = vmatpush1.bf16.xpose.msra.mxu0 0
        %1397 = vmatprep.subr.bf16.mxu0 0
        %1398 = vmatpush1.bf16.xpose.msra.mxu0 0
        %1399 = vmatprep.subr.bf16.mxu0 0
        %1400 = vmatpush1.bf16.xpose.msra.mxu0 0
        %1401 = vmatprep.subr.bf16.mxu0 0
        %1402 = vmatpush1.bf16.xpose.msra.mxu0 0
        %1403 = vmatprep.subr.bf16.mxu0 0
        %1404 = vmatpush1.bf16.xpose.msra.mxu0 0
        %1405 = vmatprep.subr.bf16.mxu0 0
        %1406 = vmatpush1.bf16.xpose.msra.mxu0 0
        %1407 = vmatprep.subr.bf16.mxu0 0
        %1408 = vmatpush1.bf16.xpose.msra.mxu0 0
        %1409 = vmatprep.subr.bf16.mxu0 0
        %1410 = vmatpush1.bf16.xpose.msra.mxu0 0
        %1411 = vmatprep.subr.bf16.mxu0 0
        %1412 = vmatpush1.bf16.xpose.msra.mxu0 0
        %1413 = vmatprep.subr.bf16.mxu0 0
        %1414 = vmatpush1.bf16.xpose.msra.mxu0 0
        %1415 = vmatprep.subr.bf16.mxu0 0
        %1416 = vmatpush1.bf16.xpose.msra.mxu0 0
        %1417 = vmatprep.subr.bf16.mxu0 0
        %1418 = vmatpush1.bf16.xpose.msra.mxu0 0
        %1419 = vmatprep.subr.bf16.mxu0 0
        %1420 = vmatpush1.bf16.xpose.msra.mxu0 0
        %1421 = vmatprep.mubr.bf16.mxu0 0
        %1422 = vmatmul.mubr.bf16.gmra.mrb[0].mxu0 %v1384
        %v1423 = vpop.f32.mrb[0].mxu0
        %v1424 = vadd.f32 0.0, %v1423
        %v1425 = vpop.f32.mrb[0].mxu0
        %v1426 = vpop.f32.mrb[0].mxu0
        %v1427 = vadd.f32 0.0, %v1426
        %v1428 = vpop.f32.mrb[0].mxu0
        %1429 = vdwg.mxu0
        %v1430 = vmul.f32 %v1424, 0.125
        %v1431 = vmul.f32 %v1427, 0.125
        %v1432 = vadd.f32 %v1430, %v1304
        %v1433 = vadd.f32 %v1431, %v1304
        %v1434 = vsel %vm1308, %v1432, -inf
        %1435 = vmax.xlane.f32.xlu0 %v1434
        %v1436 = vpop.xlane.xlu0 %1435
        %v1437 = vsel %vm1308, %v1433, -inf
        %1438 = vmax.xlane.f32.xlu0 %v1437
        %v1439 = vpop.xlane.xlu0 %1438
        %v1440 = vsub.f32 %v1432, %v1436
        %v1441 = vsub.f32 %v1433, %v1439
        %v1442 = vmul.f32 %v1440, 1.442695
        %v1443 = vpow.pop %v1442
        %v1444 = vmul.f32 %v1441, 1.442695
        %v1445 = vpow.pop %v1444
        %v1446 = vsel %vm1308, %v1443, 0.0
        %1447 = vadd.xlane.f32.xlu0 %v1446
        %v1448 = vpop.xlane.xlu0 %1447
        %v1449 = vsel %vm1308, %v1445, 0.0
        %1450 = vadd.xlane.f32.xlu0 %v1449
        %v1451 = vpop.xlane.xlu0 %1450
        %v1452 = vrcp.pop %v1448
        %v1453 = vrcp.pop %v1451
        %v1454 = vmul.f32 %v1443, %v1452
        %v1455 = vmul.f32 %v1445, %v1453
        %v1456 = vpack.c.bf16 %v1455, %v1454
        %1458 = vrot.lane.b32.xlu0 %v1249, 64
        %v1459 = vpop.permute.xlu0 %1458
        %v1462 = vsel %vm1308, %v1456, 0
        %1464 = vmatprep.subr.bf16.mxu0 0
        %1465 = vmatpush1.bf16.msra.mxu0 %v1459
        %1466 = vmatprep.subr.bf16.mxu0 0
        %1467 = vmatpush1.bf16.msra.mxu0 0
        %1468 = vmatprep.subr.bf16.mxu0 0
        %1469 = vmatpush1.bf16.msra.mxu0 0
        %1470 = vmatprep.subr.bf16.mxu0 0
        %1471 = vmatpush1.bf16.msra.mxu0 0
        %1472 = vmatprep.subr.bf16.mxu0 0
        %1473 = vmatpush1.bf16.msra.mxu0 0
        %1474 = vmatprep.subr.bf16.mxu0 0
        %1475 = vmatpush1.bf16.msra.mxu0 0
        %1476 = vmatprep.subr.bf16.mxu0 0
        %1477 = vmatpush1.bf16.msra.mxu0 0
        %1478 = vmatprep.subr.bf16.mxu0 0
        %1479 = vmatpush1.bf16.msra.mxu0 0
        %1480 = vmatprep.subr.bf16.mxu0 0
        %1481 = vmatpush1.bf16.msra.mxu0 0
        %1482 = vmatprep.subr.bf16.mxu0 0
        %1483 = vmatpush1.bf16.msra.mxu0 0
        %1484 = vmatprep.subr.bf16.mxu0 0
        %1485 = vmatpush1.bf16.msra.mxu0 0
        %1486 = vmatprep.subr.bf16.mxu0 0
        %1487 = vmatpush1.bf16.msra.mxu0 0
        %1488 = vmatprep.subr.bf16.mxu0 0
        %1489 = vmatpush1.bf16.msra.mxu0 0
        %1490 = vmatprep.subr.bf16.mxu0 0
        %1491 = vmatpush1.bf16.msra.mxu0 0
        %1492 = vmatprep.subr.bf16.mxu0 0
        %1493 = vmatpush1.bf16.msra.mxu0 0
        %1494 = vmatprep.subr.bf16.mxu0 0
        %1495 = vmatpush1.bf16.msra.mxu0 0
        %1496 = vmatprep.mubr.bf16.mxu0 0
        %1497 = vmatmul.mubr.bf16.gmra.mrb[0].mxu0 %v1462
        %v1498 = vpop.f32.mrb[0].mxu0
        %v1499 = vadd.f32 0.0, %v1498
        %v1500 = vpop.f32.mrb[0].mxu0
        %v1501 = vpop.f32.mrb[0].mxu0
        %v1502 = vadd.f32 0.0, %v1501
        %v1503 = vpop.f32.mrb[0].mxu0
        %1504 = vdwg.mxu0
        %v1505 = vpack.c.bf16 %v1502, %v1499
        %v1514 = vunpack.c.l.b16 %v1239
        %v1515 = vunpack.c.l.b16 %v1240
        %v1516 = vunpack.c.l.b16 %v1241
        %v1517 = vunpack.c.l.b16 %v1242
        %v1518 = vunpack.c.l.b16 %v1243
        %v1519 = vunpack.c.l.b16 %v1244
        %v1520 = vunpack.c.l.b16 %v1245
        %v1521 = vunpack.c.l.b16 %v1246
        %v1522 = vpack.c.b16 %v1515, %v1514
        %v1523 = vpack.c.b16 %v1517, %v1516
        %v1524 = vpack.c.b16 %v1519, %v1518
        %v1525 = vpack.c.b16 %v1521, %v1520
        %v1531 = vsel %vm1250, %v1505, 0
        %1533 = vmatprep.subr.bf16.mxu0 0
        %1534 = vmatpush1.bf16.msra.mxu0 %v1522
        %1535 = vmatprep.subr.bf16.mxu0 0
        %1536 = vmatpush1.bf16.msra.mxu0 %v1523
        %1537 = vmatprep.subr.bf16.mxu0 0
        %1538 = vmatpush1.bf16.msra.mxu0 %v1524
        %1539 = vmatprep.subr.bf16.mxu0 0
        %1540 = vmatpush1.bf16.msra.mxu0 %v1525
        %1541 = vmatprep.subr.bf16.mxu0 0
        %1542 = vmatpush1.bf16.msra.mxu0 0
        %1543 = vmatprep.subr.bf16.mxu0 0
        %1544 = vmatpush1.bf16.msra.mxu0 0
        %1545 = vmatprep.subr.bf16.mxu0 0
        %1546 = vmatpush1.bf16.msra.mxu0 0
        %1547 = vmatprep.subr.bf16.mxu0 0
        %1548 = vmatpush1.bf16.msra.mxu0 0
        %1549 = vmatprep.subr.bf16.mxu0 0
        %1550 = vmatpush1.bf16.msra.mxu0 0
        %1551 = vmatprep.subr.bf16.mxu0 0
        %1552 = vmatpush1.bf16.msra.mxu0 0
        %1553 = vmatprep.subr.bf16.mxu0 0
        %1554 = vmatpush1.bf16.msra.mxu0 0
        %1555 = vmatprep.subr.bf16.mxu0 0
        %1556 = vmatpush1.bf16.msra.mxu0 0
        %1557 = vmatprep.subr.bf16.mxu0 0
        %1558 = vmatpush1.bf16.msra.mxu0 0
        %1559 = vmatprep.subr.bf16.mxu0 0
        %1560 = vmatpush1.bf16.msra.mxu0 0
        %1561 = vmatprep.subr.bf16.mxu0 0
        %1562 = vmatpush1.bf16.msra.mxu0 0
        %1563 = vmatprep.subr.bf16.mxu0 0
        %1564 = vmatpush1.bf16.msra.mxu0 0
        %1565 = vmatprep.mubr.bf16.mxu0 0
        %1566 = vmatmul.mubr.bf16.gmra.mrb[0].mxu0 %v1531
        %v1567 = vpop.f32.mrb[0].mxu0
        %v1568 = vadd.f32 0.0, %v1567
        %v1569 = vpop.f32.mrb[0].mxu0
        %v1570 = vpop.f32.mrb[0].mxu0
        %v1571 = vadd.f32 0.0, %v1570
        %v1572 = vpop.f32.mrb[0].mxu0
        %1573 = vdwg.mxu0
        %v1582 = vunpack.c.l.b16 %v1231
        %v1583 = vunpack.c.l.b16 %v1232
        %v1584 = vunpack.c.l.b16 %v1233
        %v1585 = vunpack.c.l.b16 %v1234
        %v1586 = vunpack.c.l.b16 %v1235
        %v1587 = vunpack.c.l.b16 %v1236
        %v1588 = vunpack.c.l.b16 %v1237
        %v1589 = vunpack.c.l.b16 %v1238
        %v1590 = vpack.c.b16 %v1583, %v1582
        %v1591 = vpack.c.b16 %v1585, %v1584
        %v1592 = vpack.c.b16 %v1587, %v1586
        %v1593 = vpack.c.b16 %v1589, %v1588
        %v1599 = vsel %vm1250, %v1376, 0
        %1601 = vmatprep.subr.bf16.mxu0 0
        %1602 = vmatpush1.bf16.msra.mxu0 %v1590
        %1603 = vmatprep.subr.bf16.mxu0 0
        %1604 = vmatpush1.bf16.msra.mxu0 %v1591
        %1605 = vmatprep.subr.bf16.mxu0 0
        %1606 = vmatpush1.bf16.msra.mxu0 %v1592
        %1607 = vmatprep.subr.bf16.mxu0 0
        %1608 = vmatpush1.bf16.msra.mxu0 %v1593
        %1609 = vmatprep.subr.bf16.mxu0 0
        %1610 = vmatpush1.bf16.msra.mxu0 0
        %1611 = vmatprep.subr.bf16.mxu0 0
        %1612 = vmatpush1.bf16.msra.mxu0 0
        %1613 = vmatprep.subr.bf16.mxu0 0
        %1614 = vmatpush1.bf16.msra.mxu0 0
        %1615 = vmatprep.subr.bf16.mxu0 0
        %1616 = vmatpush1.bf16.msra.mxu0 0
        %1617 = vmatprep.subr.bf16.mxu0 0
        %1618 = vmatpush1.bf16.msra.mxu0 0
        %1619 = vmatprep.subr.bf16.mxu0 0
        %1620 = vmatpush1.bf16.msra.mxu0 0
        %1621 = vmatprep.subr.bf16.mxu0 0
        %1622 = vmatpush1.bf16.msra.mxu0 0
        %1623 = vmatprep.subr.bf16.mxu0 0
        %1624 = vmatpush1.bf16.msra.mxu0 0
        %1625 = vmatprep.subr.bf16.mxu0 0
        %1626 = vmatpush1.bf16.msra.mxu0 0
        %1627 = vmatprep.subr.bf16.mxu0 0
        %1628 = vmatpush1.bf16.msra.mxu0 0
        %1629 = vmatprep.subr.bf16.mxu0 0
        %1630 = vmatpush1.bf16.msra.mxu0 0
        %1631 = vmatprep.subr.bf16.mxu0 0
        %1632 = vmatpush1.bf16.msra.mxu0 0
        %1633 = vmatprep.mubr.bf16.mxu0 0
        %1634 = vmatmul.mubr.bf16.gmra.mrb[0].mxu0 %v1599
        %v1635 = vpop.f32.mrb[0].mxu0
        %v1636 = vadd.f32 %v1568, %v1635
        %v1637 = vpop.f32.mrb[0].mxu0
        %v1638 = vpop.f32.mrb[0].mxu0
        %v1639 = vadd.f32 %v1571, %v1638
        %v1640 = vpop.f32.mrb[0].mxu0
        %1641 = vdwg.mxu0
        %v1642 = vpack.c.bf16 %v1178, %v1174
        %v1643 = vpack.c.bf16 %v1180, %v1176
        %v1644 = vpack.c.bf16 %v1228, %v1225
        %v1646 = vsel %vm1250, %v1642, 0
        %v1649 = vsel %vm1250, %v1643, 0
        %1651 = vmatprep.subr.bf16.mxu0 0
        %1652 = vmatpush1.bf16.xpose.msra.mxu0 %v1649
        %1653 = vmatprep.subr.bf16.mxu0 0
        %1654 = vmatpush1.bf16.xpose.msra.mxu0 0
        %1655 = vmatprep.subr.bf16.mxu0 0
        %1656 = vmatpush1.bf16.xpose.msra.mxu0 0
        %1657 = vmatprep.subr.bf16.mxu0 0
        %1658 = vmatpush1.bf16.xpose.msra.mxu0 0
        %1659 = vmatprep.subr.bf16.mxu0 0
        %1660 = vmatpush1.bf16.xpose.msra.mxu0 0
        %1661 = vmatprep.subr.bf16.mxu0 0
        %1662 = vmatpush1.bf16.xpose.msra.mxu0 0
        %1663 = vmatprep.subr.bf16.mxu0 0
        %1664 = vmatpush1.bf16.xpose.msra.mxu0 0
        %1665 = vmatprep.subr.bf16.mxu0 0
        %1666 = vmatpush1.bf16.xpose.msra.mxu0 0
        %1667 = vmatprep.subr.bf16.mxu0 0
        %1668 = vmatpush1.bf16.xpose.msra.mxu0 0
        %1669 = vmatprep.subr.bf16.mxu0 0
        %1670 = vmatpush1.bf16.xpose.msra.mxu0 0
        %1671 = vmatprep.subr.bf16.mxu0 0
        %1672 = vmatpush1.bf16.xpose.msra.mxu0 0
        %1673 = vmatprep.subr.bf16.mxu0 0
        %1674 = vmatpush1.bf16.xpose.msra.mxu0 0
        %1675 = vmatprep.subr.bf16.mxu0 0
        %1676 = vmatpush1.bf16.xpose.msra.mxu0 0
        %1677 = vmatprep.subr.bf16.mxu0 0
        %1678 = vmatpush1.bf16.xpose.msra.mxu0 0
        %1679 = vmatprep.subr.bf16.mxu0 0
        %1680 = vmatpush1.bf16.xpose.msra.mxu0 0
        %1681 = vmatprep.subr.bf16.mxu0 0
        %1682 = vmatpush1.bf16.xpose.msra.mxu0 0
        %1683 = vmatprep.mubr.bf16.mxu0 0
        %1684 = vmatmul.mubr.bf16.gmra.mrb[0].mxu0 %v1646
        %v1685 = vpop.f32.mrb[0].mxu0
        %v1686 = vadd.f32 0.0, %v1685
        %v1687 = vpop.f32.mrb[0].mxu0
        %v1688 = vpop.f32.mrb[0].mxu0
        %v1689 = vadd.f32 0.0, %v1688
        %v1690 = vpop.f32.mrb[0].mxu0
        %1691 = vdwg.mxu0
        %v1692 = vmul.f32 %v1686, 0.125
        %v1693 = vmul.f32 %v1689, 0.125
        %v1695 = vlaneseq
        %v1696 = vshrl.u32 %v1695, 7
        %v1697 = vsub.s32 0, %v1696
        %v1698 = vrot.slane %v949, %v1697
        %v1700 = vadd.f32 %v1692, %v1698
        %v1701 = vadd.f32 %v1693, %v1698
        %v1702 = vsel %vm1308, %v1700, -inf
        %1703 = vmax.xlane.f32.xlu0 %v1702
        %v1704 = vpop.xlane.xlu0 %1703
        %v1705 = vsel %vm1308, %v1701, -inf
        %1706 = vmax.xlane.f32.xlu0 %v1705
        %v1707 = vpop.xlane.xlu0 %1706
        %v1708 = vsub.f32 %v1700, %v1704
        %v1709 = vsub.f32 %v1701, %v1707
        %v1710 = vmul.f32 %v1708, 1.442695
        %v1711 = vpow.pop %v1710
        %v1712 = vmul.f32 %v1709, 1.442695
        %v1713 = vpow.pop %v1712
        %v1714 = vsel %vm1308, %v1711, 0.0
        %1715 = vadd.xlane.f32.xlu0 %v1714
        %v1716 = vpop.xlane.xlu0 %1715
        %v1717 = vsel %vm1308, %v1713, 0.0
        %1718 = vadd.xlane.f32.xlu0 %v1717
        %v1719 = vpop.xlane.xlu0 %1718
        %v1720 = vrcp.pop %v1716
        %v1721 = vrcp.pop %v1719
        %v1722 = vmul.f32 %v1711, %v1720
        %v1723 = vmul.f32 %v1713, %v1721
        %v1724 = vpack.c.bf16 %v1723, %v1722
        %v1726 = vsel %vm1308, %v1724, 0
        %1728 = vmatprep.subr.bf16.mxu0 0
        %1729 = vmatpush1.bf16.msra.mxu0 %v1644
        %1730 = vmatprep.subr.bf16.mxu0 0
        %1731 = vmatpush1.bf16.msra.mxu0 0
        %1732 = vmatprep.subr.bf16.mxu0 0
        %1733 = vmatpush1.bf16.msra.mxu0 0
        %1734 = vmatprep.subr.bf16.mxu0 0
        %1735 = vmatpush1.bf16.msra.mxu0 0
        %1736 = vmatprep.subr.bf16.mxu0 0
        %1737 = vmatpush1.bf16.msra.mxu0 0
        %1738 = vmatprep.subr.bf16.mxu0 0
        %1739 = vmatpush1.bf16.msra.mxu0 0
        %1740 = vmatprep.subr.bf16.mxu0 0
        %1741 = vmatpush1.bf16.msra.mxu0 0
        %1742 = vmatprep.subr.bf16.mxu0 0
        %1743 = vmatpush1.bf16.msra.mxu0 0
        %1744 = vmatprep.subr.bf16.mxu0 0
        %1745 = vmatpush1.bf16.msra.mxu0 0
        %1746 = vmatprep.subr.bf16.mxu0 0
        %1747 = vmatpush1.bf16.msra.mxu0 0
        %1748 = vmatprep.subr.bf16.mxu0 0
        %1749 = vmatpush1.bf16.msra.mxu0 0
        %1750 = vmatprep.subr.bf16.mxu0 0
        %1751 = vmatpush1.bf16.msra.mxu0 0
        %1752 = vmatprep.subr.bf16.mxu0 0
        %1753 = vmatpush1.bf16.msra.mxu0 0
        %1754 = vmatprep.subr.bf16.mxu0 0
        %1755 = vmatpush1.bf16.msra.mxu0 0
        %1756 = vmatprep.subr.bf16.mxu0 0
        %1757 = vmatpush1.bf16.msra.mxu0 0
        %1758 = vmatprep.subr.bf16.mxu0 0
        %1759 = vmatpush1.bf16.msra.mxu0 0
        %1760 = vmatprep.mubr.bf16.mxu0 0
        %1761 = vmatmul.mubr.bf16.gmra.mrb[0].mxu0 %v1726
        %v1762 = vpop.f32.mrb[0].mxu0
        %v1763 = vadd.f32 0.0, %v1762
        %v1764 = vpop.f32.mrb[0].mxu0
        %v1765 = vpop.f32.mrb[0].mxu0
        %v1766 = vadd.f32 0.0, %v1765
        %v1767 = vpop.f32.mrb[0].mxu0
        %1768 = vdwg.mxu0
        %v1769 = vpack.c.bf16 %v1766, %v1763
        %1771 = vrot.lane.b32.xlu0 %v1642, 64
        %v1772 = vpop.permute.xlu0 %1771
        %1774 = vrot.lane.b32.xlu0 %v1643, 64
        %v1775 = vpop.permute.xlu0 %1774
        %v1777 = vsel %vm1250, %v1772, 0
        %v1780 = vsel %vm1250, %v1775, 0
        %1782 = vmatprep.subr.bf16.mxu0 0
        %1783 = vmatpush1.bf16.xpose.msra.mxu0 %v1780
        %1784 = vmatprep.subr.bf16.mxu0 0
        %1785 = vmatpush1.bf16.xpose.msra.mxu0 0
        %1786 = vmatprep.subr.bf16.mxu0 0
        %1787 = vmatpush1.bf16.xpose.msra.mxu0 0
        %1788 = vmatprep.subr.bf16.mxu0 0
        %1789 = vmatpush1.bf16.xpose.msra.mxu0 0
        %1790 = vmatprep.subr.bf16.mxu0 0
        %1791 = vmatpush1.bf16.xpose.msra.mxu0 0
        %1792 = vmatprep.subr.bf16.mxu0 0
        %1793 = vmatpush1.bf16.xpose.msra.mxu0 0
        %1794 = vmatprep.subr.bf16.mxu0 0
        %1795 = vmatpush1.bf16.xpose.msra.mxu0 0
        %1796 = vmatprep.subr.bf16.mxu0 0
        %1797 = vmatpush1.bf16.xpose.msra.mxu0 0
        %1798 = vmatprep.subr.bf16.mxu0 0
        %1799 = vmatpush1.bf16.xpose.msra.mxu0 0
        %1800 = vmatprep.subr.bf16.mxu0 0
        %1801 = vmatpush1.bf16.xpose.msra.mxu0 0
        %1802 = vmatprep.subr.bf16.mxu0 0
        %1803 = vmatpush1.bf16.xpose.msra.mxu0 0
        %1804 = vmatprep.subr.bf16.mxu0 0
        %1805 = vmatpush1.bf16.xpose.msra.mxu0 0
        %1806 = vmatprep.subr.bf16.mxu0 0
        %1807 = vmatpush1.bf16.xpose.msra.mxu0 0
        %1808 = vmatprep.subr.bf16.mxu0 0
        %1809 = vmatpush1.bf16.xpose.msra.mxu0 0
        %1810 = vmatprep.subr.bf16.mxu0 0
        %1811 = vmatpush1.bf16.xpose.msra.mxu0 0
        %1812 = vmatprep.subr.bf16.mxu0 0
        %1813 = vmatpush1.bf16.xpose.msra.mxu0 0
        %1814 = vmatprep.mubr.bf16.mxu0 0
        %1815 = vmatmul.mubr.bf16.gmra.mrb[0].mxu0 %v1777
        %v1816 = vpop.f32.mrb[0].mxu0
        %v1817 = vadd.f32 0.0, %v1816
        %v1818 = vpop.f32.mrb[0].mxu0
        %v1819 = vpop.f32.mrb[0].mxu0
        %v1820 = vadd.f32 0.0, %v1819
        %v1821 = vpop.f32.mrb[0].mxu0
        %1822 = vdwg.mxu0
        %v1823 = vmul.f32 %v1817, 0.125
        %v1824 = vmul.f32 %v1820, 0.125
        %v1825 = vadd.f32 %v1823, %v1698
        %v1826 = vadd.f32 %v1824, %v1698
        %v1827 = vsel %vm1308, %v1825, -inf
        %1828 = vmax.xlane.f32.xlu0 %v1827
        %v1829 = vpop.xlane.xlu0 %1828
        %v1830 = vsel %vm1308, %v1826, -inf
        %1831 = vmax.xlane.f32.xlu0 %v1830
        %v1832 = vpop.xlane.xlu0 %1831
        %v1833 = vsub.f32 %v1825, %v1829
        %v1834 = vsub.f32 %v1826, %v1832
        %v1835 = vmul.f32 %v1833, 1.442695
        %v1836 = vpow.pop %v1835
        %v1837 = vmul.f32 %v1834, 1.442695
        %v1838 = vpow.pop %v1837
        %v1839 = vsel %vm1308, %v1836, 0.0
        %1840 = vadd.xlane.f32.xlu0 %v1839
        %v1841 = vpop.xlane.xlu0 %1840
        %v1842 = vsel %vm1308, %v1838, 0.0
        %1843 = vadd.xlane.f32.xlu0 %v1842
        %v1844 = vpop.xlane.xlu0 %1843
        %v1845 = vrcp.pop %v1841
        %v1846 = vrcp.pop %v1844
        %v1847 = vmul.f32 %v1836, %v1845
        %v1848 = vmul.f32 %v1838, %v1846
        %v1849 = vpack.c.bf16 %v1848, %v1847
        %1851 = vrot.lane.b32.xlu0 %v1644, 64
        %v1852 = vpop.permute.xlu0 %1851
        %v1855 = vsel %vm1308, %v1849, 0
        %1857 = vmatprep.subr.bf16.mxu0 0
        %1858 = vmatpush1.bf16.msra.mxu0 %v1852
        %1859 = vmatprep.subr.bf16.mxu0 0
        %1860 = vmatpush1.bf16.msra.mxu0 0
        %1861 = vmatprep.subr.bf16.mxu0 0
        %1862 = vmatpush1.bf16.msra.mxu0 0
        %1863 = vmatprep.subr.bf16.mxu0 0
        %1864 = vmatpush1.bf16.msra.mxu0 0
        %1865 = vmatprep.subr.bf16.mxu0 0
        %1866 = vmatpush1.bf16.msra.mxu0 0
        %1867 = vmatprep.subr.bf16.mxu0 0
        %1868 = vmatpush1.bf16.msra.mxu0 0
        %1869 = vmatprep.subr.bf16.mxu0 0
        %1870 = vmatpush1.bf16.msra.mxu0 0
        %1871 = vmatprep.subr.bf16.mxu0 0
        %1872 = vmatpush1.bf16.msra.mxu0 0
        %1873 = vmatprep.subr.bf16.mxu0 0
        %1874 = vmatpush1.bf16.msra.mxu0 0
        %1875 = vmatprep.subr.bf16.mxu0 0
        %1876 = vmatpush1.bf16.msra.mxu0 0
        %1877 = vmatprep.subr.bf16.mxu0 0
        %1878 = vmatpush1.bf16.msra.mxu0 0
        %1879 = vmatprep.subr.bf16.mxu0 0
        %1880 = vmatpush1.bf16.msra.mxu0 0
        %1881 = vmatprep.subr.bf16.mxu0 0
        %1882 = vmatpush1.bf16.msra.mxu0 0
        %1883 = vmatprep.subr.bf16.mxu0 0
        %1884 = vmatpush1.bf16.msra.mxu0 0
        %1885 = vmatprep.subr.bf16.mxu0 0
        %1886 = vmatpush1.bf16.msra.mxu0 0
        %1887 = vmatprep.subr.bf16.mxu0 0
        %1888 = vmatpush1.bf16.msra.mxu0 0
        %1889 = vmatprep.mubr.bf16.mxu0 0
        %1890 = vmatmul.mubr.bf16.gmra.mrb[0].mxu0 %v1855
        %v1891 = vpop.f32.mrb[0].mxu0
        %v1892 = vadd.f32 0.0, %v1891
        %v1893 = vpop.f32.mrb[0].mxu0
        %v1894 = vpop.f32.mrb[0].mxu0
        %v1895 = vadd.f32 0.0, %v1894
        %v1896 = vpop.f32.mrb[0].mxu0
        %1897 = vdwg.mxu0
        %v1898 = vpack.c.bf16 %v1895, %v1892
        %v1900 = vsel %vm1250, %v1898, 0
        %1902 = vmatprep.subr.bf16.mxu0 0
        %1903 = vmatpush1.bf16.msra.mxu0 %v1522
        %1904 = vmatprep.subr.bf16.mxu0 0
        %1905 = vmatpush1.bf16.msra.mxu0 %v1523
        %1906 = vmatprep.subr.bf16.mxu0 0
        %1907 = vmatpush1.bf16.msra.mxu0 %v1524
        %1908 = vmatprep.subr.bf16.mxu0 0
        %1909 = vmatpush1.bf16.msra.mxu0 %v1525
        %1910 = vmatprep.subr.bf16.mxu0 0
        %1911 = vmatpush1.bf16.msra.mxu0 0
        %1912 = vmatprep.subr.bf16.mxu0 0
        %1913 = vmatpush1.bf16.msra.mxu0 0
        %1914 = vmatprep.subr.bf16.mxu0 0
        %1915 = vmatpush1.bf16.msra.mxu0 0
        %1916 = vmatprep.subr.bf16.mxu0 0
        %1917 = vmatpush1.bf16.msra.mxu0 0
        %1918 = vmatprep.subr.bf16.mxu0 0
        %1919 = vmatpush1.bf16.msra.mxu0 0
        %1920 = vmatprep.subr.bf16.mxu0 0
        %1921 = vmatpush1.bf16.msra.mxu0 0
        %1922 = vmatprep.subr.bf16.mxu0 0
        %1923 = vmatpush1.bf16.msra.mxu0 0
        %1924 = vmatprep.subr.bf16.mxu0 0
        %1925 = vmatpush1.bf16.msra.mxu0 0
        %1926 = vmatprep.subr.bf16.mxu0 0
        %1927 = vmatpush1.bf16.msra.mxu0 0
        %1928 = vmatprep.subr.bf16.mxu0 0
        %1929 = vmatpush1.bf16.msra.mxu0 0
        %1930 = vmatprep.subr.bf16.mxu0 0
        %1931 = vmatpush1.bf16.msra.mxu0 0
        %1932 = vmatprep.subr.bf16.mxu0 0
        %1933 = vmatpush1.bf16.msra.mxu0 0
        %1934 = vmatprep.mubr.bf16.mxu0 0
        %1935 = vmatmul.mubr.bf16.gmra.mrb[0].mxu0 %v1900
        %v1936 = vpop.f32.mrb[0].mxu0
        %v1937 = vadd.f32 0.0, %v1936
        %v1938 = vpop.f32.mrb[0].mxu0
        %v1939 = vpop.f32.mrb[0].mxu0
        %v1940 = vadd.f32 0.0, %v1939
        %v1941 = vpop.f32.mrb[0].mxu0
        %1942 = vdwg.mxu0
        %v1944 = vsel %vm1250, %v1769, 0
        %1946 = vmatprep.subr.bf16.mxu0 0
        %1947 = vmatpush1.bf16.msra.mxu0 %v1590
        %1948 = vmatprep.subr.bf16.mxu0 0
        %1949 = vmatpush1.bf16.msra.mxu0 %v1591
        %1950 = vmatprep.subr.bf16.mxu0 0
        %1951 = vmatpush1.bf16.msra.mxu0 %v1592
        %1952 = vmatprep.subr.bf16.mxu0 0
        %1953 = vmatpush1.bf16.msra.mxu0 %v1593
        %1954 = vmatprep.subr.bf16.mxu0 0
        %1955 = vmatpush1.bf16.msra.mxu0 0
        %1956 = vmatprep.subr.bf16.mxu0 0
        %1957 = vmatpush1.bf16.msra.mxu0 0
        %1958 = vmatprep.subr.bf16.mxu0 0
        %1959 = vmatpush1.bf16.msra.mxu0 0
        %1960 = vmatprep.subr.bf16.mxu0 0
        %1961 = vmatpush1.bf16.msra.mxu0 0
        %1962 = vmatprep.subr.bf16.mxu0 0
        %1963 = vmatpush1.bf16.msra.mxu0 0
        %1964 = vmatprep.subr.bf16.mxu0 0
        %1965 = vmatpush1.bf16.msra.mxu0 0
        %1966 = vmatprep.subr.bf16.mxu0 0
        %1967 = vmatpush1.bf16.msra.mxu0 0
        %1968 = vmatprep.subr.bf16.mxu0 0
        %1969 = vmatpush1.bf16.msra.mxu0 0
        %1970 = vmatprep.subr.bf16.mxu0 0
        %1971 = vmatpush1.bf16.msra.mxu0 0
        %1972 = vmatprep.subr.bf16.mxu0 0
        %1973 = vmatpush1.bf16.msra.mxu0 0
        %1974 = vmatprep.subr.bf16.mxu0 0
        %1975 = vmatpush1.bf16.msra.mxu0 0
        %1976 = vmatprep.subr.bf16.mxu0 0
        %1977 = vmatpush1.bf16.msra.mxu0 0
        %1978 = vmatprep.mubr.bf16.mxu0 0
        %1979 = vmatmul.mubr.bf16.gmra.mrb[0].mxu0 %v1944
        %v1980 = vpop.f32.mrb[0].mxu0
        %v1981 = vadd.f32 %v1937, %v1980
        %v1982 = vpop.f32.mrb[0].mxu0
        %v1983 = vpop.f32.mrb[0].mxu0
        %v1984 = vadd.f32 %v1940, %v1983
        %v1985 = vpop.f32.mrb[0].mxu0
        %1986 = vdwg.mxu0
        %v1987 = vld [vmem:[%s898] sm:$0x1]
        %v1989 = vlaneseq
        %v1990 = vshrl.u32 %v1989, 7
        %v1991 = vsub.s32 0, %v1990
        %v1992 = vrot.slane %v1987, %v1991
        %v1994 = vadd.f32 %v1636, %v1992
        %v1995 = vadd.f32 %v1639, %v1992
        %v1996 = vadd.f32 %v1981, %v1992
        %v1997 = vadd.f32 %v1984, %v1992
        %v1998 = vadd.f32 %v944, %v1994
        %v1999 = vadd.f32 %v945, %v1995
        %v2000 = vadd.f32 %v946, %v1996
        %v2001 = vadd.f32 %v947, %v1997
        %v2002 = vld [vmem:[%s908] sm:$0x1]
        %v2003 = vld [vmem:[%s911] sm:$0x1]
        %v2004 = vld [vmem:[%s914] sm:$0x1]
        %v2005 = vld [vmem:[%s917] sm:$0x1]
        %2006 = vadd.xlane.f32.xlu0 %v1998
        %v2007 = vpop.xlane.xlu0 %2006
        %2008 = vadd.xlane.f32.xlu0 %v1999
        %v2009 = vpop.xlane.xlu0 %2008
        %2010 = vadd.xlane.f32.xlu0 %v2000
        %v2011 = vpop.xlane.xlu0 %2010
        %2012 = vadd.xlane.f32.xlu0 %v2001
        %v2013 = vpop.xlane.xlu0 %2012
        %v2014 = vrcp.pop 128.0
        %v2015 = vmul.f32 %v2007, %v2014
        %v2016 = vmul.f32 %v2009, %v2014
        %v2017 = vmul.f32 %v2011, %v2014
        %v2018 = vmul.f32 %v2013, %v2014
        %v2019 = vsub.f32 %v1998, %v2015
        %v2020 = vsub.f32 %v1999, %v2016
        %v2021 = vsub.f32 %v2000, %v2017
        %v2022 = vsub.f32 %v2001, %v2018
        %v2023 = vmul.f32 %v2019, %v2019
        %v2024 = vmul.f32 %v2020, %v2020
        %v2025 = vmul.f32 %v2021, %v2021
        %v2026 = vmul.f32 %v2022, %v2022
        %2027 = vadd.xlane.f32.xlu0 %v2023
        %v2028 = vpop.xlane.xlu0 %2027
        %2029 = vadd.xlane.f32.xlu0 %v2024
        %v2030 = vpop.xlane.xlu0 %2029
        %2031 = vadd.xlane.f32.xlu0 %v2025
        %v2032 = vpop.xlane.xlu0 %2031
        %2033 = vadd.xlane.f32.xlu0 %v2026
        %v2034 = vpop.xlane.xlu0 %2033
        %v2035 = vmul.f32 %v2028, %v2014
        %v2036 = vmul.f32 %v2030, %v2014
        %v2037 = vmul.f32 %v2032, %v2014
        %v2038 = vmul.f32 %v2034, %v2014
        %v2039 = vadd.f32 %v2035, 1e-05
        %v2040 = vadd.f32 %v2036, 1e-05
        %v2041 = vadd.f32 %v2037, 1e-05
        %v2042 = vadd.f32 %v2038, 1e-05
        %v2043 = vrsqrt.pop %v2039
        %v2044 = vrsqrt.pop %v2040
        %v2045 = vrsqrt.pop %v2041
        %v2046 = vrsqrt.pop %v2042
        %v2047 = vmul.f32 %v2019, %v2043
        %v2048 = vmul.f32 %v2020, %v2044
        %v2049 = vmul.f32 %v2021, %v2045
        %v2050 = vmul.f32 %v2022, %v2046
        %v2052 = vlaneseq
        %v2053 = vshrl.u32 %v2052, 7
        %v2054 = vsub.s32 0, %v2053
        %v2055 = vrot.slane %v2002, %v2054
        %v2057 = vmul.f32 %v2047, %v2055
        %v2058 = vmul.f32 %v2048, %v2055
        %v2059 = vmul.f32 %v2049, %v2055
        %v2060 = vmul.f32 %v2050, %v2055
        %v2062 = vlaneseq
        %v2063 = vshrl.u32 %v2062, 7
        %v2064 = vsub.s32 0, %v2063
        %v2065 = vrot.slane %v2003, %v2064
        %v2067 = vadd.f32 %v2057, %v2065
        %v2068 = vadd.f32 %v2058, %v2065
        %v2069 = vadd.f32 %v2059, %v2065
        %v2070 = vadd.f32 %v2060, %v2065
        %v2072 = vlaneseq
        %v2073 = vshrl.u32 %v2072, 7
        %v2074 = vsub.s32 0, %v2073
        %v2075 = vrot.slane %v2004, %v2074
        %v2077 = vmul.f32 %v2075, %v2067
        %v2078 = vmul.f32 %v2075, %v2068
        %v2079 = vmul.f32 %v2075, %v2069
        %v2080 = vmul.f32 %v2075, %v2070
        %v2082 = vlaneseq
        %v2083 = vshrl.u32 %v2082, 7
        %v2084 = vsub.s32 0, %v2083
        %v2085 = vrot.slane %v2005, %v2084
        %v2087 = vadd.f32 %v2077, %v2085
        %v2088 = vadd.f32 %v2078, %v2085
        %v2089 = vadd.f32 %v2079, %v2085
        %v2090 = vadd.f32 %v2080, %v2085
        %v2091 = vpack.c.bf16 %v2088, %v2087
        %v2092 = vpack.c.bf16 %v2090, %v2089
        %v2093 = vld [vmem:[%s780] sm:$0xff]
        %v2094 = vld [vmem:[%s780 + $0x8] sm:$0xff]
        %v2095 = vld [vmem:[%s780 + $0x10] sm:$0xff]
        %v2096 = vld [vmem:[%s780 + $0x18] sm:$0xff]
        %v2097 = vld [vmem:[%s780 + $0x20] sm:$0xff]
        %v2098 = vld [vmem:[%s780 + $0x28] sm:$0xff]
        %v2099 = vld [vmem:[%s780 + $0x30] sm:$0xff]
        %v2100 = vld [vmem:[%s780 + $0x38] sm:$0xff]
        %v2101 = vld [vmem:[%s780 + $0x40] sm:$0xff]
        %v2102 = vld [vmem:[%s780 + $0x48] sm:$0xff]
        %v2103 = vld [vmem:[%s780 + $0x50] sm:$0xff]
        %v2104 = vld [vmem:[%s780 + $0x58] sm:$0xff]
        %v2105 = vld [vmem:[%s780 + $0x60] sm:$0xff]
        %v2106 = vld [vmem:[%s780 + $0x68] sm:$0xff]
        %v2107 = vld [vmem:[%s780 + $0x70] sm:$0xff]
        %v2108 = vld [vmem:[%s780 + $0x78] sm:$0xff]
        %v2109 = vld [vmem:[%s780 + $0x80] sm:$0xff]
        %v2110 = vld [vmem:[%s780 + $0x88] sm:$0xff]
        %v2111 = vld [vmem:[%s780 + $0x90] sm:$0xff]
        %v2112 = vld [vmem:[%s780 + $0x98] sm:$0xff]
        %v2113 = vld [vmem:[%s780 + $0xa0] sm:$0xff]
        %v2114 = vld [vmem:[%s780 + $0xa8] sm:$0xff]
        %v2115 = vld [vmem:[%s780 + $0xb0] sm:$0xff]
        %v2116 = vld [vmem:[%s780 + $0xb8] sm:$0xff]
        %v2117 = vld [vmem:[%s780 + $0xc0] sm:$0xff]
        %v2118 = vld [vmem:[%s780 + $0xc8] sm:$0xff]
        %v2119 = vld [vmem:[%s780 + $0xd0] sm:$0xff]
        %v2120 = vld [vmem:[%s780 + $0xd8] sm:$0xff]
        %v2121 = vld [vmem:[%s780 + $0xe0] sm:$0xff]
        %v2122 = vld [vmem:[%s780 + $0xe8] sm:$0xff]
        %v2123 = vld [vmem:[%s780 + $0xf0] sm:$0xff]
        %v2124 = vld [vmem:[%s780 + $0xf8] sm:$0xff]
        %v2125 = vld [vmem:[%s902] sm:$0xf]
        %v2127 = vlaneseq
        %v2128 = vshrl.u32 %v2127, 7
        %v2129 = vsub.s32 0, %v2128
        %v2130 = vrot.slane %v2125, %v2129
        %v2131 = vlaneseq
        %v2132 = vshrl.u32 %v2131, 7
        %v2133 = vsub.s32 1, %v2132
        %v2134 = vrot.slane %v2125, %v2133
        %v2135 = vlaneseq
        %v2136 = vshrl.u32 %v2135, 7
        %v2137 = vsub.s32 2, %v2136
        %v2138 = vrot.slane %v2125, %v2137
        %v2139 = vlaneseq
        %v2140 = vshrl.u32 %v2139, 7
        %v2141 = vsub.s32 3, %v2140
        %v2142 = vrot.slane %v2125, %v2141
        %v2179 = vunpack.c.l.b16 %v2093
        %v2180 = vunpack.c.h.b16 %v2093
        %v2181 = vunpack.c.l.b16 %v2094
        %v2182 = vunpack.c.h.b16 %v2094
        %v2183 = vunpack.c.l.b16 %v2095
        %v2184 = vunpack.c.h.b16 %v2095
        %v2185 = vunpack.c.l.b16 %v2096
        %v2186 = vunpack.c.h.b16 %v2096
        %v2187 = vunpack.c.l.b16 %v2097
        %v2188 = vunpack.c.h.b16 %v2097
        %v2189 = vunpack.c.l.b16 %v2098
        %v2190 = vunpack.c.h.b16 %v2098
        %v2191 = vunpack.c.l.b16 %v2099
        %v2192 = vunpack.c.h.b16 %v2099
        %v2193 = vunpack.c.l.b16 %v2100
        %v2194 = vunpack.c.h.b16 %v2100
        %v2195 = vunpack.c.l.b16 %v2101
        %v2196 = vunpack.c.h.b16 %v2101
        %v2197 = vunpack.c.l.b16 %v2102
        %v2198 = vunpack.c.h.b16 %v2102
        %v2199 = vunpack.c.l.b16 %v2103
        %v2200 = vunpack.c.h.b16 %v2103
        %v2201 = vunpack.c.l.b16 %v2104
        %v2202 = vunpack.c.h.b16 %v2104
        %v2203 = vunpack.c.l.b16 %v2105
        %v2204 = vunpack.c.h.b16 %v2105
        %v2205 = vunpack.c.l.b16 %v2106
        %v2206 = vunpack.c.h.b16 %v2106
        %v2207 = vunpack.c.l.b16 %v2107
        %v2208 = vunpack.c.h.b16 %v2107
        %v2209 = vunpack.c.l.b16 %v2108
        %v2210 = vunpack.c.h.b16 %v2108
        %v2211 = vunpack.c.l.b16 %v2109
        %v2212 = vunpack.c.h.b16 %v2109
        %v2213 = vunpack.c.l.b16 %v2110
        %v2214 = vunpack.c.h.b16 %v2110
        %v2215 = vunpack.c.l.b16 %v2111
        %v2216 = vunpack.c.h.b16 %v2111
        %v2217 = vunpack.c.l.b16 %v2112
        %v2218 = vunpack.c.h.b16 %v2112
        %v2219 = vunpack.c.l.b16 %v2113
        %v2220 = vunpack.c.h.b16 %v2113
        %v2221 = vunpack.c.l.b16 %v2114
        %v2222 = vunpack.c.h.b16 %v2114
        %v2223 = vunpack.c.l.b16 %v2115
        %v2224 = vunpack.c.h.b16 %v2115
        %v2225 = vunpack.c.l.b16 %v2116
        %v2226 = vunpack.c.h.b16 %v2116
        %v2227 = vunpack.c.l.b16 %v2117
        %v2228 = vunpack.c.h.b16 %v2117
        %v2229 = vunpack.c.l.b16 %v2118
        %v2230 = vunpack.c.h.b16 %v2118
        %v2231 = vunpack.c.l.b16 %v2119
        %v2232 = vunpack.c.h.b16 %v2119
        %v2233 = vunpack.c.l.b16 %v2120
        %v2234 = vunpack.c.h.b16 %v2120
        %v2235 = vunpack.c.l.b16 %v2121
        %v2236 = vunpack.c.h.b16 %v2121
        %v2237 = vunpack.c.l.b16 %v2122
        %v2238 = vunpack.c.h.b16 %v2122
        %v2239 = vunpack.c.l.b16 %v2123
        %v2240 = vunpack.c.h.b16 %v2123
        %v2241 = vunpack.c.l.b16 %v2124
        %v2242 = vunpack.c.h.b16 %v2124
        %v2243 = vpack.c.b16 %v2183, %v2179
        %v2244 = vpack.c.b16 %v2184, %v2180
        %v2245 = vpack.c.b16 %v2185, %v2181
        %v2246 = vpack.c.b16 %v2186, %v2182
        %v2247 = vpack.c.b16 %v2191, %v2187
        %v2248 = vpack.c.b16 %v2192, %v2188
        %v2249 = vpack.c.b16 %v2193, %v2189
        %v2250 = vpack.c.b16 %v2194, %v2190
        %v2251 = vpack.c.b16 %v2199, %v2195
        %v2252 = vpack.c.b16 %v2200, %v2196
        %v2253 = vpack.c.b16 %v2201, %v2197
        %v2254 = vpack.c.b16 %v2202, %v2198
        %v2255 = vpack.c.b16 %v2207, %v2203
        %v2256 = vpack.c.b16 %v2208, %v2204
        %v2257 = vpack.c.b16 %v2209, %v2205
        %v2258 = vpack.c.b16 %v2210, %v2206
        %v2259 = vpack.c.b16 %v2215, %v2211
        %v2260 = vpack.c.b16 %v2216, %v2212
        %v2261 = vpack.c.b16 %v2217, %v2213
        %v2262 = vpack.c.b16 %v2218, %v2214
        %v2263 = vpack.c.b16 %v2223, %v2219
        %v2264 = vpack.c.b16 %v2224, %v2220
        %v2265 = vpack.c.b16 %v2225, %v2221
        %v2266 = vpack.c.b16 %v2226, %v2222
        %v2267 = vpack.c.b16 %v2231, %v2227
        %v2268 = vpack.c.b16 %v2232, %v2228
        %v2269 = vpack.c.b16 %v2233, %v2229
        %v2270 = vpack.c.b16 %v2234, %v2230
        %v2271 = vpack.c.b16 %v2239, %v2235
        %v2272 = vpack.c.b16 %v2240, %v2236
        %v2273 = vpack.c.b16 %v2241, %v2237
        %v2274 = vpack.c.b16 %v2242, %v2238
        %2307 = vmatprep.subr.bf16.mxu0 %v2244
        %2308 = vmatpush1.bf16.msra.mxu0 %v2243
        %2309 = vmatprep.subr.bf16.mxu0 %v2248
        %2310 = vmatpush1.bf16.msra.mxu0 %v2247
        %2311 = vmatprep.subr.bf16.mxu0 %v2252
        %2312 = vmatpush1.bf16.msra.mxu0 %v2251
        %2313 = vmatprep.subr.bf16.mxu0 %v2256
        %2314 = vmatpush1.bf16.msra.mxu0 %v2255
        %2315 = vmatprep.subr.bf16.mxu0 %v2260
        %2316 = vmatpush1.bf16.msra.mxu0 %v2259
        %2317 = vmatprep.subr.bf16.mxu0 %v2264
        %2318 = vmatpush1.bf16.msra.mxu0 %v2263
        %2319 = vmatprep.subr.bf16.mxu0 %v2268
        %2320 = vmatpush1.bf16.msra.mxu0 %v2267
        %2321 = vmatprep.subr.bf16.mxu0 %v2272
        %2322 = vmatpush1.bf16.msra.mxu0 %v2271
        %2323 = vmatprep.subr.bf16.mxu0 0
        %2324 = vmatpush1.bf16.msra.mxu0 0
        %2325 = vmatprep.subr.bf16.mxu0 0
        %2326 = vmatpush1.bf16.msra.mxu0 0
        %2327 = vmatprep.subr.bf16.mxu0 0
        %2328 = vmatpush1.bf16.msra.mxu0 0
        %2329 = vmatprep.subr.bf16.mxu0 0
        %2330 = vmatpush1.bf16.msra.mxu0 0
        %2331 = vmatprep.subr.bf16.mxu0 0
        %2332 = vmatpush1.bf16.msra.mxu0 0
        %2333 = vmatprep.subr.bf16.mxu0 0
        %2334 = vmatpush1.bf16.msra.mxu0 0
        %2335 = vmatprep.subr.bf16.mxu0 0
        %2336 = vmatpush1.bf16.msra.mxu0 0
        %2337 = vmatprep.subr.bf16.mxu0 0
        %2338 = vmatpush1.bf16.msra.mxu0 0
        %2339 = vmatprep.mubr.bf16.mxu0 0
        %2340 = vmatmul.mubr.bf16.gmra.mrb[0].mxu0 %v2091
        %v2341 = vpop.f32.mrb[0].mxu0
        %v2342 = vadd.f32 %v2130, %v2341
        %v2343 = vpop.f32.mrb[0].mxu0
        %v2344 = vadd.f32 %v2134, %v2343
        %v2345 = vpop.f32.mrb[0].mxu0
        %v2346 = vadd.f32 %v2130, %v2345
        %v2347 = vpop.f32.mrb[0].mxu0
        %v2348 = vadd.f32 %v2134, %v2347
        %2349 = vmatprep.mubr.bf16.mxu0 0
        %2350 = vmatmul.mubr.bf16.gmra.mrb[0].mxu0 %v2092
        %v2351 = vpop.f32.mrb[0].mxu0
        %v2352 = vadd.f32 %v2130, %v2351
        %v2353 = vpop.f32.mrb[0].mxu0
        %v2354 = vadd.f32 %v2134, %v2353
        %v2355 = vpop.f32.mrb[0].mxu0
        %v2356 = vadd.f32 %v2130, %v2355
        %v2357 = vpop.f32.mrb[0].mxu0
        %v2358 = vadd.f32 %v2134, %v2357
        %2359 = vdwg.mxu0
        %2360 = vmatprep.subr.bf16.mxu0 %v2246
        %2361 = vmatpush1.bf16.msra.mxu0 %v2245
        %2362 = vmatprep.subr.bf16.mxu0 %v2250
        %2363 = vmatpush1.bf16.msra.mxu0 %v2249
        %2364 = vmatprep.subr.bf16.mxu0 %v2254
        %2365 = vmatpush1.bf16.msra.mxu0 %v2253
        %2366 = vmatprep.subr.bf16.mxu0 %v2258
        %2367 = vmatpush1.bf16.msra.mxu0 %v2257
        %2368 = vmatprep.subr.bf16.mxu0 %v2262
        %2369 = vmatpush1.bf16.msra.mxu0 %v2261
        %2370 = vmatprep.subr.bf16.mxu0 %v2266
        %2371 = vmatpush1.bf16.msra.mxu0 %v2265
        %2372 = vmatprep.subr.bf16.mxu0 %v2270
        %2373 = vmatpush1.bf16.msra.mxu0 %v2269
        %2374 = vmatprep.subr.bf16.mxu0 %v2274
        %2375 = vmatpush1.bf16.msra.mxu0 %v2273
        %2376 = vmatprep.subr.bf16.mxu0 0
        %2377 = vmatpush1.bf16.msra.mxu0 0
        %2378 = vmatprep.subr.bf16.mxu0 0
        %2379 = vmatpush1.bf16.msra.mxu0 0
        %2380 = vmatprep.subr.bf16.mxu0 0
        %2381 = vmatpush1.bf16.msra.mxu0 0
        %2382 = vmatprep.subr.bf16.mxu0 0
        %2383 = vmatpush1.bf16.msra.mxu0 0
        %2384 = vmatprep.subr.bf16.mxu0 0
        %2385 = vmatpush1.bf16.msra.mxu0 0
        %2386 = vmatprep.subr.bf16.mxu0 0
        %2387 = vmatpush1.bf16.msra.mxu0 0
        %2388 = vmatprep.subr.bf16.mxu0 0
        %2389 = vmatpush1.bf16.msra.mxu0 0
        %2390 = vmatprep.subr.bf16.mxu0 0
        %2391 = vmatpush1.bf16.msra.mxu0 0
        %2392 = vmatprep.mubr.bf16.mxu0 0
        %2393 = vmatmul.mubr.bf16.gmra.mrb[0].mxu0 %v2091
        %v2394 = vpop.f32.mrb[0].mxu0
        %v2395 = vadd.f32 %v2138, %v2394
        %v2396 = vpop.f32.mrb[0].mxu0
        %v2397 = vadd.f32 %v2142, %v2396
        %v2398 = vpop.f32.mrb[0].mxu0
        %v2399 = vadd.f32 %v2138, %v2398
        %v2400 = vpop.f32.mrb[0].mxu0
        %v2401 = vadd.f32 %v2142, %v2400
        %2402 = vmatprep.mubr.bf16.mxu0 0
        %2403 = vmatmul.mubr.bf16.gmra.mrb[0].mxu0 %v2092
        %v2404 = vpop.f32.mrb[0].mxu0
        %v2405 = vadd.f32 %v2138, %v2404
        %v2406 = vpop.f32.mrb[0].mxu0
        %v2407 = vadd.f32 %v2142, %v2406
        %v2408 = vpop.f32.mrb[0].mxu0
        %v2409 = vadd.f32 %v2138, %v2408
        %v2410 = vpop.f32.mrb[0].mxu0
        %v2411 = vadd.f32 %v2142, %v2410
        %2412 = vdwg.mxu0
        %v2413 = vmax.f32 %v2342, 0.0
        %v2414 = vmax.f32 %v2344, 0.0
        %v2415 = vmax.f32 %v2395, 0.0
        %v2416 = vmax.f32 %v2397, 0.0
        %v2417 = vmax.f32 %v2346, 0.0
        %v2418 = vmax.f32 %v2348, 0.0
        %v2419 = vmax.f32 %v2399, 0.0
        %v2420 = vmax.f32 %v2401, 0.0
        %v2421 = vmax.f32 %v2352, 0.0
        %v2422 = vmax.f32 %v2354, 0.0
        %v2423 = vmax.f32 %v2405, 0.0
        %v2424 = vmax.f32 %v2407, 0.0
        %v2425 = vmax.f32 %v2356, 0.0
        %v2426 = vmax.f32 %v2358, 0.0
        %v2427 = vmax.f32 %v2409, 0.0
        %v2428 = vmax.f32 %v2411, 0.0
        %v2429 = vpack.c.bf16 %v2417, %v2413
        %v2430 = vpack.c.bf16 %v2418, %v2414
        %v2431 = vpack.c.bf16 %v2419, %v2415
        %v2432 = vpack.c.bf16 %v2420, %v2416
        %v2433 = vpack.c.bf16 %v2425, %v2421
        %v2434 = vpack.c.bf16 %v2426, %v2422
        %v2435 = vpack.c.bf16 %v2427, %v2423
        %v2436 = vpack.c.bf16 %v2428, %v2424
        %v2437 = vld [vmem:[%s789] sm:$0xf]
        %v2438 = vld [vmem:[%s789 + $0x4] sm:$0xf]
        %v2439 = vld [vmem:[%s789 + $0x8] sm:$0xf]
        %v2440 = vld [vmem:[%s789 + $0xc] sm:$0xf]
        %v2441 = vld [vmem:[%s789 + $0x10] sm:$0xf]
        %v2442 = vld [vmem:[%s789 + $0x14] sm:$0xf]
        %v2443 = vld [vmem:[%s789 + $0x18] sm:$0xf]
        %v2444 = vld [vmem:[%s789 + $0x1c] sm:$0xf]
        %v2445 = vld [vmem:[%s789 + $0x20] sm:$0xf]
        %v2446 = vld [vmem:[%s789 + $0x24] sm:$0xf]
        %v2447 = vld [vmem:[%s789 + $0x28] sm:$0xf]
        %v2448 = vld [vmem:[%s789 + $0x2c] sm:$0xf]
        %v2449 = vld [vmem:[%s789 + $0x30] sm:$0xf]
        %v2450 = vld [vmem:[%s789 + $0x34] sm:$0xf]
        %v2451 = vld [vmem:[%s789 + $0x38] sm:$0xf]
        %v2452 = vld [vmem:[%s789 + $0x3c] sm:$0xf]
        %v2453 = vld [vmem:[%s789 + $0x40] sm:$0xf]
        %v2454 = vld [vmem:[%s789 + $0x44] sm:$0xf]
        %v2455 = vld [vmem:[%s789 + $0x48] sm:$0xf]
        %v2456 = vld [vmem:[%s789 + $0x4c] sm:$0xf]
        %v2457 = vld [vmem:[%s789 + $0x50] sm:$0xf]
        %v2458 = vld [vmem:[%s789 + $0x54] sm:$0xf]
        %v2459 = vld [vmem:[%s789 + $0x58] sm:$0xf]
        %v2460 = vld [vmem:[%s789 + $0x5c] sm:$0xf]
        %v2461 = vld [vmem:[%s789 + $0x60] sm:$0xf]
        %v2462 = vld [vmem:[%s789 + $0x64] sm:$0xf]
        %v2463 = vld [vmem:[%s789 + $0x68] sm:$0xf]
        %v2464 = vld [vmem:[%s789 + $0x6c] sm:$0xf]
        %v2465 = vld [vmem:[%s789 + $0x70] sm:$0xf]
        %v2466 = vld [vmem:[%s789 + $0x74] sm:$0xf]
        %v2467 = vld [vmem:[%s789 + $0x78] sm:$0xf]
        %v2468 = vld [vmem:[%s789 + $0x7c] sm:$0xf]
        %v2469 = vld [vmem:[%s789 + $0x80] sm:$0xf]
        %v2470 = vld [vmem:[%s789 + $0x84] sm:$0xf]
        %v2471 = vld [vmem:[%s789 + $0x88] sm:$0xf]
        %v2472 = vld [vmem:[%s789 + $0x8c] sm:$0xf]
        %v2473 = vld [vmem:[%s789 + $0x90] sm:$0xf]
        %v2474 = vld [vmem:[%s789 + $0x94] sm:$0xf]
        %v2475 = vld [vmem:[%s789 + $0x98] sm:$0xf]
        %v2476 = vld [vmem:[%s789 + $0x9c] sm:$0xf]
        %v2477 = vld [vmem:[%s789 + $0xa0] sm:$0xf]
        %v2478 = vld [vmem:[%s789 + $0xa4] sm:$0xf]
        %v2479 = vld [vmem:[%s789 + $0xa8] sm:$0xf]
        %v2480 = vld [vmem:[%s789 + $0xac] sm:$0xf]
        %v2481 = vld [vmem:[%s789 + $0xb0] sm:$0xf]
        %v2482 = vld [vmem:[%s789 + $0xb4] sm:$0xf]
        %v2483 = vld [vmem:[%s789 + $0xb8] sm:$0xf]
        %v2484 = vld [vmem:[%s789 + $0xbc] sm:$0xf]
        %v2485 = vld [vmem:[%s789 + $0xc0] sm:$0xf]
        %v2486 = vld [vmem:[%s789 + $0xc4] sm:$0xf]
        %v2487 = vld [vmem:[%s789 + $0xc8] sm:$0xf]
        %v2488 = vld [vmem:[%s789 + $0xcc] sm:$0xf]
        %v2489 = vld [vmem:[%s789 + $0xd0] sm:$0xf]
        %v2490 = vld [vmem:[%s789 + $0xd4] sm:$0xf]
        %v2491 = vld [vmem:[%s789 + $0xd8] sm:$0xf]
        %v2492 = vld [vmem:[%s789 + $0xdc] sm:$0xf]
        %v2493 = vld [vmem:[%s789 + $0xe0] sm:$0xf]
        %v2494 = vld [vmem:[%s789 + $0xe4] sm:$0xf]
        %v2495 = vld [vmem:[%s789 + $0xe8] sm:$0xf]
        %v2496 = vld [vmem:[%s789 + $0xec] sm:$0xf]
        %v2497 = vld [vmem:[%s789 + $0xf0] sm:$0xf]
        %v2498 = vld [vmem:[%s789 + $0xf4] sm:$0xf]
        %v2499 = vld [vmem:[%s789 + $0xf8] sm:$0xf]
        %v2500 = vld [vmem:[%s789 + $0xfc] sm:$0xf]
        %v2501 = vld [vmem:[%s905] sm:$0x1]
        %v2503 = vlaneseq
        %v2504 = vshrl.u32 %v2503, 7
        %v2505 = vsub.s32 0, %v2504
        %v2506 = vrot.slane %v2501, %v2505
        %v2572 = vunpack.c.l.b16 %v2437
        %v2573 = vunpack.c.l.b16 %v2438
        %v2574 = vunpack.c.l.b16 %v2439
        %v2575 = vunpack.c.l.b16 %v2440
        %v2576 = vunpack.c.l.b16 %v2441
        %v2577 = vunpack.c.l.b16 %v2442
        %v2578 = vunpack.c.l.b16 %v2443
        %v2579 = vunpack.c.l.b16 %v2444
        %v2580 = vunpack.c.l.b16 %v2445
        %v2581 = vunpack.c.l.b16 %v2446
        %v2582 = vunpack.c.l.b16 %v2447
        %v2583 = vunpack.c.l.b16 %v2448
        %v2584 = vunpack.c.l.b16 %v2449
        %v2585 = vunpack.c.l.b16 %v2450
        %v2586 = vunpack.c.l.b16 %v2451
        %v2587 = vunpack.c.l.b16 %v2452
        %v2588 = vunpack.c.l.b16 %v2453
        %v2589 = vunpack.c.l.b16 %v2454
        %v2590 = vunpack.c.l.b16 %v2455
        %v2591 = vunpack.c.l.b16 %v2456
        %v2592 = vunpack.c.l.b16 %v2457
        %v2593 = vunpack.c.l.b16 %v2458
        %v2594 = vunpack.c.l.b16 %v2459
        %v2595 = vunpack.c.l.b16 %v2460
        %v2596 = vunpack.c.l.b16 %v2461
        %v2597 = vunpack.c.l.b16 %v2462
        %v2598 = vunpack.c.l.b16 %v2463
        %v2599 = vunpack.c.l.b16 %v2464
        %v2600 = vunpack.c.l.b16 %v2465
        %v2601 = vunpack.c.l.b16 %v2466
        %v2602 = vunpack.c.l.b16 %v2467
        %v2603 = vunpack.c.l.b16 %v2468
        %v2604 = vunpack.c.l.b16 %v2469
        %v2605 = vunpack.c.l.b16 %v2470
        %v2606 = vunpack.c.l.b16 %v2471
        %v2607 = vunpack.c.l.b16 %v2472
        %v2608 = vunpack.c.l.b16 %v2473
        %v2609 = vunpack.c.l.b16 %v2474
        %v2610 = vunpack.c.l.b16 %v2475
        %v2611 = vunpack.c.l.b16 %v2476
        %v2612 = vunpack.c.l.b16 %v2477
        %v2613 = vunpack.c.l.b16 %v2478
        %v2614 = vunpack.c.l.b16 %v2479
        %v2615 = vunpack.c.l.b16 %v2480
        %v2616 = vunpack.c.l.b16 %v2481
        %v2617 = vunpack.c.l.b16 %v2482
        %v2618 = vunpack.c.l.b16 %v2483
        %v2619 = vunpack.c.l.b16 %v2484
        %v2620 = vunpack.c.l.b16 %v2485
        %v2621 = vunpack.c.l.b16 %v2486
        %v2622 = vunpack.c.l.b16 %v2487
        %v2623 = vunpack.c.l.b16 %v2488
        %v2624 = vunpack.c.l.b16 %v2489
        %v2625 = vunpack.c.l.b16 %v2490
        %v2626 = vunpack.c.l.b16 %v2491
        %v2627 = vunpack.c.l.b16 %v2492
        %v2628 = vunpack.c.l.b16 %v2493
        %v2629 = vunpack.c.l.b16 %v2494
        %v2630 = vunpack.c.l.b16 %v2495
        %v2631 = vunpack.c.l.b16 %v2496
        %v2632 = vunpack.c.l.b16 %v2497
        %v2633 = vunpack.c.l.b16 %v2498
        %v2634 = vunpack.c.l.b16 %v2499
        %v2635 = vunpack.c.l.b16 %v2500
        %v2636 = vpack.c.b16 %v2573, %v2572
        %v2637 = vpack.c.b16 %v2575, %v2574
        %v2638 = vpack.c.b16 %v2577, %v2576
        %v2639 = vpack.c.b16 %v2579, %v2578
        %v2640 = vpack.c.b16 %v2581, %v2580
        %v2641 = vpack.c.b16 %v2583, %v2582
        %v2642 = vpack.c.b16 %v2585, %v2584
        %v2643 = vpack.c.b16 %v2587, %v2586
        %v2644 = vpack.c.b16 %v2589, %v2588
        %v2645 = vpack.c.b16 %v2591, %v2590
        %v2646 = vpack.c.b16 %v2593, %v2592
        %v2647 = vpack.c.b16 %v2595, %v2594
        %v2648 = vpack.c.b16 %v2597, %v2596
        %v2649 = vpack.c.b16 %v2599, %v2598
        %v2650 = vpack.c.b16 %v2601, %v2600
        %v2651 = vpack.c.b16 %v2603, %v2602
        %v2652 = vpack.c.b16 %v2605, %v2604
        %v2653 = vpack.c.b16 %v2607, %v2606
        %v2654 = vpack.c.b16 %v2609, %v2608
        %v2655 = vpack.c.b16 %v2611, %v2610
        %v2656 = vpack.c.b16 %v2613, %v2612
        %v2657 = vpack.c.b16 %v2615, %v2614
        %v2658 = vpack.c.b16 %v2617, %v2616
        %v2659 = vpack.c.b16 %v2619, %v2618
        %v2660 = vpack.c.b16 %v2621, %v2620
        %v2661 = vpack.c.b16 %v2623, %v2622
        %v2662 = vpack.c.b16 %v2625, %v2624
        %v2663 = vpack.c.b16 %v2627, %v2626
        %v2664 = vpack.c.b16 %v2629, %v2628
        %v2665 = vpack.c.b16 %v2631, %v2630
        %v2666 = vpack.c.b16 %v2633, %v2632
        %v2667 = vpack.c.b16 %v2635, %v2634
        %2700 = vmatprep.subr.bf16.mxu0 0
        %2701 = vmatpush1.bf16.msra.mxu0 %v2636
        %2702 = vmatprep.subr.bf16.mxu0 0
        %2703 = vmatpush1.bf16.msra.mxu0 %v2637
        %2704 = vmatprep.subr.bf16.mxu0 0
        %2705 = vmatpush1.bf16.msra.mxu0 %v2638
        %2706 = vmatprep.subr.bf16.mxu0 0
        %2707 = vmatpush1.bf16.msra.mxu0 %v2639
        %2708 = vmatprep.subr.bf16.mxu0 0
        %2709 = vmatpush1.bf16.msra.mxu0 %v2640
        %2710 = vmatprep.subr.bf16.mxu0 0
        %2711 = vmatpush1.bf16.msra.mxu0 %v2641
        %2712 = vmatprep.subr.bf16.mxu0 0
        %2713 = vmatpush1.bf16.msra.mxu0 %v2642
        %2714 = vmatprep.subr.bf16.mxu0 0
        %2715 = vmatpush1.bf16.msra.mxu0 %v2643
        %2716 = vmatprep.subr.bf16.mxu0 0
        %2717 = vmatpush1.bf16.msra.mxu0 %v2644
        %2718 = vmatprep.subr.bf16.mxu0 0
        %2719 = vmatpush1.bf16.msra.mxu0 %v2645
        %2720 = vmatprep.subr.bf16.mxu0 0
        %2721 = vmatpush1.bf16.msra.mxu0 %v2646
        %2722 = vmatprep.subr.bf16.mxu0 0
        %2723 = vmatpush1.bf16.msra.mxu0 %v2647
        %2724 = vmatprep.subr.bf16.mxu0 0
        %2725 = vmatpush1.bf16.msra.mxu0 %v2648
        %2726 = vmatprep.subr.bf16.mxu0 0
        %2727 = vmatpush1.bf16.msra.mxu0 %v2649
        %2728 = vmatprep.subr.bf16.mxu0 0
        %2729 = vmatpush1.bf16.msra.mxu0 %v2650
        %2730 = vmatprep.subr.bf16.mxu0 0
        %2731 = vmatpush1.bf16.msra.mxu0 %v2651
        %2732 = vmatprep.mubr.bf16.mxu0 %v2430
        %2733 = vmatmul.mubr.bf16.gmra.mrb[0].mxu0 %v2429
        %v2734 = vpop.f32.mrb[0].mxu0
        %v2735 = vadd.f32 %v2506, %v2734
        %v2736 = vpop.f32.mrb[0].mxu0
        %v2737 = vpop.f32.mrb[0].mxu0
        %v2738 = vadd.f32 %v2506, %v2737
        %v2739 = vpop.f32.mrb[0].mxu0
        %2740 = vmatprep.mubr.bf16.mxu0 %v2434
        %2741 = vmatmul.mubr.bf16.gmra.mrb[0].mxu0 %v2433
        %v2742 = vpop.f32.mrb[0].mxu0
        %v2743 = vadd.f32 %v2506, %v2742
        %v2744 = vpop.f32.mrb[0].mxu0
        %v2745 = vpop.f32.mrb[0].mxu0
        %v2746 = vadd.f32 %v2506, %v2745
        %v2747 = vpop.f32.mrb[0].mxu0
        %2748 = vdwg.mxu0
        %2749 = vmatprep.subr.bf16.mxu0 0
        %2750 = vmatpush1.bf16.msra.mxu0 %v2652
        %2751 = vmatprep.subr.bf16.mxu0 0
        %2752 = vmatpush1.bf16.msra.mxu0 %v2653
        %2753 = vmatprep.subr.bf16.mxu0 0
        %2754 = vmatpush1.bf16.msra.mxu0 %v2654
        %2755 = vmatprep.subr.bf16.mxu0 0
        %2756 = vmatpush1.bf16.msra.mxu0 %v2655
        %2757 = vmatprep.subr.bf16.mxu0 0
        %2758 = vmatpush1.bf16.msra.mxu0 %v2656
        %2759 = vmatprep.subr.bf16.mxu0 0
        %2760 = vmatpush1.bf16.msra.mxu0 %v2657
        %2761 = vmatprep.subr.bf16.mxu0 0
        %2762 = vmatpush1.bf16.msra.mxu0 %v2658
        %2763 = vmatprep.subr.bf16.mxu0 0
        %2764 = vmatpush1.bf16.msra.mxu0 %v2659
        %2765 = vmatprep.subr.bf16.mxu0 0
        %2766 = vmatpush1.bf16.msra.mxu0 %v2660
        %2767 = vmatprep.subr.bf16.mxu0 0
        %2768 = vmatpush1.bf16.msra.mxu0 %v2661
        %2769 = vmatprep.subr.bf16.mxu0 0
        %2770 = vmatpush1.bf16.msra.mxu0 %v2662
        %2771 = vmatprep.subr.bf16.mxu0 0
        %2772 = vmatpush1.bf16.msra.mxu0 %v2663
        %2773 = vmatprep.subr.bf16.mxu0 0
        %2774 = vmatpush1.bf16.msra.mxu0 %v2664
        %2775 = vmatprep.subr.bf16.mxu0 0
        %2776 = vmatpush1.bf16.msra.mxu0 %v2665
        %2777 = vmatprep.subr.bf16.mxu0 0
        %2778 = vmatpush1.bf16.msra.mxu0 %v2666
        %2779 = vmatprep.subr.bf16.mxu0 0
        %2780 = vmatpush1.bf16.msra.mxu0 %v2667
        %2781 = vmatprep.mubr.bf16.mxu0 %v2432
        %2782 = vmatmul.mubr.bf16.gmra.mrb[0].mxu0 %v2431
        %v2783 = vpop.f32.mrb[0].mxu0
        %v2784 = vadd.f32 %v2735, %v2783
        %v2785 = vpop.f32.mrb[0].mxu0
        %v2786 = vpop.f32.mrb[0].mxu0
        %v2787 = vadd.f32 %v2738, %v2786
        %v2788 = vpop.f32.mrb[0].mxu0
        %2789 = vmatprep.mubr.bf16.mxu0 %v2436
        %2790 = vmatmul.mubr.bf16.gmra.mrb[0].mxu0 %v2435
        %v2791 = vpop.f32.mrb[0].mxu0
        %v2792 = vadd.f32 %v2743, %v2791
        %v2793 = vpop.f32.mrb[0].mxu0
        %v2794 = vpop.f32.mrb[0].mxu0
        %v2795 = vadd.f32 %v2746, %v2794
        %v2796 = vpop.f32.mrb[0].mxu0
        %2797 = vdwg.mxu0
        %v2798 = vadd.f32 %v2087, %v2784
        %v2799 = vadd.f32 %v2088, %v2787
        %v2800 = vadd.f32 %v2089, %v2792
        %v2801 = vadd.f32 %v2090, %v2795
        %v2802 = vld [vmem:[%s920] sm:$0x1]
        %v2803 = vld [vmem:[%s923] sm:$0x1]
        %v2804 = vld [vmem:[%s926] sm:$0x1]
        %v2805 = vld [vmem:[%s929] sm:$0x1]
        %2806 = vadd.xlane.f32.xlu0 %v2798
        %v2807 = vpop.xlane.xlu0 %2806
        %2808 = vadd.xlane.f32.xlu0 %v2799
        %v2809 = vpop.xlane.xlu0 %2808
        %2810 = vadd.xlane.f32.xlu0 %v2800
        %v2811 = vpop.xlane.xlu0 %2810
        %2812 = vadd.xlane.f32.xlu0 %v2801
        %v2813 = vpop.xlane.xlu0 %2812
        %v2814 = vmul.f32 %v2807, %v2014
        %v2815 = vmul.f32 %v2809, %v2014
        %v2816 = vmul.f32 %v2811, %v2014
        %v2817 = vmul.f32 %v2813, %v2014
        %v2818 = vsub.f32 %v2798, %v2814
        %v2819 = vsub.f32 %v2799, %v2815
        %v2820 = vsub.f32 %v2800, %v2816
        %v2821 = vsub.f32 %v2801, %v2817
        %v2822 = vmul.f32 %v2818, %v2818
        %v2823 = vmul.f32 %v2819, %v2819
        %v2824 = vmul.f32 %v2820, %v2820
        %v2825 = vmul.f32 %v2821, %v2821
        %2826 = vadd.xlane.f32.xlu0 %v2822
        %v2827 = vpop.xlane.xlu0 %2826
        %2828 = vadd.xlane.f32.xlu0 %v2823
        %v2829 = vpop.xlane.xlu0 %2828
        %2830 = vadd.xlane.f32.xlu0 %v2824
        %v2831 = vpop.xlane.xlu0 %2830
        %2832 = vadd.xlane.f32.xlu0 %v2825
        %v2833 = vpop.xlane.xlu0 %2832
        %v2834 = vmul.f32 %v2827, %v2014
        %v2835 = vmul.f32 %v2829, %v2014
        %v2836 = vmul.f32 %v2831, %v2014
        %v2837 = vmul.f32 %v2833, %v2014
        %v2838 = vadd.f32 %v2834, 1e-05
        %v2839 = vadd.f32 %v2835, 1e-05
        %v2840 = vadd.f32 %v2836, 1e-05
        %v2841 = vadd.f32 %v2837, 1e-05
        %v2842 = vrsqrt.pop %v2838
        %v2843 = vrsqrt.pop %v2839
        %v2844 = vrsqrt.pop %v2840
        %v2845 = vrsqrt.pop %v2841
        %v2846 = vmul.f32 %v2818, %v2842
        %v2847 = vmul.f32 %v2819, %v2843
        %v2848 = vmul.f32 %v2820, %v2844
        %v2849 = vmul.f32 %v2821, %v2845
        %v2851 = vlaneseq
        %v2852 = vshrl.u32 %v2851, 7
        %v2853 = vsub.s32 0, %v2852
        %v2854 = vrot.slane %v2802, %v2853
        %v2856 = vmul.f32 %v2846, %v2854
        %v2857 = vmul.f32 %v2847, %v2854
        %v2858 = vmul.f32 %v2848, %v2854
        %v2859 = vmul.f32 %v2849, %v2854
        %v2861 = vlaneseq
        %v2862 = vshrl.u32 %v2861, 7
        %v2863 = vsub.s32 0, %v2862
        %v2864 = vrot.slane %v2803, %v2863
        %v2866 = vadd.f32 %v2856, %v2864
        %v2867 = vadd.f32 %v2857, %v2864
        %v2868 = vadd.f32 %v2858, %v2864
        %v2869 = vadd.f32 %v2859, %v2864
        %v2871 = vlaneseq
        %v2872 = vshrl.u32 %v2871, 7
        %v2873 = vsub.s32 0, %v2872
        %v2874 = vrot.slane %v2804, %v2873
        %v2876 = vmul.f32 %v2874, %v2866
        %v2877 = vmul.f32 %v2874, %v2867
        %v2878 = vmul.f32 %v2874, %v2868
        %v2879 = vmul.f32 %v2874, %v2869
        %v2881 = vlaneseq
        %v2882 = vshrl.u32 %v2881, 7
        %v2883 = vsub.s32 0, %v2882
        %v2884 = vrot.slane %v2805, %v2883
        %v2886 = vadd.f32 %v2876, %v2884
        %v2887 = vadd.f32 %v2877, %v2884
        %v2888 = vadd.f32 %v2878, %v2884
        %v2889 = vadd.f32 %v2879, %v2884
        %2890 = vst [vmem:[#allocation11] sm:$0xff] %v2886
        %2891 = vst [vmem:[#allocation11 + $0x8] sm:$0xff] %v2887
        %2892 = vst [vmem:[#allocation11 + $0x10] sm:$0xff] %v2888
        %2893 = vst [vmem:[#allocation11 + $0x18] sm:$0xff] %v2889
        // Predicated region
        $region121: #{tpu_custom_call.1} parent=91 // pred_check
          %p2894 = pneg %p530
        $region122: #{tpu_custom_call.1} parent=91 // pred_check_branch
          %2896 = sbr.rel (%p2894) target = $region124
        $region123: #{tpu_custom_call.1} parent=91 // pred_region
          %s2897 = smul.u32 2, %s36
          %s2899 = ssub.s32 512, 512
          %2900 = vsyncadd [#allocation4], %s2899
          %s2901 = smul.addr %s2897, 2
          %s2902 = smul.addr %s2901, 128
          %s2903 = scalar_lea.hbm %s18, %s2902
          %s2904 = sshll.u32 [#allocation11], 4
          %s2905 = int_to_ptr.vmem [resolvable:$true] %s2904
          %2910 = dma.vmem_to_hbm [thread:$0]  %s2905, 512, %s2903, [#allocation4], 128, 128, 8
        $region124: #{tpu_custom_call.1} parent=91 // pred_fallthru
          _
        // Predicated region
        $region125: #{tpu_custom_call.1} parent=91 // pred_check
          %p2911 = pneg %p530
        $region126: #{tpu_custom_call.1} parent=91 // pred_check_branch
          %2913 = sbr.rel (%p2911) target = $region128
        $region127: #{tpu_custom_call.1} parent=91 // pred_region
          %2914 = dma.done [#allocation4], 512
        $region128: #{tpu_custom_call.1} parent=91 // pred_fallthru
          _
      $region92: #{tpu_custom_call.1} parent=5 // pred_fallthru
        _
      %p2915 = scmp.le.s32.totalorder 2, %s27
      // Predicated region
      $region129: #{tpu_custom_call.1} parent=5 // pred_check
        %p2916 = pneg %p2915
      $region130: #{tpu_custom_call.1} parent=5 // pred_check_branch
        %2918 = sbr.rel (%p2916) target = $region132
      $region131: #{tpu_custom_call.1} parent=5 // pred_region
        %s2919 = ssub.s32 %s27, 2
      $region132: #{tpu_custom_call.1} parent=5 // pred_fallthru
        _
    $region6: #{tpu_custom_call.1} parent=1 // loop_footer
      %s31 = sadd.s32 1, %s27
    $region7: #{tpu_custom_call.1} parent=1 // loop_footer_branch
      %26 = sbr.rel target = $region3
    $region8: #{tpu_custom_call.1} parent=1 // loop_exit
      _
    %2920 = vsyncpa [#allocation3], 1
    %s2921 = scalar_lea.sflag [#allocation3], 1
    %2922 = vsyncpa %s2921, 1
    %2923 = vsyncpa [#allocation6], 1
    %2924 = vsyncpa [#allocation4], 1
    %s2925 = scalar_lea.sflag [#allocation4], 1
    %2926 = vsyncpa %s2925, 1

</llo_original>
